<compile_context>
chip_gen: v7x
topology: tpu7x:2x2x1
jax: 0.10.0
libtpu: 0.0.40
codegen_flags: <defaults>
</compile_context>

<pallas_src>
import functools

import jax
import jax.numpy as jnp
from jax import lax
from jax.experimental import pallas as pl
from jax.experimental.pallas import tpu as pltpu

BN_EPS = 1e-3        # nn.BatchNorm2d(eps=0.001)
LANE = 128           # lane-dense output width
NUM_CORES = 2        # assume megacore (v7x); extra tiles are harmless pipelining elsewhere
TM_CAP = 1024        # allow large row tiles on 128 MiB-VMEM gens; budget keeps v7x safe


def _round_up(x, m):
    return (x + m - 1) // m * m


def _choose_tm(m, k, cp=LANE, out_bytes=2):
    """Row-tile size.

    Sized from the actual double-buffered VMEM footprint (bf16 patch tile +
    output tile; weight resident), against a budget that is comfortable inside
    v7x's 64 MiB VMEM, and clamped so the grid never degenerates to fewer than
    2 tiles per TensorCore (megacore sharding + DMA/compute pipelining)."""
    m8 = _round_up(m, 8)
    budget = 20 * 1024 * 1024 - 2 * k * cp * 2           # minus (double-buffered) weight
    per_row = 2 * k * 2 + 2 * cp * out_bytes + 16        # 2x bf16 patch row + 2x out row
    tm = max(8, min(TM_CAP, (budget // max(per_row, 1)) // 8 * 8))
    min_tiles = 2 * NUM_CORES
    if m8 >= min_tiles * 8:
        tm = min(tm, max(8, (m8 // min_tiles) // 8 * 8))
    return min(tm, m8)


def _buffer_bytes(tm, k, cp, out_bytes):
    """Double-buffered VMEM footprint of one grid step."""
    return 2 * tm * k * 2 + 2 * k * cp * 2 + 2 * tm * cp * out_bytes + 2 * 8 * cp * 4


def _compiler_params(buffer_bytes):
    """Parallel row grid (the two v7x TCs split rows); VMEM limit derived from
    the real double-buffered footprint + headroom, capped below v7x's 64 MiB."""
    limit = max(24 << 20, min(int(buffer_bytes) + (16 << 20), 56 << 20))
    return pltpu.CompilerParams(
        dimension_semantics=("parallel",),
        vmem_limit_bytes=limit,
    )


# ----------------------------- Pallas kernels ------------------------------

def _matmul_stats_kernel(x_ref, w_ref, y_ref, s_ref):
    """Conv pass 1: y = patches @ W (bf16 in, f32 acc) + per-tile channel stats.

    NOTE: padded patch rows are exactly zero and there is no bias/epilogue
    here, so they contribute nothing to the batch statistics (keep it that
    way; adding a bias here would silently corrupt mean/var)."""
    y = jnp.dot(x_ref[...], w_ref[...], preferred_element_type=jnp.float32)
    s_ref[0:1, :] = jnp.sum(y, axis=0, keepdims=True)
    s_ref[1:2, :] = jnp.sum(y * y, axis=0, keepdims=True)
    y_ref[...] = y.astype(y_ref.dtype)


def _fused_bn_prelu_matmul_kernel(x_ref, sc_ref, sh_ref, a_ref, w_ref,
                                  y_ref, s_ref, *, tm, m_real, need_mask):
    """1x1 mapping layer with the PREVIOUS layer's BN + PReLU fused as a
    prologue:  a = PReLU(x*scale + shift);  y = a @ W;  + per-tile stats."""
    xn = x_ref[...].astype(jnp.float32) * sc_ref[...] + sh_ref[...]
    alpha = a_ref[0]
    act = jnp.where(xn > 0.0, xn, alpha * xn)
    if need_mask:
        # Zero padded rows so they neither pollute this layer's batch stats nor
        # leave non-zero garbage in the padded region of the y slab.
        rows = pl.program_id(0) * tm + lax.broadcasted_iota(jnp.int32, act.shape, 0)
        act = jnp.where(rows < m_real, act, 0.0)
    y = jnp.dot(act.astype(jnp.bfloat16), w_ref[...],
                preferred_element_type=jnp.float32)
    s_ref[0:1, :] = jnp.sum(y, axis=0, keepdims=True)
    s_ref[1:2, :] = jnp.sum(y * y, axis=0, keepdims=True)
    y_ref[...] = y.astype(y_ref.dtype)


def _bn_prelu_kernel(y_ref, sc_ref, sh_ref, a_ref, o_ref):
    """Standalone normalize + PReLU (used when the next layer needs im2col)."""
    yn = y_ref[...].astype(jnp.float32) * sc_ref[...] + sh_ref[...]
    alpha = a_ref[0]
    o_ref[...] = jnp.where(yn > 0.0, yn, alpha * yn).astype(o_ref.dtype)


def _matmul_bias_kernel(x_ref, w_ref, b_ref, o_ref):
    """Fused matmul + bias (merged ConvTranspose2d phase convolution)."""
    o_ref[...] = (jnp.dot(x_ref[...], w_ref[...], preferred_element_type=jnp.float32)
                  + b_ref[...])


# --------------------------- pallas_call wrappers ---------------------------

def _conv_matmul_stats(patches, w_mat):
    """Tiled (M,K)@(K,128) bf16 matmul with per-tile channel stats.
    Returns (y_slab_bf16, channel_sum, channel_sumsq)."""
    m, k = patches.shape
    cp = w_mat.shape[1]
    tm = _choose_tm(m, k, cp, out_bytes=2)
    m_pad = _round_up(m, tm)
    if m_pad != m:
        patches = jnp.pad(patches, ((0, m_pad - m), (0, 0)))
    nt = m_pad // tm

    grid_spec = pltpu.PrefetchScalarGridSpec(
        num_scalar_prefetch=0,
        grid=(nt,),
        in_specs=[
            pl.BlockSpec((tm, k), lambda i: (i, 0)),          # patch tile (bf16)
            pl.BlockSpec((k, cp), lambda i: (0, 0)),          # full weight, resident
        ],
        out_specs=[
            pl.BlockSpec((tm, cp), lambda i: (i, 0)),         # y tile (lane-dense bf16)
            pl.BlockSpec((8, cp), lambda i: (i, 0)),          # per-tile stats (rows 0,1)
        ],
    )
    cost = pl.CostEstimate(
        flops=2 * m_pad * k * cp, transcendentals=0,
        bytes_accessed=m_pad * k * 2 + k * cp * 2 + m_pad * cp * 2 + nt * 8 * cp * 4)
    y, stats = pl.pallas_call(
        _matmul_stats_kernel,
        out_shape=(jax.ShapeDtypeStruct((m_pad, cp), jnp.bfloat16),
                   jax.ShapeDtypeStruct((nt * 8, cp), jnp.float32)),
        grid_spec=grid_spec,
        compiler_params=_compiler_params(_buffer_bytes(tm, k, cp, 2)),
        cost_estimate=cost,
    )(patches, w_mat)

    stats = stats.reshape(nt, 8, cp)
    return y, jnp.sum(stats[:, 0, :], axis=0), jnp.sum(stats[:, 1, :], axis=0)


def _fused_mapping(y_prev, scale, shift, alpha, w_mat, m_real):
    """1x1 mapping layer consuming the previous layer's un-normalized y slab,
    with that layer's BN+PReLU fused in.  Returns (y, sum, sumsq, tm)."""
    m_in, k = y_prev.shape
    cp = w_mat.shape[1]
    tm = _choose_tm(m_real, k, cp, out_bytes=2)
    m_pad = _round_up(m_real, tm)
    if m_pad > m_in:
        y_prev = jnp.pad(y_prev, ((0, m_pad - m_in), (0, 0)))
    elif m_pad < m_in:
        y_prev = y_prev[:m_pad]                                # drops only zero-pad rows
    nt = m_pad // tm
    need_mask = m_pad != m_real

    kernel = functools.partial(_fused_bn_prelu_matmul_kernel,
                               tm=tm, m_real=m_real, need_mask=need_mask)
    grid_spec = pltpu.PrefetchScalarGridSpec(
        num_scalar_prefetch=0,
        grid=(nt,),
        in_specs=[
            pl.BlockSpec((tm, k), lambda i: (i, 0)),          # prev y tile (bf16)
            pl.BlockSpec((1, k), lambda i: (0, 0)),           # prev BN scale
            pl.BlockSpec((1, k), lambda i: (0, 0)),           # prev BN shift
            pl.BlockSpec(memory_space=pltpu.MemorySpace.SMEM),  # prev PReLU alpha
            pl.BlockSpec((k, cp), lambda i: (0, 0)),          # 1x1 weight, resident
        ],
        out_specs=[
            pl.BlockSpec((tm, cp), lambda i: (i, 0)),
            pl.BlockSpec((8, cp), lambda i: (i, 0)),
        ],
    )
    cost = pl.CostEstimate(
        flops=2 * m_pad * k * cp + 4 * m_pad * k, transcendentals=0,
        bytes_accessed=m_pad * k * 2 + k * cp * 2 + m_pad * cp * 2 + nt * 8 * cp * 4)
    y, stats = pl.pallas_call(
        kernel,
        out_shape=(jax.ShapeDtypeStruct((m_pad, cp), jnp.bfloat16),
                   jax.ShapeDtypeStruct((nt * 8, cp), jnp.float32)),
        grid_spec=grid_spec,
        compiler_params=_compiler_params(_buffer_bytes(tm, k, cp, 2)),
        cost_estimate=cost,
    )(y_prev,
      scale.reshape(1, k).astype(jnp.float32),
      shift.reshape(1, k).astype(jnp.float32),
      alpha.reshape(1).astype(jnp.float32),
      w_mat)

    stats = stats.reshape(nt, 8, cp)
    return y, jnp.sum(stats[:, 0, :], axis=0), jnp.sum(stats[:, 1, :], axis=0), tm


def _bn_prelu_apply(y, scale, shift, alpha, tm):
    """Tiled normalize + PReLU over a lane-dense y slab; bf16 in, bf16 out."""
    m_pad, cp = y.shape
    nt = m_pad // tm
    grid_spec = pltpu.PrefetchScalarGridSpec(
        num_scalar_prefetch=0,
        grid=(nt,),
        in_specs=[
            pl.BlockSpec((tm, cp), lambda i: (i, 0)),
            pl.BlockSpec((1, cp), lambda i: (0, 0)),
            pl.BlockSpec((1, cp), lambda i: (0, 0)),
            pl.BlockSpec(memory_space=pltpu.MemorySpace.SMEM),
        ],
        out_specs=pl.BlockSpec((tm, cp), lambda i: (i, 0)),
    )
    return pl.pallas_call(
        _bn_prelu_kernel,
        out_shape=jax.ShapeDtypeStruct((m_pad, cp), jnp.bfloat16),
        grid_spec=grid_spec,
        compiler_params=_compiler_params(4 * tm * cp * 2 + 4 * cp * 4),
    )(y,
      scale.reshape(1, cp).astype(jnp.float32),
      shift.reshape(1, cp).astype(jnp.float32),
      alpha.reshape(1).astype(jnp.float32))


def _matmul_bias(patches, w_mat, bias_pad):
    """Tiled (M,K)@(K,128) + bias (merged recon phase conv); f32 output."""
    m, k = patches.shape
    cp = w_mat.shape[1]
    tm = _choose_tm(m, k, cp, out_bytes=4)
    m_pad = _round_up(m, tm)
    if m_pad != m:
        patches = jnp.pad(patches, ((0, m_pad - m), (0, 0)))
    nt = m_pad // tm

    grid_spec = pltpu.PrefetchScalarGridSpec(
        num_scalar_prefetch=0,
        grid=(nt,),
        in_specs=[
            pl.BlockSpec((tm, k), lambda i: (i, 0)),
            pl.BlockSpec((k, cp), lambda i: (0, 0)),
            pl.BlockSpec((1, cp), lambda i: (0, 0)),
        ],
        out_specs=pl.BlockSpec((tm, cp), lambda i: (i, 0)),
    )
    cost = pl.CostEstimate(
        flops=2 * m_pad * k * cp, transcendentals=0,
        bytes_accessed=m_pad * k * 2 + k * cp * 2 + m_pad * cp * 4)
    out = pl.pallas_call(
        _matmul_bias_kernel,
        out_shape=jax.ShapeDtypeStruct((m_pad, cp), jnp.float32),
        grid_spec=grid_spec,
        compiler_params=_compiler_params(_buffer_bytes(tm, k, cp, 4)),
        cost_estimate=cost,
    )(patches, w_mat, bias_pad.reshape(1, cp).astype(jnp.float32))
    return out[:m]


# ------------------------------- layer glue ---------------------------------

def _weight_to_mat(w_torch):
    """(Cout, Cin, kh, kw) Conv2d weight -> (Cin*kh*kw, 128) bf16; rows in
    conv_general_dilated_patches feature order (c, i, j), cols lane-padded."""
    cout, cin, kh, kw = w_torch.shape
    w_mat = jnp.transpose(w_torch, (1, 2, 3, 0)).reshape(cin * kh * kw, cout)
    return jnp.pad(w_mat, ((0, 0), (0, LANE - cout))).astype(jnp.bfloat16)


def _weight_to_mat_1x1(w_torch):
    """1x1 Conv2d weight -> (128, 128) bf16, input (rows) and output (cols)
    channels zero-padded to the lane width (padded input lanes contribute 0)."""
    cout, cin = w_torch.shape[0], w_torch.shape[1]
    w_mat = jnp.transpose(w_torch.reshape(cout, cin), (1, 0))
    return jnp.pad(w_mat, ((0, LANE - cin), (0, LANE - cout))).astype(jnp.bfloat16)


def _bn_scale_shift(csum, cssq, m, gamma, beta):
    """Training-mode BatchNorm2d batch stats (biased variance) from per-channel
    sum / sum-of-squares accumulated over the N*H*W rows (f32)."""
    cout = gamma.shape[0]
    mean = csum / m
    var = jnp.maximum(cssq / m - mean * mean, 0.0)
    gamma_p = jnp.pad(gamma, (0, LANE - cout))
    beta_p = jnp.pad(beta, (0, LANE - cout))
    scale = gamma_p * lax.rsqrt(var + BN_EPS)     # padded channels: scale = shift = 0
    shift = beta_p - mean * scale
    return scale, shift


def _im2col(x_nhwc, kh, kw, stride, pad):
    """bf16 im2col slab (feature order (c, i, j)).  The input is already bf16,
    so the patch matrix is generated (and read back) at half the f32 traffic."""
    pat = lax.conv_general_dilated_patches(
        x_nhwc, filter_shape=(kh, kw), window_strides=(stride, stride),
        padding=((pad, pad), (pad, pad)),
        dimension_numbers=("NHWC", "HWIO", "NHWC"))
    n, hout, wout, kdim = pat.shape
    return pat.reshape(n * hout * wout, kdim), hout, wout


def conv_transpose2d_s2(x_nhwc, w_t, bias):
    """ConvTranspose2d(64, 3, k=9, stride=2, pad=4, output_padding=1) as ONE
    merged 4-phase sub-pixel stride-1 convolution.

    For output parity (rp, rq):
        out[2r+rp, 2c+rq] = sum_{j,l} x[r+j, c+l] * w[taps_rp[j+2], taps_rq[l+2]]
    with even taps [8,6,4,2,0] and odd taps [-,7,5,3,1] over offsets -2..+2
    (the odd offset -2 tap is zero).  All four phases therefore share a single
    5x5 / pad (2,2) patch matrix; their weight matrices are concatenated
    (4*Cout = 12 real cols, lane-padded once to 128), and the result is
    recombined by a depth-to-space transpose (no strided scatters)."""
    n, h, w, cin = x_nhwc.shape
    cout = w_t.shape[1]
    cp = LANE

    w_pad = jnp.pad(w_t, ((0, 0), (0, 0), (0, 1), (0, 1)))       # tap index 9 == zero
    idx = {0: jnp.array([8, 6, 4, 2, 0]), 1: jnp.array([9, 7, 5, 3, 1])}
    mats = []
    for rp in (0, 1):
        for rq in (0, 1):
            sub = w_pad[:, :, idx[rp], :][:, :, :, idx[rq]]      # (Cin, Cout, 5, 5)
            mats.append(jnp.transpose(sub, (0, 2, 3, 1)).reshape(cin * 25, cout))
    w_mat = jnp.concatenate(mats, axis=1)                         # (Cin*25, 4*Cout)
    w_mat = jnp.pad(w_mat, ((0, 0), (0, cp - 4 * cout))).astype(jnp.bfloat16)
    bias_pad = jnp.pad(jnp.tile(bias, (4,)), (0, cp - 4 * cout))

    patches, ho, wo = _im2col(x_nhwc, 5, 5, 1, 2)                 # ho == h, wo == w
    out = _matmul_bias(patches, w_mat, bias_pad)                  # (n*h*w, 128) f32
    out = out[:, :4 * cout].reshape(n, ho, wo, 2, 2, cout)        # (.., rp, rq, c)
    # depth-to-space: phase (rp, rq) at (h, w) -> output pixel (2h+rp, 2w+rq)
    return jnp.transpose(out, (0, 1, 3, 2, 4, 5)).reshape(n, 2 * ho, 2 * wo, cout)


# --------------------------- parameters & model -----------------------------

def init_prelu_conv2d(key, cin, cout, k):
    # nn.init.normal_(conv.weight, std=0.001); BN gamma=1, beta=0; PReLU=0.25
    return {
        "w": 0.001 * jax.random.normal(key, (cout, cin, k, k), jnp.float32),
        "gamma": jnp.ones((cout,), jnp.float32),
        "beta": jnp.zeros((cout,), jnp.float32),
        "alpha": jnp.asarray(0.25, jnp.float32),
    }


def init_fast_arcnn(key, in_channels):
    k0, k1, k2, k3, k4, k5 = jax.random.split(key, 6)
    return {
        "feature_extraction": init_prelu_conv2d(k0, in_channels, 64, 9),
        "mapping1": init_prelu_conv2d(k1, 64, 32, 1),
        "feature_enhancement": init_prelu_conv2d(k2, 32, 32, 7),
        "mapping2": init_prelu_conv2d(k3, 32, 64, 1),
        # ConvTranspose2d(64, 3, k=9) keeps PyTorch default init (not a Conv2d);
        # synthetic deterministic values here.
        "recon_w": 0.05 * jax.random.normal(k4, (64, 3, 9, 9), jnp.float32),
        "recon_b": 0.01 * jax.random.normal(k5, (3,), jnp.float32),
    }


def fast_arcnn_forward(params, x):
    """x: (num_patches, N, C, H, W) NCHW stack; forward uses x[1] (cur_patch)."""
    cur = x[1]                                                    # (N, C, H, W)
    h0 = jnp.transpose(cur, (0, 2, 3, 1)).astype(jnp.bfloat16)    # NHWC bf16
    n = h0.shape[0]

    # feature_extraction: 9x9 stride-2 conv -> un-normalized y slab + BN stats
    p_fex = params["feature_extraction"]
    patches, h1, w1 = _im2col(h0, 9, 9, 2, 4)
    m1 = n * h1 * w1
    y_fex, s_fex, q_fex = _conv_matmul_stats(patches, _weight_to_mat(p_fex["w"]))
    sc_fex, sh_fex = _bn_scale_shift(s_fex, q_fex, m1, p_fex["gamma"], p_fex["beta"])

    # mapping1 (1x1): BN(fex) + PReLU fused as the matmul prologue
    p_m1 = params["mapping1"]
    y_m1, s_m1, q_m1, tm_m1 = _fused_mapping(
        y_fex, sc_fex, sh_fex, p_fex["alpha"], _weight_to_mat_1x1(p_m1["w"]), m1)
    sc_m1, sh_m1 = _bn_scale_shift(s_m1, q_m1, m1, p_m1["gamma"], p_m1["beta"])

    # mapping1 BN + PReLU (next layer is 7x7, needs a spatial slab)
    a_m1 = _bn_prelu_apply(y_m1, sc_m1, sh_m1, p_m1["alpha"], tm_m1)
    a_m1 = a_m1[:m1, :32].reshape(n, h1, w1, 32)                  # bf16

    # feature_enhancement: 7x7 conv
    p_fen = params["feature_enhancement"]
    patches, h2, w2 = _im2col(a_m1, 7, 7, 1, 3)
    m2 = n * h2 * w2
    y_fen, s_fen, q_fen = _conv_matmul_stats(patches, _weight_to_mat(p_fen["w"]))
    sc_fen, sh_fen = _bn_scale_shift(s_fen, q_fen, m2, p_fen["gamma"], p_fen["beta"])

    # mapping2 (1x1): BN(fen) + PReLU fused as the matmul prologue
    p_m2 = params["mapping2"]
    y_m2, s_m2, q_m2, tm_m2 = _fused_mapping(
        y_fen, sc_fen, sh_fen, p_fen["alpha"], _weight_to_mat_1x1(p_m2["w"]), m2)
    sc_m2, sh_m2 = _bn_scale_shift(s_m2, q_m2, m2, p_m2["gamma"], p_m2["beta"])

    a_m2 = _bn_prelu_apply(y_m2, sc_m2, sh_m2, p_m2["alpha"], tm_m2)
    a_m2 = a_m2[:m2, :64].reshape(n, h2, w2, 64)                  # bf16

    # reconstruction: ConvTranspose2d(64, 3, 9, stride=2, pad=4, output_pad=1)
    out = conv_transpose2d_s2(a_m2, params["recon_w"], params["recon_b"])
    return jnp.transpose(out, (0, 3, 1, 2))                       # NCHW f32


# ---------------------------------- main ------------------------------------

if __name__ == "__main__":
    key = jax.random.PRNGKey(0)
    k_param, k_x = jax.random.split(key)

    in_channels = 3
    N, H, W = 2, 16, 16
    # x is a stack of 2 patch batches; forward selects x[1].
    x = jax.random.normal(k_x, (2, N, in_channels, H, W), jnp.float32)

    params = init_fast_arcnn(k_param, in_channels)

    out = jax.jit(fast_arcnn_forward)(params, x)
    out = jax.block_until_ready(out)

    assert out.shape == (N, 3, H, W), out.shape
    assert bool(jnp.all(jnp.isfinite(out)))
    print("KERNEL_OK")
</pallas_src>

<mosaic_0001>
module attributes {stable_mosaic.version = 11 : i64} {
  func.func @_matmul_stats_kernel(%arg0: i32, %arg1: memref<32x243xbf16, #tpu.memory_space<vmem>>, %arg2: memref<243x128xbf16, #tpu.memory_space<vmem>>, %arg3: memref<32x128xbf16, #tpu.memory_space<vmem>>, %arg4: memref<8x128xf32, #tpu.memory_space<vmem>>) attributes {dimension_semantics = [#tpu.dimension_semantics<parallel>], iteration_bounds = array<i64: 4>, scalar_prefetch = 0 : i64, scratch_operands = 0 : i64, tpu.core_type = #tpu.core_type<tc>, window_params = [{transform_indices = @transform_0, window_bounds = array<i64: 32, 243>}, {pipeline_mode = #tpu.pipeline_mode<synchronous>, transform_indices = @transform_1, window_bounds = array<i64: 243, 128>}, {transform_indices = @transform_2, window_bounds = array<i64: 32, 128>}, {transform_indices = @transform_3, window_bounds = array<i64: 8, 128>}]} {
    %c0 = arith.constant 0 : index
    %c0_0 = arith.constant 0 : index
    %0 = vector.load %arg1[%c0, %c0_0] : memref<32x243xbf16, #tpu.memory_space<vmem>>, vector<32x243xbf16>
    %c0_1 = arith.constant 0 : index
    %c0_2 = arith.constant 0 : index
    %1 = vector.load %arg2[%c0_1, %c0_2] : memref<243x128xbf16, #tpu.memory_space<vmem>>, vector<243x128xbf16>
    %cst = arith.constant dense<0.000000e+00> : vector<32x128xf32>
    %2 = tpu.matmul %0, %1, %cst {dimension_numbers = #tpu.dot_dimension_numbers<[1], [0], [0], [1], [0, 0, 1, 1], [], []>} : vector<32x243xbf16>, vector<243x128xbf16>, vector<32x128xf32> -> vector<32x128xf32>
    %cst_3 = arith.constant dense<0.000000e+00> : vector<128xf32>
    %3 = vector.multi_reduction <add>, %2, %cst_3 [0] : vector<32x128xf32> to vector<128xf32>
    %4 = vector.shape_cast %3 : vector<128xf32> to vector<1x128xf32>
    %c0_4 = arith.constant 0 : index
    %c0_5 = arith.constant 0 : index
    %5 = vector.load %arg4[%c0_4, %c0_5] : memref<8x128xf32, #tpu.memory_space<vmem>>, vector<1x128xf32>
    tpu.vector_store %arg4[%c0_4, %c0_5], %4 {strides = array<i32>} : memref<8x128xf32, #tpu.memory_space<vmem>>, vector<1x128xf32>,
    %6 = arith.mulf %2, %2 : vector<32x128xf32>
    %cst_6 = arith.constant dense<0.000000e+00> : vector<128xf32>
    %7 = vector.multi_reduction <add>, %6, %cst_6 [0] : vector<32x128xf32> to vector<128xf32>
    %8 = vector.shape_cast %7 : vector<128xf32> to vector<1x128xf32>
    %c1 = arith.constant 1 : index
    %c0_7 = arith.constant 0 : index
    %9 = vector.load %arg4[%c1, %c0_7] : memref<8x128xf32, #tpu.memory_space<vmem>>, vector<1x128xf32>
    tpu.vector_store %arg4[%c1, %c0_7], %8 {strides = array<i32>} : memref<8x128xf32, #tpu.memory_space<vmem>>, vector<1x128xf32>,
    %10 = arith.truncf %2 : vector<32x128xf32> to vector<32x128xbf16>
    %c0_8 = arith.constant 0 : index
    %c0_9 = arith.constant 0 : index
    %11 = vector.load %arg3[%c0_8, %c0_9] : memref<32x128xbf16, #tpu.memory_space<vmem>>, vector<32x128xbf16>
    tpu.vector_store %arg3[%c0_8, %c0_9], %10 {strides = array<i32>} : memref<32x128xbf16, #tpu.memory_space<vmem>>, vector<32x128xbf16>,
    return
  }
  func.func @transform_0(%arg0: i32) -> (i32, i32) {
    %c0_i32 = arith.constant 0 : i32
    %c0_i32_0 = arith.constant 0 : i32
    return %arg0, %c0_i32 : i32, i32
  }
  func.func @transform_1(%arg0: i32) -> (i32, i32) {
    %c0_i32 = arith.constant 0 : i32
    %c0_i32_0 = arith.constant 0 : i32
    %c0_i32_1 = arith.constant 0 : i32
    return %c0_i32, %c0_i32_0 : i32, i32
  }
  func.func @transform_2(%arg0: i32) -> (i32, i32) {
    %c0_i32 = arith.constant 0 : i32
    %c0_i32_0 = arith.constant 0 : i32
    return %arg0, %c0_i32 : i32, i32
  }
  func.func @transform_3(%arg0: i32) -> (i32, i32) {
    %c0_i32 = arith.constant 0 : i32
    %c0_i32_0 = arith.constant 0 : i32
    return %arg0, %c0_i32 : i32, i32
  }
}

module attributes {stable_mosaic.version = 11 : i64} {
  func.func @_fused_bn_prelu_matmul_kernel(%arg0: i32, %arg1: memref<32x128xbf16, #tpu.memory_space<vmem>>, %arg2: memref<1x128xf32, #tpu.memory_space<vmem>>, %arg3: memref<1x128xf32, #tpu.memory_space<vmem>>, %arg4: memref<1xf32, #tpu.memory_space<smem>>, %arg5: memref<128x128xbf16, #tpu.memory_space<vmem>>, %arg6: memref<32x128xbf16, #tpu.memory_space<vmem>>, %arg7: memref<8x128xf32, #tpu.memory_space<vmem>>) attributes {dimension_semantics = [#tpu.dimension_semantics<parallel>], iteration_bounds = array<i64: 4>, scalar_prefetch = 0 : i64, scratch_operands = 0 : i64, tpu.core_type = #tpu.core_type<tc>, window_params = [{transform_indices = @transform_0, window_bounds = array<i64: 32, 128>}, {pipeline_mode = #tpu.pipeline_mode<synchronous>, transform_indices = @transform_1, window_bounds = array<i64: 1, 128>}, {pipeline_mode = #tpu.pipeline_mode<synchronous>, transform_indices = @transform_2, window_bounds = array<i64: 1, 128>}, {transform_indices = @transform_3, window_bounds = array<i64: 1>}, {pipeline_mode = #tpu.pipeline_mode<synchronous>, transform_indices = @transform_4, window_bounds = array<i64: 128, 128>}, {transform_indices = @transform_5, window_bounds = array<i64: 32, 128>}, {transform_indices = @transform_6, window_bounds = array<i64: 8, 128>}]} {
    %c0 = arith.constant 0 : index
    %c0_0 = arith.constant 0 : index
    %0 = vector.load %arg1[%c0, %c0_0] : memref<32x128xbf16, #tpu.memory_space<vmem>>, vector<32x128xbf16>
    %1 = arith.extf %0 : vector<32x128xbf16> to vector<32x128xf32>
    %c0_1 = arith.constant 0 : index
    %c0_2 = arith.constant 0 : index
    %2 = vector.load %arg2[%c0_1, %c0_2] : memref<1x128xf32, #tpu.memory_space<vmem>>, vector<1x128xf32>
    %3 = vector.broadcast %2 : vector<1x128xf32> to vector<32x128xf32>
    %4 = arith.mulf %1, %3 : vector<32x128xf32>
    %c0_3 = arith.constant 0 : index
    %c0_4 = arith.constant 0 : index
    %5 = vector.load %arg3[%c0_3, %c0_4] : memref<1x128xf32, #tpu.memory_space<vmem>>, vector<1x128xf32>
    %6 = vector.broadcast %5 : vector<1x128xf32> to vector<32x128xf32>
    %7 = arith.addf %4, %6 : vector<32x128xf32>
    %c0_5 = arith.constant 0 : index
    %8 = memref.load %arg4[%c0_5] : memref<1xf32, #tpu.memory_space<smem>>
    %cst = arith.constant 0.000000e+00 : f32
    %9 = vector.broadcast %cst : f32 to vector<32x128xf32>
    %10 = arith.cmpf ogt, %7, %9 : vector<32x128xf32>
    %11 = vector.broadcast %8 : f32 to vector<32x128xf32>
    %12 = arith.mulf %11, %7 : vector<32x128xf32>
    %13 = arith.select %10, %7, %12 : vector<32x128xi1>, vector<32x128xf32>
    %14 = arith.truncf %13 : vector<32x128xf32> to vector<32x128xbf16>
    %c0_6 = arith.constant 0 : index
    %c0_7 = arith.constant 0 : index
    %15 = vector.load %arg5[%c0_6, %c0_7] : memref<128x128xbf16, #tpu.memory_space<vmem>>, vector<128x128xbf16>
    %cst_8 = arith.constant dense<0.000000e+00> : vector<32x128xf32>
    %16 = tpu.matmul %14, %15, %cst_8 {dimension_numbers = #tpu.dot_dimension_numbers<[1], [0], [0], [1], [0, 0, 1, 1], [], []>} : vector<32x128xbf16>, vector<128x128xbf16>, vector<32x128xf32> -> vector<32x128xf32>
    %cst_9 = arith.constant dense<0.000000e+00> : vector<128xf32>
    %17 = vector.multi_reduction <add>, %16, %cst_9 [0] : vector<32x128xf32> to vector<128xf32>
    %18 = vector.shape_cast %17 : vector<128xf32> to vector<1x128xf32>
    %c0_10 = arith.constant 0 : index
    %c0_11 = arith.constant 0 : index
    %19 = vector.load %arg7[%c0_10, %c0_11] : memref<8x128xf32, #tpu.memory_space<vmem>>, vector<1x128xf32>
    tpu.vector_store %arg7[%c0_10, %c0_11], %18 {strides = array<i32>} : memref<8x128xf32, #tpu.memory_space<vmem>>, vector<1x128xf32>,
    %20 = arith.mulf %16, %16 : vector<32x128xf32>
    %cst_12 = arith.constant dense<0.000000e+00> : vector<128xf32>
    %21 = vector.multi_reduction <add>, %20, %cst_12 [0] : vector<32x128xf32> to vector<128xf32>
    %22 = vector.shape_cast %21 : vector<128xf32> to vector<1x128xf32>
    %c1 = arith.constant 1 : index
    %c0_13 = arith.constant 0 : index
    %23 = vector.load %arg7[%c1, %c0_13] : memref<8x128xf32, #tpu.memory_space<vmem>>, vector<1x128xf32>
    tpu.vector_store %arg7[%c1, %c0_13], %22 {strides = array<i32>} : memref<8x128xf32, #tpu.memory_space<vmem>>, vector<1x128xf32>,
    %24 = arith.truncf %16 : vector<32x128xf32> to vector<32x128xbf16>
    %c0_14 = arith.constant 0 : index
    %c0_15 = arith.constant 0 : index
    %25 = vector.load %arg6[%c0_14, %c0_15] : memref<32x128xbf16, #tpu.memory_space<vmem>>, vector<32x128xbf16>
    tpu.vector_store %arg6[%c0_14, %c0_15], %24 {strides = array<i32>} : memref<32x128xbf16, #tpu.memory_space<vmem>>, vector<32x128xbf16>,
    return
  }
  func.func @transform_0(%arg0: i32) -> (i32, i32) {
    %c0_i32 = arith.constant 0 : i32
    %c0_i32_0 = arith.constant 0 : i32
    return %arg0, %c0_i32 : i32, i32
  }
  func.func @transform_1(%arg0: i32) -> (i32, i32) {
    %c0_i32 = arith.constant 0 : i32
    %c0_i32_0 = arith.constant 0 : i32
    %c0_i32_1 = arith.constant 0 : i32
    return %c0_i32, %c0_i32_0 : i32, i32
  }
  func.func @transform_2(%arg0: i32) -> (i32, i32) {
    %c0_i32 = arith.constant 0 : i32
    %c0_i32_0 = arith.constant 0 : i32
    %c0_i32_1 = arith.constant 0 : i32
    return %c0_i32, %c0_i32_0 : i32, i32
  }
  func.func @transform_3(%arg0: i32) -> i32 {
    %c0_i32 = arith.constant 0 : i32
    %c0_i32_0 = arith.constant 0 : i32
    return %c0_i32 : i32
  }
  func.func @transform_4(%arg0: i32) -> (i32, i32) {
    %c0_i32 = arith.constant 0 : i32
    %c0_i32_0 = arith.constant 0 : i32
    %c0_i32_1 = arith.constant 0 : i32
    return %c0_i32, %c0_i32_0 : i32, i32
  }
  func.func @transform_5(%arg0: i32) -> (i32, i32) {
    %c0_i32 = arith.constant 0 : i32
    %c0_i32_0 = arith.constant 0 : i32
    return %arg0, %c0_i32 : i32, i32
  }
  func.func @transform_6(%arg0: i32) -> (i32, i32) {
    %c0_i32 = arith.constant 0 : i32
    %c0_i32_0 = arith.constant 0 : i32
    return %arg0, %c0_i32 : i32, i32
  }
}

module attributes {stable_mosaic.version = 11 : i64} {
  func.func @_bn_prelu_kernel(%arg0: i32, %arg1: memref<32x128xbf16, #tpu.memory_space<vmem>>, %arg2: memref<1x128xf32, #tpu.memory_space<vmem>>, %arg3: memref<1x128xf32, #tpu.memory_space<vmem>>, %arg4: memref<1xf32, #tpu.memory_space<smem>>, %arg5: memref<32x128xbf16, #tpu.memory_space<vmem>>) attributes {dimension_semantics = [#tpu.dimension_semantics<parallel>], iteration_bounds = array<i64: 4>, scalar_prefetch = 0 : i64, scratch_operands = 0 : i64, tpu.core_type = #tpu.core_type<tc>, window_params = [{transform_indices = @transform_0, window_bounds = array<i64: 32, 128>}, {pipeline_mode = #tpu.pipeline_mode<synchronous>, transform_indices = @transform_1, window_bounds = array<i64: 1, 128>}, {pipeline_mode = #tpu.pipeline_mode<synchronous>, transform_indices = @transform_2, window_bounds = array<i64: 1, 128>}, {transform_indices = @transform_3, window_bounds = array<i64: 1>}, {transform_indices = @transform_4, window_bounds = array<i64: 32, 128>}]} {
    %c0 = arith.constant 0 : index
    %c0_0 = arith.constant 0 : index
    %0 = vector.load %arg1[%c0, %c0_0] : memref<32x128xbf16, #tpu.memory_space<vmem>>, vector<32x128xbf16>
    %1 = arith.extf %0 : vector<32x128xbf16> to vector<32x128xf32>
    %c0_1 = arith.constant 0 : index
    %c0_2 = arith.constant 0 : index
    %2 = vector.load %arg2[%c0_1, %c0_2] : memref<1x128xf32, #tpu.memory_space<vmem>>, vector<1x128xf32>
    %3 = vector.broadcast %2 : vector<1x128xf32> to vector<32x128xf32>
    %4 = arith.mulf %1, %3 : vector<32x128xf32>
    %c0_3 = arith.constant 0 : index
    %c0_4 = arith.constant 0 : index
    %5 = vector.load %arg3[%c0_3, %c0_4] : memref<1x128xf32, #tpu.memory_space<vmem>>, vector<1x128xf32>
    %6 = vector.broadcast %5 : vector<1x128xf32> to vector<32x128xf32>
    %7 = arith.addf %4, %6 : vector<32x128xf32>
    %c0_5 = arith.constant 0 : index
    %8 = memref.load %arg4[%c0_5] : memref<1xf32, #tpu.memory_space<smem>>
    %cst = arith.constant 0.000000e+00 : f32
    %9 = vector.broadcast %cst : f32 to vector<32x128xf32>
    %10 = arith.cmpf ogt, %7, %9 : vector<32x128xf32>
    %11 = vector.broadcast %8 : f32 to vector<32x128xf32>
    %12 = arith.mulf %11, %7 : vector<32x128xf32>
    %13 = arith.select %10, %7, %12 : vector<32x128xi1>, vector<32x128xf32>
    %14 = arith.truncf %13 : vector<32x128xf32> to vector<32x128xbf16>
    %c0_6 = arith.constant 0 : index
    %c0_7 = arith.constant 0 : index
    %15 = vector.load %arg5[%c0_6, %c0_7] : memref<32x128xbf16, #tpu.memory_space<vmem>>, vector<32x128xbf16>
    tpu.vector_store %arg5[%c0_6, %c0_7], %14 {strides = array<i32>} : memref<32x128xbf16, #tpu.memory_space<vmem>>, vector<32x128xbf16>,
    return
  }
  func.func @transform_0(%arg0: i32) -> (i32, i32) {
    %c0_i32 = arith.constant 0 : i32
    %c0_i32_0 = arith.constant 0 : i32
    return %arg0, %c0_i32 : i32, i32
  }
  func.func @transform_1(%arg0: i32) -> (i32, i32) {
    %c0_i32 = arith.constant 0 : i32
    %c0_i32_0 = arith.constant 0 : i32
    %c0_i32_1 = arith.constant 0 : i32
    return %c0_i32, %c0_i32_0 : i32, i32
  }
  func.func @transform_2(%arg0: i32) -> (i32, i32) {
    %c0_i32 = arith.constant 0 : i32
    %c0_i32_0 = arith.constant 0 : i32
    %c0_i32_1 = arith.constant 0 : i32
    return %c0_i32, %c0_i32_0 : i32, i32
  }
  func.func @transform_3(%arg0: i32) -> i32 {
    %c0_i32 = arith.constant 0 : i32
    %c0_i32_0 = arith.constant 0 : i32
    return %c0_i32 : i32
  }
  func.func @transform_4(%arg0: i32) -> (i32, i32) {
    %c0_i32 = arith.constant 0 : i32
    %c0_i32_0 = arith.constant 0 : i32
    return %arg0, %c0_i32 : i32, i32
  }
}

module attributes {stable_mosaic.version = 11 : i64} {
  func.func @_matmul_stats_kernel(%arg0: i32, %arg1: memref<32x1568xbf16, #tpu.memory_space<vmem>>, %arg2: memref<1568x128xbf16, #tpu.memory_space<vmem>>, %arg3: memref<32x128xbf16, #tpu.memory_space<vmem>>, %arg4: memref<8x128xf32, #tpu.memory_space<vmem>>) attributes {dimension_semantics = [#tpu.dimension_semantics<parallel>], iteration_bounds = array<i64: 4>, scalar_prefetch = 0 : i64, scratch_operands = 0 : i64, tpu.core_type = #tpu.core_type<tc>, window_params = [{transform_indices = @transform_0, window_bounds = array<i64: 32, 1568>}, {pipeline_mode = #tpu.pipeline_mode<synchronous>, transform_indices = @transform_1, window_bounds = array<i64: 1568, 128>}, {transform_indices = @transform_2, window_bounds = array<i64: 32, 128>}, {transform_indices = @transform_3, window_bounds = array<i64: 8, 128>}]} {
    %c0 = arith.constant 0 : index
    %c0_0 = arith.constant 0 : index
    %0 = vector.load %arg1[%c0, %c0_0] : memref<32x1568xbf16, #tpu.memory_space<vmem>>, vector<32x1568xbf16>
    %c0_1 = arith.constant 0 : index
    %c0_2 = arith.constant 0 : index
    %1 = vector.load %arg2[%c0_1, %c0_2] : memref<1568x128xbf16, #tpu.memory_space<vmem>>, vector<1568x128xbf16>
    %cst = arith.constant dense<0.000000e+00> : vector<32x128xf32>
    %2 = tpu.matmul %0, %1, %cst {dimension_numbers = #tpu.dot_dimension_numbers<[1], [0], [0], [1], [0, 0, 1, 1], [], []>} : vector<32x1568xbf16>, vector<1568x128xbf16>, vector<32x128xf32> -> vector<32x128xf32>
    %cst_3 = arith.constant dense<0.000000e+00> : vector<128xf32>
    %3 = vector.multi_reduction <add>, %2, %cst_3 [0] : vector<32x128xf32> to vector<128xf32>
    %4 = vector.shape_cast %3 : vector<128xf32> to vector<1x128xf32>
    %c0_4 = arith.constant 0 : index
    %c0_5 = arith.constant 0 : index
    %5 = vector.load %arg4[%c0_4, %c0_5] : memref<8x128xf32, #tpu.memory_space<vmem>>, vector<1x128xf32>
    tpu.vector_store %arg4[%c0_4, %c0_5], %4 {strides = array<i32>} : memref<8x128xf32, #tpu.memory_space<vmem>>, vector<1x128xf32>,
    %6 = arith.mulf %2, %2 : vector<32x128xf32>
    %cst_6 = arith.constant dense<0.000000e+00> : vector<128xf32>
    %7 = vector.multi_reduction <add>, %6, %cst_6 [0] : vector<32x128xf32> to vector<128xf32>
    %8 = vector.shape_cast %7 : vector<128xf32> to vector<1x128xf32>
    %c1 = arith.constant 1 : index
    %c0_7 = arith.constant 0 : index
    %9 = vector.load %arg4[%c1, %c0_7] : memref<8x128xf32, #tpu.memory_space<vmem>>, vector<1x128xf32>
    tpu.vector_store %arg4[%c1, %c0_7], %8 {strides = array<i32>} : memref<8x128xf32, #tpu.memory_space<vmem>>, vector<1x128xf32>,
    %10 = arith.truncf %2 : vector<32x128xf32> to vector<32x128xbf16>
    %c0_8 = arith.constant 0 : index
    %c0_9 = arith.constant 0 : index
    %11 = vector.load %arg3[%c0_8, %c0_9] : memref<32x128xbf16, #tpu.memory_space<vmem>>, vector<32x128xbf16>
    tpu.vector_store %arg3[%c0_8, %c0_9], %10 {strides = array<i32>} : memref<32x128xbf16, #tpu.memory_space<vmem>>, vector<32x128xbf16>,
    return
  }
  func.func @transform_0(%arg0: i32) -> (i32, i32) {
    %c0_i32 = arith.constant 0 : i32
    %c0_i32_0 = arith.constant 0 : i32
    return %arg0, %c0_i32 : i32, i32
  }
  func.func @transform_1(%arg0: i32) -> (i32, i32) {
    %c0_i32 = arith.constant 0 : i32
    %c0_i32_0 = arith.constant 0 : i32
    %c0_i32_1 = arith.constant 0 : i32
    return %c0_i32, %c0_i32_0 : i32, i32
  }
  func.func @transform_2(%arg0: i32) -> (i32, i32) {
    %c0_i32 = arith.constant 0 : i32
    %c0_i32_0 = arith.constant 0 : i32
    return %arg0, %c0_i32 : i32, i32
  }
  func.func @transform_3(%arg0: i32) -> (i32, i32) {
    %c0_i32 = arith.constant 0 : i32
    %c0_i32_0 = arith.constant 0 : i32
    return %arg0, %c0_i32 : i32, i32
  }
}

module attributes {stable_mosaic.version = 11 : i64} {
  func.func @_matmul_bias_kernel(%arg0: i32, %arg1: memref<32x1600xbf16, #tpu.memory_space<vmem>>, %arg2: memref<1600x128xbf16, #tpu.memory_space<vmem>>, %arg3: memref<1x128xf32, #tpu.memory_space<vmem>>, %arg4: memref<32x128xf32, #tpu.memory_space<vmem>>) attributes {dimension_semantics = [#tpu.dimension_semantics<parallel>], iteration_bounds = array<i64: 4>, scalar_prefetch = 0 : i64, scratch_operands = 0 : i64, tpu.core_type = #tpu.core_type<tc>, window_params = [{transform_indices = @transform_0, window_bounds = array<i64: 32, 1600>}, {pipeline_mode = #tpu.pipeline_mode<synchronous>, transform_indices = @transform_1, window_bounds = array<i64: 1600, 128>}, {pipeline_mode = #tpu.pipeline_mode<synchronous>, transform_indices = @transform_2, window_bounds = array<i64: 1, 128>}, {transform_indices = @transform_3, window_bounds = array<i64: 32, 128>}]} {
    %c0 = arith.constant 0 : index
    %c0_0 = arith.constant 0 : index
    %0 = vector.load %arg1[%c0, %c0_0] : memref<32x1600xbf16, #tpu.memory_space<vmem>>, vector<32x1600xbf16>
    %c0_1 = arith.constant 0 : index
    %c0_2 = arith.constant 0 : index
    %1 = vector.load %arg2[%c0_1, %c0_2] : memref<1600x128xbf16, #tpu.memory_space<vmem>>, vector<1600x128xbf16>
    %cst = arith.constant dense<0.000000e+00> : vector<32x128xf32>
    %2 = tpu.matmul %0, %1, %cst {dimension_numbers = #tpu.dot_dimension_numbers<[1], [0], [0], [1], [0, 0, 1, 1], [], []>} : vector<32x1600xbf16>, vector<1600x128xbf16>, vector<32x128xf32> -> vector<32x128xf32>
    %c0_3 = arith.constant 0 : index
    %c0_4 = arith.constant 0 : index
    %3 = vector.load %arg3[%c0_3, %c0_4] : memref<1x128xf32, #tpu.memory_space<vmem>>, vector<1x128xf32>
    %4 = vector.broadcast %3 : vector<1x128xf32> to vector<32x128xf32>
    %5 = arith.addf %2, %4 : vector<32x128xf32>
    %c0_5 = arith.constant 0 : index
    %c0_6 = arith.constant 0 : index
    %6 = vector.load %arg4[%c0_5, %c0_6] : memref<32x128xf32, #tpu.memory_space<vmem>>, vector<32x128xf32>
    tpu.vector_store %arg4[%c0_5, %c0_6], %5 {strides = array<i32>} : memref<32x128xf32, #tpu.memory_space<vmem>>, vector<32x128xf32>,
    return
  }
  func.func @transform_0(%arg0: i32) -> (i32, i32) {
    %c0_i32 = arith.constant 0 : i32
    %c0_i32_0 = arith.constant 0 : i32
    return %arg0, %c0_i32 : i32, i32
  }
  func.func @transform_1(%arg0: i32) -> (i32, i32) {
    %c0_i32 = arith.constant 0 : i32
    %c0_i32_0 = arith.constant 0 : i32
    %c0_i32_1 = arith.constant 0 : i32
    return %c0_i32, %c0_i32_0 : i32, i32
  }
  func.func @transform_2(%arg0: i32) -> (i32, i32) {
    %c0_i32 = arith.constant 0 : i32
    %c0_i32_0 = arith.constant 0 : i32
    %c0_i32_1 = arith.constant 0 : i32
    return %c0_i32, %c0_i32_0 : i32, i32
  }
  func.func @transform_3(%arg0: i32) -> (i32, i32) {
    %c0_i32 = arith.constant 0 : i32
    %c0_i32_0 = arith.constant 0 : i32
    return %arg0, %c0_i32 : i32, i32
  }
}

</mosaic_0001>

<llo_original>
// kernel: fast_arcnn_forward.9
$region0: #{fast_arcnn_forward.9}
  #allocation0 [shape = 'u32[]', space=smem, size = 0x4, offset = 0x4, fixed_abs, tag = 'smem constant byte address 0x4 - core index']
  #allocation1 [shape = 'u32[144,128]{1,0:T(1,128)}', space=vmem, size = 0x12000, scoped, tag = 'internal scratch']
  #allocation2 [shape = 'f32[1]{0:T(128)S(6)}', space=smem, size = 0x200, scoped, tag = 'scoped memory for fast_arcnn_forward.9']
  %s0 = inlined_call_operand.vmem [shape: bf16[128,128], index: 0, kind: input, shape index: {}]
  %s1 = inlined_call_operand.vmem [shape: f32[1,128], index: 1, kind: input, shape index: {}]
  %s2 = inlined_call_operand.vmem [shape: f32[1,128], index: 2, kind: input, shape index: {}]
  %s3 = inlined_call_operand.<no memory space> [shape: f32[1], index: 3, kind: input, shape index: {}]
  %s4 = inlined_call_operand.vmem [shape: bf16[128,128], index: 4, kind: output, shape index: {}]
  %s5 = sld [smem:[#allocation0]]
  $region49: #{fast_arcnn_forward.9} parent=0
    _
  %s7 = ssub.s32 1, %s5
  %s8 = scalar_select 0, %s7, %s5
  %9 = sst [smem:[#allocation2]] %s3
  loop: start=0, step=1, limit=6
  $region2: #{fast_arcnn_forward.9} parent=0 // loop_pre_header
    _
  $region3: #{fast_arcnn_forward.9} parent=0 // loop_header
    %s11 = sphi 0, %s15
    %p12 = scmp.ge.s32.totalorder %s11, 6
    %s21 = sphi 0, %s23
    %s24 = sphi 0, %s21
    %s25 = sphi 0, %s24
    %s41 = sphi 0, %s25
    %s45 = sphi 0, %s45
    %s47 = sphi 0, %s45
    %s48 = sphi 0, %s47
    %s62 = sphi 0, %s48
    %s66 = sphi 0, %s66
    %s68 = sphi 0, %s66
    %s69 = sphi 0, %s68
    %s83 = sphi 0, %s69
    %s87 = sphi 0, %s87
    %s89 = sphi 0, %s87
    %s90 = sphi 0, %s89
    %s104 = sphi 0, %s90
    %s110 = sphi 0, %s112
    %s113 = sphi 0, %s110
    %s114 = sphi 0, %s113
    %s130 = sphi 0, %s114
  $region4: #{fast_arcnn_forward.9} parent=0 // loop_header_branch
    %14 = sbr.rel (%p12) target = $region8
  $region5: #{fast_arcnn_forward.9} parent=0 // loop_body
    %s16 = ssub.s32 %s11, 1
    %s17 = ssub.s32 %s11, 2
    %s18 = sadd.s32 %s11, 1
    %s19 = ssub.s32 %s11, %s18
    %p20 = scmp.eq.s32.totalorder %s19, 0
    %s22 = sadd.s32 %s21, 1
    %s23 = scalar_select %p20, %s21, %s22
    %p26 = pneg %p20
    %p27 = scmp.eq.s32.totalorder %s11, 3
    %p28 = por %p26, %p27
    %p29 = scmp.ne.s32.totalorder %s21, %s24
    %p30 = scmp.eq.s32.totalorder %s11, 0
    %p31 = por %p29, %p30
    %p32 = scmp.ne.s32.totalorder %s21, %s24
    %p33 = scmp.eq.s32.totalorder %s16, 3
    %p34 = por %p32, %p33
    %p35 = scmp.ne.s32.totalorder %s24, %s25
    %p36 = scmp.eq.s32.totalorder %s16, 0
    %p37 = por %p35, %p36
    %p38 = scmp.ne.s32.totalorder %s24, %s25
    %p39 = scmp.eq.s32.totalorder %s17, 3
    %p40 = por %p38, %p39
    %p42 = scmp.ne.s32.totalorder %s25, %s41
    %p43 = scmp.eq.s32.totalorder %s17, 0
    %p44 = por %p42, %p43
    %s46 = sadd.s32 %s45, 1
    %p49 = scmp.eq.s32.totalorder %s11, 3
    %p50 = scmp.ne.s32.totalorder %s45, %s47
    %p51 = scmp.eq.s32.totalorder %s11, 0
    %p52 = por %p50, %p51
    %p53 = scmp.ne.s32.totalorder %s45, %s47
    %p54 = scmp.eq.s32.totalorder %s16, 3
    %p55 = por %p53, %p54
    %p56 = scmp.ne.s32.totalorder %s47, %s48
    %p57 = scmp.eq.s32.totalorder %s16, 0
    %p58 = por %p56, %p57
    %p59 = scmp.ne.s32.totalorder %s47, %s48
    %p60 = scmp.eq.s32.totalorder %s17, 3
    %p61 = por %p59, %p60
    %p63 = scmp.ne.s32.totalorder %s48, %s62
    %p64 = scmp.eq.s32.totalorder %s17, 0
    %p65 = por %p63, %p64
    %s67 = sadd.s32 %s66, 1
    %p70 = scmp.eq.s32.totalorder %s11, 3
    %p71 = scmp.ne.s32.totalorder %s66, %s68
    %p72 = scmp.eq.s32.totalorder %s11, 0
    %p73 = por %p71, %p72
    %p74 = scmp.ne.s32.totalorder %s66, %s68
    %p75 = scmp.eq.s32.totalorder %s16, 3
    %p76 = por %p74, %p75
    %p77 = scmp.ne.s32.totalorder %s68, %s69
    %p78 = scmp.eq.s32.totalorder %s16, 0
    %p79 = por %p77, %p78
    %p80 = scmp.ne.s32.totalorder %s68, %s69
    %p81 = scmp.eq.s32.totalorder %s17, 3
    %p82 = por %p80, %p81
    %p84 = scmp.ne.s32.totalorder %s69, %s83
    %p85 = scmp.eq.s32.totalorder %s17, 0
    %p86 = por %p84, %p85
    %s88 = sadd.s32 %s87, 1
    %p91 = scmp.eq.s32.totalorder %s11, 3
    %p92 = scmp.ne.s32.totalorder %s87, %s89
    %p93 = scmp.eq.s32.totalorder %s11, 0
    %p94 = por %p92, %p93
    %p95 = scmp.ne.s32.totalorder %s87, %s89
    %p96 = scmp.eq.s32.totalorder %s16, 3
    %p97 = por %p95, %p96
    %p98 = scmp.ne.s32.totalorder %s89, %s90
    %p99 = scmp.eq.s32.totalorder %s16, 0
    %p100 = por %p98, %p99
    %p101 = scmp.ne.s32.totalorder %s89, %s90
    %p102 = scmp.eq.s32.totalorder %s17, 3
    %p103 = por %p101, %p102
    %p105 = scmp.ne.s32.totalorder %s90, %s104
    %p106 = scmp.eq.s32.totalorder %s17, 0
    %p107 = por %p105, %p106
    %s108 = ssub.s32 %s11, %s18
    %p109 = scmp.eq.s32.totalorder %s108, 0
    %s111 = sadd.s32 %s110, 1
    %s112 = scalar_select %p109, %s110, %s111
    %p115 = pneg %p109
    %p116 = scmp.eq.s32.totalorder %s11, 3
    %p117 = por %p115, %p116
    %p118 = scmp.ne.s32.totalorder %s110, %s113
    %p119 = scmp.eq.s32.totalorder %s11, 0
    %p120 = por %p118, %p119
    %p121 = scmp.ne.s32.totalorder %s110, %s113
    %p122 = scmp.eq.s32.totalorder %s16, 3
    %p123 = por %p121, %p122
    %p124 = scmp.ne.s32.totalorder %s113, %s114
    %p125 = scmp.eq.s32.totalorder %s16, 0
    %p126 = por %p124, %p125
    %p127 = scmp.ne.s32.totalorder %s113, %s114
    %p128 = scmp.eq.s32.totalorder %s17, 3
    %p129 = por %p127, %p128
    %p131 = scmp.ne.s32.totalorder %s114, %s130
    %p132 = scmp.eq.s32.totalorder %s17, 0
    %p133 = por %p131, %p132
    %p134 = scmp.le.s32.totalorder 1, %s11
    %p135 = scmp.lt.s32.totalorder %s11, 5
    %p136 = pnand %p134, %p135
    %p137 = pneg %p136
    // Predicated region
    $region9: #{fast_arcnn_forward.9} parent=5 // pred_check
      _
    $region10: #{fast_arcnn_forward.9} parent=5 // pred_check_branch
      %139 = sbr.rel (%p136) target = $region12
    $region11: #{fast_arcnn_forward.9} parent=5 // pred_region
      %s140 = ssub.s32 %s11, 1
      // Predicated region
      $region13: #{fast_arcnn_forward.9} parent=11 // pred_check
        %p141 = pneg %p58
      $region14: #{fast_arcnn_forward.9} parent=11 // pred_check_branch
        %143 = sbr.rel (%p141) target = $region16
      $region15: #{fast_arcnn_forward.9} parent=11 // pred_region
        _
      $region16: #{fast_arcnn_forward.9} parent=11 // pred_fallthru
        _
      // Predicated region
      $region17: #{fast_arcnn_forward.9} parent=11 // pred_check
        %p144 = pneg %p79
      $region18: #{fast_arcnn_forward.9} parent=11 // pred_check_branch
        %146 = sbr.rel (%p144) target = $region20
      $region19: #{fast_arcnn_forward.9} parent=11 // pred_region
        _
      $region20: #{fast_arcnn_forward.9} parent=11 // pred_fallthru
        _
      // Predicated region
      $region21: #{fast_arcnn_forward.9} parent=11 // pred_check
        %p147 = pneg %p100
      $region22: #{fast_arcnn_forward.9} parent=11 // pred_check_branch
        %149 = sbr.rel (%p147) target = $region24
      $region23: #{fast_arcnn_forward.9} parent=11 // pred_region
        _
      $region24: #{fast_arcnn_forward.9} parent=11 // pred_fallthru
        _
    $region12: #{fast_arcnn_forward.9} parent=5 // pred_fallthru
      _
    %p150 = scmp.lt.s32.totalorder %s11, 4
    // Predicated region
    $region25: #{fast_arcnn_forward.9} parent=5 // pred_check
      %p151 = pneg %p150
    $region26: #{fast_arcnn_forward.9} parent=5 // pred_check_branch
      %153 = sbr.rel (%p151) target = $region28
    $region27: #{fast_arcnn_forward.9} parent=5 // pred_region
      // Predicated region
      $region29: #{fast_arcnn_forward.9} parent=27 // pred_check
        %p154 = pneg %p31
      $region30: #{fast_arcnn_forward.9} parent=27 // pred_check_branch
        %156 = sbr.rel (%p154) target = $region32
      $region31: #{fast_arcnn_forward.9} parent=27 // pred_region
        %s157 = smul.u32 4, %s11
        %p158 = scmp.lt.s32.totalorder %s157, 15
        %s159 = scalar_select %p158, %s157, 15
        %s160 = smul.addr %s159, 4
        %s161 = scalar_lea.vmem %s0, %s160
        %s162 = smul.u32 4, %s11
      $region32: #{fast_arcnn_forward.9} parent=27 // pred_fallthru
        _
    $region28: #{fast_arcnn_forward.9} parent=5 // pred_fallthru
      _
    %p163 = scmp.le.s32.totalorder 1, %s11
    %p164 = scmp.lt.s32.totalorder %s11, 5
    %p165 = pnand %p163, %p164
    %p166 = pneg %p165
    // Predicated region
    $region33: #{fast_arcnn_forward.9} parent=5 // pred_check
      _
    $region34: #{fast_arcnn_forward.9} parent=5 // pred_check_branch
      %168 = sbr.rel (%p165) target = $region36
    $region35: #{fast_arcnn_forward.9} parent=5 // pred_region
      %s169 = ssub.s32 %s11, 1
      %s170 = smul.u32 4, %s16
      %p171 = scmp.lt.s32.totalorder %s170, 15
      %s172 = scalar_select %p171, %s170, 15
      %s173 = smul.addr %s172, 4
      %s174 = scalar_lea.vmem %s0, %s173
      %p175 = pneg %p37
      %p176 = pneg %p34
      %p177 = pneg %p58
      %p178 = pneg %p55
      %p179 = pneg %p79
      %p180 = pneg %p76
      %p181 = pneg %p100
      %p182 = pneg %p97
      %p183 = pneg %p126
      %p184 = pneg %p123
      %s185 = smul.u32 4, %s16
      %p186 = scmp.lt.s32.totalorder %s185, 15
      %s187 = scalar_select %p186, %s185, 15
      %s188 = smul.addr %s187, 4
      %s189 = scalar_lea.vmem %s4, %s188
      %s190 = smul.u32 4, %s16
      %p191 = scmp.lt.s32.totalorder %s190, 15
      %s192 = scalar_select %p191, %s190, 15
      %s193 = smul.addr %s192, 4
      %s194 = scalar_lea.vmem %s0, %s193
      %s195 = smul.u32 4, %s16
      %s196 = smul.u32 4, %s16
      %p197 = scmp.lt.s32.totalorder %s196, 15
      %s198 = scalar_select %p197, %s196, 15
      %s199 = smul.addr %s198, 4
      %s200 = scalar_lea.vmem %s4, %s199
      %s201 = smul.u32 4, %s16
      %v202 = vld [vmem:[%s194] sm:$0xf]
      %v203 = vld [vmem:[%s194 + $0x4] sm:$0xf]
      %v204 = vld [vmem:[%s194 + $0x8] sm:$0xf]
      %v205 = vld [vmem:[%s194 + $0xc] sm:$0xf]
      %v206 = vunpack.c.l.bf16 %v202
      %v207 = vunpack.c.l.bf16 %v203
      %v208 = vunpack.c.l.bf16 %v204
      %v209 = vunpack.c.l.bf16 %v205
      %v210 = vld [vmem:[%s1] sm:$0x1]
      %v212 = vlaneseq
      %v213 = vshrl.u32 %v212, 7
      %v214 = vsub.s32 0, %v213
      %v215 = vrot.slane %v210, %v214
      %v217 = vmul.f32 %v206, %v215
      %v218 = vmul.f32 %v207, %v215
      %v219 = vmul.f32 %v208, %v215
      %v220 = vmul.f32 %v209, %v215
      %v221 = vld [vmem:[%s2] sm:$0x1]
      %v223 = vlaneseq
      %v224 = vshrl.u32 %v223, 7
      %v225 = vsub.s32 0, %v224
      %v226 = vrot.slane %v221, %v225
      %v228 = vadd.f32 %v217, %v226
      %v229 = vadd.f32 %v218, %v226
      %v230 = vadd.f32 %v219, %v226
      %v231 = vadd.f32 %v220, %v226
      %s232 = sld [smem:[#allocation2]]
      %vm233 = vcmp.gt.f32.partialorder %v228, 0.0
      %vm234 = vcmp.gt.f32.partialorder %v229, 0.0
      %vm235 = vcmp.gt.f32.partialorder %v230, 0.0
      %vm236 = vcmp.gt.f32.partialorder %v231, 0.0
      %v237 = vstv %s232
      %v238 = vmul.f32 %v237, %v228
      %v239 = vmul.f32 %v237, %v229
      %v240 = vmul.f32 %v237, %v230
      %v241 = vmul.f32 %v237, %v231
      %v242 = vsel %vm233, %v228, %v238
      %v243 = vsel %vm234, %v229, %v239
      %v244 = vsel %vm235, %v230, %v240
      %v245 = vsel %vm236, %v231, %v241
      %v246 = vpack.c.bf16 %v243, %v242
      %v247 = vpack.c.bf16 %v245, %v244
      %v250 = vunpack.c.l.b16 %v246
      %v251 = vunpack.c.h.b16 %v246
      %v252 = vunpack.c.l.b16 %v247
      %v253 = vunpack.c.h.b16 %v247
      %v254 = vpack.c.b16 %v250, %v250
      %v255 = vpack.c.b16 %v251, %v251
      %v256 = vpack.c.b16 %v252, %v252
      %v257 = vpack.c.b16 %v253, %v253
      %262 = vst [vmem:[%s200] sm:$0xf] %v254
      %263 = vst [vmem:[%s200 + $0x4] sm:$0xf] %v255
      %264 = vst [vmem:[%s200 + $0x8] sm:$0xf] %v256
      %265 = vst [vmem:[%s200 + $0xc] sm:$0xf] %v257
      %s266 = smul.u32 4, %s16
      %p267 = scmp.lt.s32.totalorder %s266, 15
      %s268 = scalar_select %p267, %s266, 15
      %s269 = smul.addr %s268, 4
      %s270 = scalar_lea.vmem %s4, %s269
      // Predicated region
      $region37: #{fast_arcnn_forward.9} parent=35 // pred_check
        %p271 = pneg %p123
      $region38: #{fast_arcnn_forward.9} parent=35 // pred_check_branch
        %273 = sbr.rel (%p271) target = $region40
      $region39: #{fast_arcnn_forward.9} parent=35 // pred_region
        %s274 = smul.u32 4, %s16
      $region40: #{fast_arcnn_forward.9} parent=35 // pred_fallthru
        _
    $region36: #{fast_arcnn_forward.9} parent=5 // pred_fallthru
      _
    %p275 = scmp.le.s32.totalorder 2, %s11
    // Predicated region
    $region41: #{fast_arcnn_forward.9} parent=5 // pred_check
      %p276 = pneg %p275
    $region42: #{fast_arcnn_forward.9} parent=5 // pred_check_branch
      %278 = sbr.rel (%p276) target = $region44
    $region43: #{fast_arcnn_forward.9} parent=5 // pred_region
      %s279 = ssub.s32 %s11, 2
      // Predicated region
      $region45: #{fast_arcnn_forward.9} parent=43 // pred_check
        %p280 = pneg %p129
      $region46: #{fast_arcnn_forward.9} parent=43 // pred_check_branch
        %282 = sbr.rel (%p280) target = $region48
      $region47: #{fast_arcnn_forward.9} parent=43 // pred_region
        %s283 = smul.u32 4, %s17
        %p284 = scmp.lt.s32.totalorder %s283, 15
        %s285 = scalar_select %p284, %s283, 15
        %s286 = smul.addr %s285, 4
        %s287 = scalar_lea.vmem %s4, %s286
      $region48: #{fast_arcnn_forward.9} parent=43 // pred_fallthru
        _
    $region44: #{fast_arcnn_forward.9} parent=5 // pred_fallthru
      _
  $region6: #{fast_arcnn_forward.9} parent=0 // loop_footer
    %s15 = sadd.s32 1, %s11
  $region7: #{fast_arcnn_forward.9} parent=0 // loop_footer_branch
    %10 = sbr.rel target = $region3
  $region8: #{fast_arcnn_forward.9} parent=0 // loop_exit
    _

// kernel: fast_arcnn_forward.7
$region0: #{fast_arcnn_forward.7}
  #allocation0 [shape = 'u32[]', space=smem, size = 0x4, offset = 0x4, fixed_abs, tag = 'smem constant byte address 0x4 - core index']
  #allocation1 [shape = 'u32[144,128]{1,0:T(1,128)}', space=vmem, size = 0x12000, scoped, tag = 'internal scratch']
  %s0 = inlined_call_operand.vmem [shape: bf16[128,243], index: 0, kind: input, shape index: {}]
  %s1 = inlined_call_operand.vmem [shape: bf16[243,128], index: 1, kind: input, shape index: {}]
  %s2 = inlined_call_operand.vmem [shape: bf16[128,128], index: 2, kind: output, shape index: {0}]
  %s3 = inlined_call_operand.vmem [shape: f32[32,128], index: 3, kind: output, shape index: {1}]
  %4 = xla_tuple %s2, %s3
  %s5 = sld [smem:[#allocation0]]
  $region49: #{fast_arcnn_forward.7} parent=0
    _
  %s7 = ssub.s32 1, %s5
  %s8 = scalar_select 0, %s7, %s5
  loop: start=0, step=1, limit=6
  $region2: #{fast_arcnn_forward.7} parent=0 // loop_pre_header
    _
  $region3: #{fast_arcnn_forward.7} parent=0 // loop_header
    %s10 = sphi 0, %s14
    %p11 = scmp.ge.s32.totalorder %s10, 6
    %s20 = sphi 0, %s22
    %s23 = sphi 0, %s20
    %s24 = sphi 0, %s23
    %s40 = sphi 0, %s24
    %s44 = sphi 0, %s44
    %s46 = sphi 0, %s44
    %s47 = sphi 0, %s46
    %s61 = sphi 0, %s47
    %s67 = sphi 0, %s69
    %s70 = sphi 0, %s67
    %s71 = sphi 0, %s70
    %s87 = sphi 0, %s71
    %s93 = sphi 0, %s95
    %s96 = sphi 0, %s93
    %s97 = sphi 0, %s96
    %s113 = sphi 0, %s97
  $region4: #{fast_arcnn_forward.7} parent=0 // loop_header_branch
    %13 = sbr.rel (%p11) target = $region8
  $region5: #{fast_arcnn_forward.7} parent=0 // loop_body
    %s15 = ssub.s32 %s10, 1
    %s16 = ssub.s32 %s10, 2
    %s17 = sadd.s32 %s10, 1
    %s18 = ssub.s32 %s10, %s17
    %p19 = scmp.eq.s32.totalorder %s18, 0
    %s21 = sadd.s32 %s20, 1
    %s22 = scalar_select %p19, %s20, %s21
    %p25 = pneg %p19
    %p26 = scmp.eq.s32.totalorder %s10, 3
    %p27 = por %p25, %p26
    %p28 = scmp.ne.s32.totalorder %s20, %s23
    %p29 = scmp.eq.s32.totalorder %s10, 0
    %p30 = por %p28, %p29
    %p31 = scmp.ne.s32.totalorder %s20, %s23
    %p32 = scmp.eq.s32.totalorder %s15, 3
    %p33 = por %p31, %p32
    %p34 = scmp.ne.s32.totalorder %s23, %s24
    %p35 = scmp.eq.s32.totalorder %s15, 0
    %p36 = por %p34, %p35
    %p37 = scmp.ne.s32.totalorder %s23, %s24
    %p38 = scmp.eq.s32.totalorder %s16, 3
    %p39 = por %p37, %p38
    %p41 = scmp.ne.s32.totalorder %s24, %s40
    %p42 = scmp.eq.s32.totalorder %s16, 0
    %p43 = por %p41, %p42
    %s45 = sadd.s32 %s44, 1
    %p48 = scmp.eq.s32.totalorder %s10, 3
    %p49 = scmp.ne.s32.totalorder %s44, %s46
    %p50 = scmp.eq.s32.totalorder %s10, 0
    %p51 = por %p49, %p50
    %p52 = scmp.ne.s32.totalorder %s44, %s46
    %p53 = scmp.eq.s32.totalorder %s15, 3
    %p54 = por %p52, %p53
    %p55 = scmp.ne.s32.totalorder %s46, %s47
    %p56 = scmp.eq.s32.totalorder %s15, 0
    %p57 = por %p55, %p56
    %p58 = scmp.ne.s32.totalorder %s46, %s47
    %p59 = scmp.eq.s32.totalorder %s16, 3
    %p60 = por %p58, %p59
    %p62 = scmp.ne.s32.totalorder %s47, %s61
    %p63 = scmp.eq.s32.totalorder %s16, 0
    %p64 = por %p62, %p63
    %s65 = ssub.s32 %s10, %s17
    %p66 = scmp.eq.s32.totalorder %s65, 0
    %s68 = sadd.s32 %s67, 1
    %s69 = scalar_select %p66, %s67, %s68
    %p72 = pneg %p66
    %p73 = scmp.eq.s32.totalorder %s10, 3
    %p74 = por %p72, %p73
    %p75 = scmp.ne.s32.totalorder %s67, %s70
    %p76 = scmp.eq.s32.totalorder %s10, 0
    %p77 = por %p75, %p76
    %p78 = scmp.ne.s32.totalorder %s67, %s70
    %p79 = scmp.eq.s32.totalorder %s15, 3
    %p80 = por %p78, %p79
    %p81 = scmp.ne.s32.totalorder %s70, %s71
    %p82 = scmp.eq.s32.totalorder %s15, 0
    %p83 = por %p81, %p82
    %p84 = scmp.ne.s32.totalorder %s70, %s71
    %p85 = scmp.eq.s32.totalorder %s16, 3
    %p86 = por %p84, %p85
    %p88 = scmp.ne.s32.totalorder %s71, %s87
    %p89 = scmp.eq.s32.totalorder %s16, 0
    %p90 = por %p88, %p89
    %s91 = ssub.s32 %s10, %s17
    %p92 = scmp.eq.s32.totalorder %s91, 0
    %s94 = sadd.s32 %s93, 1
    %s95 = scalar_select %p92, %s93, %s94
    %p98 = pneg %p92
    %p99 = scmp.eq.s32.totalorder %s10, 3
    %p100 = por %p98, %p99
    %p101 = scmp.ne.s32.totalorder %s93, %s96
    %p102 = scmp.eq.s32.totalorder %s10, 0
    %p103 = por %p101, %p102
    %p104 = scmp.ne.s32.totalorder %s93, %s96
    %p105 = scmp.eq.s32.totalorder %s15, 3
    %p106 = por %p104, %p105
    %p107 = scmp.ne.s32.totalorder %s96, %s97
    %p108 = scmp.eq.s32.totalorder %s15, 0
    %p109 = por %p107, %p108
    %p110 = scmp.ne.s32.totalorder %s96, %s97
    %p111 = scmp.eq.s32.totalorder %s16, 3
    %p112 = por %p110, %p111
    %p114 = scmp.ne.s32.totalorder %s97, %s113
    %p115 = scmp.eq.s32.totalorder %s16, 0
    %p116 = por %p114, %p115
    %p117 = scmp.le.s32.totalorder 1, %s10
    %p118 = scmp.lt.s32.totalorder %s10, 5
    %p119 = pnand %p117, %p118
    %p120 = pneg %p119
    // Predicated region
    $region9: #{fast_arcnn_forward.7} parent=5 // pred_check
      _
    $region10: #{fast_arcnn_forward.7} parent=5 // pred_check_branch
      %122 = sbr.rel (%p119) target = $region12
    $region11: #{fast_arcnn_forward.7} parent=5 // pred_region
      %s123 = ssub.s32 %s10, 1
      // Predicated region
      $region13: #{fast_arcnn_forward.7} parent=11 // pred_check
        %p124 = pneg %p57
      $region14: #{fast_arcnn_forward.7} parent=11 // pred_check_branch
        %126 = sbr.rel (%p124) target = $region16
      $region15: #{fast_arcnn_forward.7} parent=11 // pred_region
        _
      $region16: #{fast_arcnn_forward.7} parent=11 // pred_fallthru
        _
    $region12: #{fast_arcnn_forward.7} parent=5 // pred_fallthru
      _
    %p127 = scmp.lt.s32.totalorder %s10, 4
    // Predicated region
    $region17: #{fast_arcnn_forward.7} parent=5 // pred_check
      %p128 = pneg %p127
    $region18: #{fast_arcnn_forward.7} parent=5 // pred_check_branch
      %130 = sbr.rel (%p128) target = $region20
    $region19: #{fast_arcnn_forward.7} parent=5 // pred_region
      // Predicated region
      $region21: #{fast_arcnn_forward.7} parent=19 // pred_check
        %p131 = pneg %p30
      $region22: #{fast_arcnn_forward.7} parent=19 // pred_check_branch
        %133 = sbr.rel (%p131) target = $region24
      $region23: #{fast_arcnn_forward.7} parent=19 // pred_region
        %s134 = smul.u32 4, %s10
        %p135 = scmp.lt.s32.totalorder %s134, 15
        %s136 = scalar_select %p135, %s134, 15
        %s137 = smul.addr %s136, 2
        %s138 = smul.addr %s137, 4
        %s139 = scalar_lea.vmem %s0, %s138
        %s140 = smul.u32 4, %s10
      $region24: #{fast_arcnn_forward.7} parent=19 // pred_fallthru
        _
    $region20: #{fast_arcnn_forward.7} parent=5 // pred_fallthru
      _
    %p141 = scmp.le.s32.totalorder 1, %s10
    %p142 = scmp.lt.s32.totalorder %s10, 5
    %p143 = pnand %p141, %p142
    %p144 = pneg %p143
    // Predicated region
    $region25: #{fast_arcnn_forward.7} parent=5 // pred_check
      _
    $region26: #{fast_arcnn_forward.7} parent=5 // pred_check_branch
      %146 = sbr.rel (%p143) target = $region28
    $region27: #{fast_arcnn_forward.7} parent=5 // pred_region
      %s147 = ssub.s32 %s10, 1
      %s148 = smul.u32 4, %s15
      %p149 = scmp.lt.s32.totalorder %s148, 15
      %s150 = scalar_select %p149, %s148, 15
      %s151 = smul.addr %s150, 2
      %s152 = smul.addr %s151, 4
      %s153 = scalar_lea.vmem %s0, %s152
      %p154 = pneg %p36
      %p155 = pneg %p33
      %p156 = pneg %p57
      %p157 = pneg %p54
      %p158 = pneg %p83
      %p159 = pneg %p80
      %s160 = smul.u32 4, %s15
      %p161 = scmp.lt.s32.totalorder %s160, 15
      %s162 = scalar_select %p161, %s160, 15
      %s163 = smul.addr %s162, 4
      %s164 = scalar_lea.vmem %s2, %s163
      %p165 = pneg %p109
      %p166 = pneg %p106
      %p167 = scmp.lt.s32.totalorder %s15, 3
      %s168 = scalar_select %p167, %s15, 3
      %s169 = smul.addr %s168, 8
      %s170 = scalar_lea.vmem %s3, %s169
      %s171 = smul.u32 4, %s15
      %p172 = scmp.lt.s32.totalorder %s171, 15
      %s173 = scalar_select %p172, %s171, 15
      %s174 = smul.addr %s173, 2
      %s175 = smul.addr %s174, 4
      %s176 = scalar_lea.vmem %s0, %s175
      %s177 = smul.u32 4, %s15
      %s178 = smul.u32 4, %s15
      %p179 = scmp.lt.s32.totalorder %s178, 15
      %s180 = scalar_select %p179, %s178, 15
      %s181 = smul.addr %s180, 4
      %s182 = scalar_lea.vmem %s2, %s181
      %s183 = smul.u32 4, %s15
      %p184 = scmp.lt.s32.totalorder %s15, 3
      %s185 = scalar_select %p184, %s15, 3
      %s186 = smul.addr %s185, 8
      %s187 = scalar_lea.vmem %s3, %s186
      %v189 = vld [vmem:[%s176] sm:$0xff]
      %v190 = vld [vmem:[%s176 + $0x8] sm:$0xff]
      %v191 = vld [vmem:[%s176 + $0x10] sm:$0xff]
      %v192 = vld [vmem:[%s176 + $0x18] sm:$0xff]
      %v193 = vld [vmem:[%s1] sm:$0xf]
      %v194 = vld [vmem:[%s1 + $0x4] sm:$0xf]
      %v195 = vld [vmem:[%s1 + $0x8] sm:$0xf]
      %v196 = vld [vmem:[%s1 + $0xc] sm:$0xf]
      %v197 = vld [vmem:[%s1 + $0x10] sm:$0xf]
      %v198 = vld [vmem:[%s1 + $0x14] sm:$0xf]
      %v199 = vld [vmem:[%s1 + $0x18] sm:$0xf]
      %v200 = vld [vmem:[%s1 + $0x1c] sm:$0xf]
      %v201 = vld [vmem:[%s1 + $0x20] sm:$0xf]
      %v202 = vld [vmem:[%s1 + $0x24] sm:$0xf]
      %v203 = vld [vmem:[%s1 + $0x28] sm:$0xf]
      %v204 = vld [vmem:[%s1 + $0x2c] sm:$0xf]
      %v205 = vld [vmem:[%s1 + $0x30] sm:$0xf]
      %v206 = vld [vmem:[%s1 + $0x34] sm:$0xf]
      %v207 = vld [vmem:[%s1 + $0x38] sm:$0xf]
      %v208 = vld [vmem:[%s1 + $0x3c] sm:$0xf]
      %v209 = vld [vmem:[%s1 + $0x40] sm:$0xf]
      %v210 = vld [vmem:[%s1 + $0x44] sm:$0xf]
      %v211 = vld [vmem:[%s1 + $0x48] sm:$0xf]
      %v212 = vld [vmem:[%s1 + $0x4c] sm:$0xf]
      %v213 = vld [vmem:[%s1 + $0x50] sm:$0xf]
      %v214 = vld [vmem:[%s1 + $0x54] sm:$0xf]
      %v215 = vld [vmem:[%s1 + $0x58] sm:$0xf]
      %v216 = vld [vmem:[%s1 + $0x5c] sm:$0xf]
      %v217 = vld [vmem:[%s1 + $0x60] sm:$0xf]
      %v218 = vld [vmem:[%s1 + $0x64] sm:$0xf]
      %v219 = vld [vmem:[%s1 + $0x68] sm:$0xf]
      %v220 = vld [vmem:[%s1 + $0x6c] sm:$0xf]
      %v221 = vld [vmem:[%s1 + $0x70] sm:$0xf]
      %v222 = vld [vmem:[%s1 + $0x74] sm:$0xf]
      %v223 = vld [vmem:[%s1 + $0x78] sm:$0x3]
      %v228 = vunpack.c.l.b16 %v189
      %v229 = vunpack.c.h.b16 %v189
      %v230 = vunpack.c.l.b16 %v190
      %v231 = vunpack.c.h.b16 %v190
      %v232 = vunpack.c.l.b16 %v191
      %v233 = vunpack.c.h.b16 %v191
      %v234 = vunpack.c.l.b16 %v192
      %v235 = vunpack.c.h.b16 %v192
      %v236 = vpack.c.b16 %v230, %v228
      %v237 = vpack.c.b16 %v231, %v229
      %v238 = vpack.c.b16 %v234, %v232
      %v239 = vpack.c.b16 %v235, %v233
      %v273 = vunpack.c.l.b16 %v193
      %v274 = vunpack.c.l.b16 %v194
      %v275 = vunpack.c.l.b16 %v195
      %v276 = vunpack.c.l.b16 %v196
      %v277 = vunpack.c.l.b16 %v197
      %v278 = vunpack.c.l.b16 %v198
      %v279 = vunpack.c.l.b16 %v199
      %v280 = vunpack.c.l.b16 %v200
      %v281 = vunpack.c.l.b16 %v201
      %v282 = vunpack.c.l.b16 %v202
      %v283 = vunpack.c.l.b16 %v203
      %v284 = vunpack.c.l.b16 %v204
      %v285 = vunpack.c.l.b16 %v205
      %v286 = vunpack.c.l.b16 %v206
      %v287 = vunpack.c.l.b16 %v207
      %v288 = vunpack.c.l.b16 %v208
      %v289 = vunpack.c.l.b16 %v209
      %v290 = vunpack.c.l.b16 %v210
      %v291 = vunpack.c.l.b16 %v211
      %v292 = vunpack.c.l.b16 %v212
      %v293 = vunpack.c.l.b16 %v213
      %v294 = vunpack.c.l.b16 %v214
      %v295 = vunpack.c.l.b16 %v215
      %v296 = vunpack.c.l.b16 %v216
      %v297 = vunpack.c.l.b16 %v217
      %v298 = vunpack.c.l.b16 %v218
      %v299 = vunpack.c.l.b16 %v219
      %v300 = vunpack.c.l.b16 %v220
      %v301 = vunpack.c.l.b16 %v221
      %v302 = vunpack.c.l.b16 %v222
      %v303 = vunpack.c.l.b16 %v223
      %v304 = vpack.c.b16 %v274, %v273
      %v305 = vpack.c.b16 %v276, %v275
      %v306 = vpack.c.b16 %v278, %v277
      %v307 = vpack.c.b16 %v280, %v279
      %v308 = vpack.c.b16 %v282, %v281
      %v309 = vpack.c.b16 %v284, %v283
      %v310 = vpack.c.b16 %v286, %v285
      %v311 = vpack.c.b16 %v288, %v287
      %v312 = vpack.c.b16 %v290, %v289
      %v313 = vpack.c.b16 %v292, %v291
      %v314 = vpack.c.b16 %v294, %v293
      %v315 = vpack.c.b16 %v296, %v295
      %v316 = vpack.c.b16 %v298, %v297
      %v317 = vpack.c.b16 %v300, %v299
      %v318 = vpack.c.b16 %v302, %v301
      %v319 = vpack.c.b16 %v303, %v303
      %vm335 = vcmask 941056
      %v337 = vsel %vm335, %v237, 0
      %v340 = vsel %vm335, %v239, 0
      %vm342 = vcmask 1040384
      %vm343 = vcmask 1041408
      %v344 = vsel %vm342, 4294967295, 65535
      %v345 = vsel %vm343, %v344, 0
      %v347 = vand.u32 %v319, %v345
      %349 = vmatprep.subr.bf16.mxu0 0
      %350 = vmatpush1.bf16.msra.mxu0 %v304
      %351 = vmatprep.subr.bf16.mxu0 0
      %352 = vmatpush1.bf16.msra.mxu0 %v305
      %353 = vmatprep.subr.bf16.mxu0 0
      %354 = vmatpush1.bf16.msra.mxu0 %v306
      %355 = vmatprep.subr.bf16.mxu0 0
      %356 = vmatpush1.bf16.msra.mxu0 %v307
      %357 = vmatprep.subr.bf16.mxu0 0
      %358 = vmatpush1.bf16.msra.mxu0 %v308
      %359 = vmatprep.subr.bf16.mxu0 0
      %360 = vmatpush1.bf16.msra.mxu0 %v309
      %361 = vmatprep.subr.bf16.mxu0 0
      %362 = vmatpush1.bf16.msra.mxu0 %v310
      %363 = vmatprep.subr.bf16.mxu0 0
      %364 = vmatpush1.bf16.msra.mxu0 %v311
      %365 = vmatprep.subr.bf16.mxu0 0
      %366 = vmatpush1.bf16.msra.mxu0 %v312
      %367 = vmatprep.subr.bf16.mxu0 0
      %368 = vmatpush1.bf16.msra.mxu0 %v313
      %369 = vmatprep.subr.bf16.mxu0 0
      %370 = vmatpush1.bf16.msra.mxu0 %v314
      %371 = vmatprep.subr.bf16.mxu0 0
      %372 = vmatpush1.bf16.msra.mxu0 %v315
      %373 = vmatprep.subr.bf16.mxu0 0
      %374 = vmatpush1.bf16.msra.mxu0 %v316
      %375 = vmatprep.subr.bf16.mxu0 0
      %376 = vmatpush1.bf16.msra.mxu0 %v317
      %377 = vmatprep.subr.bf16.mxu0 0
      %378 = vmatpush1.bf16.msra.mxu0 %v318
      %379 = vmatprep.subr.bf16.mxu0 0
      %380 = vmatpush1.bf16.msra.mxu0 %v347
      %381 = vmatprep.mubr.bf16.mxu0 %v337
      %382 = vmatmul.mubr.bf16.gmra.mrb[0].mxu0 %v236
      %v383 = vpop.f32.mrb[0].mxu0
      %v384 = vadd.f32 0.0, %v383
      %v385 = vpop.f32.mrb[0].mxu0
      %v386 = vpop.f32.mrb[0].mxu0
      %v387 = vadd.f32 0.0, %v386
      %v388 = vpop.f32.mrb[0].mxu0
      %389 = vmatprep.mubr.bf16.mxu0 %v340
      %390 = vmatmul.mubr.bf16.gmra.mrb[0].mxu0 %v238
      %v391 = vpop.f32.mrb[0].mxu0
      %v392 = vadd.f32 0.0, %v391
      %v393 = vpop.f32.mrb[0].mxu0
      %v394 = vpop.f32.mrb[0].mxu0
      %v395 = vadd.f32 0.0, %v394
      %v396 = vpop.f32.mrb[0].mxu0
      %397 = vdwg.mxu0
      %v398 = vadd.f32 %v384, %v387
      %v399 = vadd.f32 %v398, %v392
      %v400 = vadd.f32 %v399, %v395
      %v401 = vrot.slane %v400, 4
      %v402 = vadd.f32 %v400, %v401
      %v403 = vrot.slane %v402, 2
      %v404 = vadd.f32 %v402, %v403
      %v405 = vrot.slane %v404, 1
      %v406 = vadd.f32 %v404, %v405
      %407 = vst [vmem:[%s187] sm:$0x1] %v406
      %v408 = vmul.f32 %v384, %v384
      %v409 = vmul.f32 %v387, %v387
      %v410 = vmul.f32 %v392, %v392
      %v411 = vmul.f32 %v395, %v395
      %v412 = vadd.f32 %v408, %v409
      %v413 = vadd.f32 %v412, %v410
      %v414 = vadd.f32 %v413, %v411
      %v415 = vrot.slane %v414, 4
      %v416 = vadd.f32 %v414, %v415
      %v417 = vrot.slane %v416, 2
      %v418 = vadd.f32 %v416, %v417
      %v419 = vrot.slane %v418, 1
      %v420 = vadd.f32 %v418, %v419
      %421 = vst [vmem:[%s187 + $0x1] sm:$0x1] %v420
      %v422 = vpack.c.bf16 %v387, %v384
      %v423 = vpack.c.bf16 %v395, %v392
      %v426 = vunpack.c.l.b16 %v422
      %v427 = vunpack.c.h.b16 %v422
      %v428 = vunpack.c.l.b16 %v423
      %v429 = vunpack.c.h.b16 %v423
      %v430 = vpack.c.b16 %v426, %v426
      %v431 = vpack.c.b16 %v427, %v427
      %v432 = vpack.c.b16 %v428, %v428
      %v433 = vpack.c.b16 %v429, %v429
      %438 = vst [vmem:[%s182] sm:$0xf] %v430
      %439 = vst [vmem:[%s182 + $0x4] sm:$0xf] %v431
      %440 = vst [vmem:[%s182 + $0x8] sm:$0xf] %v432
      %441 = vst [vmem:[%s182 + $0xc] sm:$0xf] %v433
      %s442 = smul.u32 4, %s15
      %p443 = scmp.lt.s32.totalorder %s442, 15
      %s444 = scalar_select %p443, %s442, 15
      %s445 = smul.addr %s444, 4
      %s446 = scalar_lea.vmem %s2, %s445
      %p447 = scmp.lt.s32.totalorder %s15, 3
      %s448 = scalar_select %p447, %s15, 3
      %s449 = smul.addr %s448, 8
      %s450 = scalar_lea.vmem %s3, %s449
      // Predicated region
      $region29: #{fast_arcnn_forward.7} parent=27 // pred_check
        %p451 = pneg %p80
      $region30: #{fast_arcnn_forward.7} parent=27 // pred_check_branch
        %453 = sbr.rel (%p451) target = $region32
      $region31: #{fast_arcnn_forward.7} parent=27 // pred_region
        %s454 = smul.u32 4, %s15
      $region32: #{fast_arcnn_forward.7} parent=27 // pred_fallthru
        _
      // Predicated region
      $region33: #{fast_arcnn_forward.7} parent=27 // pred_check
        %p455 = pneg %p106
      $region34: #{fast_arcnn_forward.7} parent=27 // pred_check_branch
        %457 = sbr.rel (%p455) target = $region36
      $region35: #{fast_arcnn_forward.7} parent=27 // pred_region
        _
      $region36: #{fast_arcnn_forward.7} parent=27 // pred_fallthru
        _
    $region28: #{fast_arcnn_forward.7} parent=5 // pred_fallthru
      _
    %p458 = scmp.le.s32.totalorder 2, %s10
    // Predicated region
    $region37: #{fast_arcnn_forward.7} parent=5 // pred_check
      %p459 = pneg %p458
    $region38: #{fast_arcnn_forward.7} parent=5 // pred_check_branch
      %461 = sbr.rel (%p459) target = $region40
    $region39: #{fast_arcnn_forward.7} parent=5 // pred_region
      %s462 = ssub.s32 %s10, 2
      // Predicated region
      $region41: #{fast_arcnn_forward.7} parent=39 // pred_check
        %p463 = pneg %p86
      $region42: #{fast_arcnn_forward.7} parent=39 // pred_check_branch
        %465 = sbr.rel (%p463) target = $region44
      $region43: #{fast_arcnn_forward.7} parent=39 // pred_region
        %s466 = smul.u32 4, %s16
        %p467 = scmp.lt.s32.totalorder %s466, 15
        %s468 = scalar_select %p467, %s466, 15
        %s469 = smul.addr %s468, 4
        %s470 = scalar_lea.vmem %s2, %s469
      $region44: #{fast_arcnn_forward.7} parent=39 // pred_fallthru
        _
      // Predicated region
      $region45: #{fast_arcnn_forward.7} parent=39 // pred_check
        %p471 = pneg %p112
      $region46: #{fast_arcnn_forward.7} parent=39 // pred_check_branch
        %473 = sbr.rel (%p471) target = $region48
      $region47: #{fast_arcnn_forward.7} parent=39 // pred_region
        %p474 = scmp.lt.s32.totalorder %s16, 3
        %s475 = scalar_select %p474, %s16, 3
        %s476 = smul.addr %s475, 8
        %s477 = scalar_lea.vmem %s3, %s476
      $region48: #{fast_arcnn_forward.7} parent=39 // pred_fallthru
        _
    $region40: #{fast_arcnn_forward.7} parent=5 // pred_fallthru
      _
  $region6: #{fast_arcnn_forward.7} parent=0 // loop_footer
    %s14 = sadd.s32 1, %s10
  $region7: #{fast_arcnn_forward.7} parent=0 // loop_footer_branch
    %9 = sbr.rel target = $region3
  $region8: #{fast_arcnn_forward.7} parent=0 // loop_exit
    _

// kernel: fast_arcnn_forward.8
$region0: #{fast_arcnn_forward.8}
  #allocation0 [shape = 'u32[]', space=smem, size = 0x4, offset = 0x4, fixed_abs, tag = 'smem constant byte address 0x4 - core index']
  #allocation1 [shape = 'u32[144,128]{1,0:T(1,128)}', space=vmem, size = 0x12000, scoped, tag = 'internal scratch']
  #allocation2 [shape = 'f32[1]{0:T(128)S(6)}', space=smem, size = 0x200, scoped, tag = 'scoped memory for fast_arcnn_forward.8']
  %s0 = inlined_call_operand.vmem [shape: bf16[128,128], index: 0, kind: input, shape index: {}]
  %s1 = inlined_call_operand.vmem [shape: f32[1,128], index: 1, kind: input, shape index: {}]
  %s2 = inlined_call_operand.vmem [shape: f32[1,128], index: 2, kind: input, shape index: {}]
  %s3 = inlined_call_operand.<no memory space> [shape: f32[1], index: 3, kind: input, shape index: {}]
  %s4 = inlined_call_operand.vmem [shape: bf16[128,128], index: 4, kind: input, shape index: {}]
  %s5 = inlined_call_operand.vmem [shape: bf16[128,128], index: 5, kind: output, shape index: {0}]
  %s6 = inlined_call_operand.vmem [shape: f32[32,128], index: 6, kind: output, shape index: {1}]
  %7 = xla_tuple %s5, %s6
  %s8 = sld [smem:[#allocation0]]
  $region61: #{fast_arcnn_forward.8} parent=0
    _
  %s10 = ssub.s32 1, %s8
  %s11 = scalar_select 0, %s10, %s8
  %12 = sst [smem:[#allocation2]] %s3
  loop: start=0, step=1, limit=6
  $region2: #{fast_arcnn_forward.8} parent=0 // loop_pre_header
    _
  $region3: #{fast_arcnn_forward.8} parent=0 // loop_header
    %s14 = sphi 0, %s18
    %p15 = scmp.ge.s32.totalorder %s14, 6
    %s24 = sphi 0, %s26
    %s27 = sphi 0, %s24
    %s28 = sphi 0, %s27
    %s44 = sphi 0, %s28
    %s48 = sphi 0, %s48
    %s50 = sphi 0, %s48
    %s51 = sphi 0, %s50
    %s65 = sphi 0, %s51
    %s69 = sphi 0, %s69
    %s71 = sphi 0, %s69
    %s72 = sphi 0, %s71
    %s86 = sphi 0, %s72
    %s90 = sphi 0, %s90
    %s92 = sphi 0, %s90
    %s93 = sphi 0, %s92
    %s107 = sphi 0, %s93
    %s111 = sphi 0, %s111
    %s113 = sphi 0, %s111
    %s114 = sphi 0, %s113
    %s128 = sphi 0, %s114
    %s134 = sphi 0, %s136
    %s137 = sphi 0, %s134
    %s138 = sphi 0, %s137
    %s154 = sphi 0, %s138
    %s160 = sphi 0, %s162
    %s163 = sphi 0, %s160
    %s164 = sphi 0, %s163
    %s180 = sphi 0, %s164
  $region4: #{fast_arcnn_forward.8} parent=0 // loop_header_branch
    %17 = sbr.rel (%p15) target = $region8
  $region5: #{fast_arcnn_forward.8} parent=0 // loop_body
    %s19 = ssub.s32 %s14, 1
    %s20 = ssub.s32 %s14, 2
    %s21 = sadd.s32 %s14, 1
    %s22 = ssub.s32 %s14, %s21
    %p23 = scmp.eq.s32.totalorder %s22, 0
    %s25 = sadd.s32 %s24, 1
    %s26 = scalar_select %p23, %s24, %s25
    %p29 = pneg %p23
    %p30 = scmp.eq.s32.totalorder %s14, 3
    %p31 = por %p29, %p30
    %p32 = scmp.ne.s32.totalorder %s24, %s27
    %p33 = scmp.eq.s32.totalorder %s14, 0
    %p34 = por %p32, %p33
    %p35 = scmp.ne.s32.totalorder %s24, %s27
    %p36 = scmp.eq.s32.totalorder %s19, 3
    %p37 = por %p35, %p36
    %p38 = scmp.ne.s32.totalorder %s27, %s28
    %p39 = scmp.eq.s32.totalorder %s19, 0
    %p40 = por %p38, %p39
    %p41 = scmp.ne.s32.totalorder %s27, %s28
    %p42 = scmp.eq.s32.totalorder %s20, 3
    %p43 = por %p41, %p42
    %p45 = scmp.ne.s32.totalorder %s28, %s44
    %p46 = scmp.eq.s32.totalorder %s20, 0
    %p47 = por %p45, %p46
    %s49 = sadd.s32 %s48, 1
    %p52 = scmp.eq.s32.totalorder %s14, 3
    %p53 = scmp.ne.s32.totalorder %s48, %s50
    %p54 = scmp.eq.s32.totalorder %s14, 0
    %p55 = por %p53, %p54
    %p56 = scmp.ne.s32.totalorder %s48, %s50
    %p57 = scmp.eq.s32.totalorder %s19, 3
    %p58 = por %p56, %p57
    %p59 = scmp.ne.s32.totalorder %s50, %s51
    %p60 = scmp.eq.s32.totalorder %s19, 0
    %p61 = por %p59, %p60
    %p62 = scmp.ne.s32.totalorder %s50, %s51
    %p63 = scmp.eq.s32.totalorder %s20, 3
    %p64 = por %p62, %p63
    %p66 = scmp.ne.s32.totalorder %s51, %s65
    %p67 = scmp.eq.s32.totalorder %s20, 0
    %p68 = por %p66, %p67
    %s70 = sadd.s32 %s69, 1
    %p73 = scmp.eq.s32.totalorder %s14, 3
    %p74 = scmp.ne.s32.totalorder %s69, %s71
    %p75 = scmp.eq.s32.totalorder %s14, 0
    %p76 = por %p74, %p75
    %p77 = scmp.ne.s32.totalorder %s69, %s71
    %p78 = scmp.eq.s32.totalorder %s19, 3
    %p79 = por %p77, %p78
    %p80 = scmp.ne.s32.totalorder %s71, %s72
    %p81 = scmp.eq.s32.totalorder %s19, 0
    %p82 = por %p80, %p81
    %p83 = scmp.ne.s32.totalorder %s71, %s72
    %p84 = scmp.eq.s32.totalorder %s20, 3
    %p85 = por %p83, %p84
    %p87 = scmp.ne.s32.totalorder %s72, %s86
    %p88 = scmp.eq.s32.totalorder %s20, 0
    %p89 = por %p87, %p88
    %s91 = sadd.s32 %s90, 1
    %p94 = scmp.eq.s32.totalorder %s14, 3
    %p95 = scmp.ne.s32.totalorder %s90, %s92
    %p96 = scmp.eq.s32.totalorder %s14, 0
    %p97 = por %p95, %p96
    %p98 = scmp.ne.s32.totalorder %s90, %s92
    %p99 = scmp.eq.s32.totalorder %s19, 3
    %p100 = por %p98, %p99
    %p101 = scmp.ne.s32.totalorder %s92, %s93
    %p102 = scmp.eq.s32.totalorder %s19, 0
    %p103 = por %p101, %p102
    %p104 = scmp.ne.s32.totalorder %s92, %s93
    %p105 = scmp.eq.s32.totalorder %s20, 3
    %p106 = por %p104, %p105
    %p108 = scmp.ne.s32.totalorder %s93, %s107
    %p109 = scmp.eq.s32.totalorder %s20, 0
    %p110 = por %p108, %p109
    %s112 = sadd.s32 %s111, 1
    %p115 = scmp.eq.s32.totalorder %s14, 3
    %p116 = scmp.ne.s32.totalorder %s111, %s113
    %p117 = scmp.eq.s32.totalorder %s14, 0
    %p118 = por %p116, %p117
    %p119 = scmp.ne.s32.totalorder %s111, %s113
    %p120 = scmp.eq.s32.totalorder %s19, 3
    %p121 = por %p119, %p120
    %p122 = scmp.ne.s32.totalorder %s113, %s114
    %p123 = scmp.eq.s32.totalorder %s19, 0
    %p124 = por %p122, %p123
    %p125 = scmp.ne.s32.totalorder %s113, %s114
    %p126 = scmp.eq.s32.totalorder %s20, 3
    %p127 = por %p125, %p126
    %p129 = scmp.ne.s32.totalorder %s114, %s128
    %p130 = scmp.eq.s32.totalorder %s20, 0
    %p131 = por %p129, %p130
    %s132 = ssub.s32 %s14, %s21
    %p133 = scmp.eq.s32.totalorder %s132, 0
    %s135 = sadd.s32 %s134, 1
    %s136 = scalar_select %p133, %s134, %s135
    %p139 = pneg %p133
    %p140 = scmp.eq.s32.totalorder %s14, 3
    %p141 = por %p139, %p140
    %p142 = scmp.ne.s32.totalorder %s134, %s137
    %p143 = scmp.eq.s32.totalorder %s14, 0
    %p144 = por %p142, %p143
    %p145 = scmp.ne.s32.totalorder %s134, %s137
    %p146 = scmp.eq.s32.totalorder %s19, 3
    %p147 = por %p145, %p146
    %p148 = scmp.ne.s32.totalorder %s137, %s138
    %p149 = scmp.eq.s32.totalorder %s19, 0
    %p150 = por %p148, %p149
    %p151 = scmp.ne.s32.totalorder %s137, %s138
    %p152 = scmp.eq.s32.totalorder %s20, 3
    %p153 = por %p151, %p152
    %p155 = scmp.ne.s32.totalorder %s138, %s154
    %p156 = scmp.eq.s32.totalorder %s20, 0
    %p157 = por %p155, %p156
    %s158 = ssub.s32 %s14, %s21
    %p159 = scmp.eq.s32.totalorder %s158, 0
    %s161 = sadd.s32 %s160, 1
    %s162 = scalar_select %p159, %s160, %s161
    %p165 = pneg %p159
    %p166 = scmp.eq.s32.totalorder %s14, 3
    %p167 = por %p165, %p166
    %p168 = scmp.ne.s32.totalorder %s160, %s163
    %p169 = scmp.eq.s32.totalorder %s14, 0
    %p170 = por %p168, %p169
    %p171 = scmp.ne.s32.totalorder %s160, %s163
    %p172 = scmp.eq.s32.totalorder %s19, 3
    %p173 = por %p171, %p172
    %p174 = scmp.ne.s32.totalorder %s163, %s164
    %p175 = scmp.eq.s32.totalorder %s19, 0
    %p176 = por %p174, %p175
    %p177 = scmp.ne.s32.totalorder %s163, %s164
    %p178 = scmp.eq.s32.totalorder %s20, 3
    %p179 = por %p177, %p178
    %p181 = scmp.ne.s32.totalorder %s164, %s180
    %p182 = scmp.eq.s32.totalorder %s20, 0
    %p183 = por %p181, %p182
    %p184 = scmp.le.s32.totalorder 1, %s14
    %p185 = scmp.lt.s32.totalorder %s14, 5
    %p186 = pnand %p184, %p185
    %p187 = pneg %p186
    // Predicated region
    $region9: #{fast_arcnn_forward.8} parent=5 // pred_check
      _
    $region10: #{fast_arcnn_forward.8} parent=5 // pred_check_branch
      %189 = sbr.rel (%p186) target = $region12
    $region11: #{fast_arcnn_forward.8} parent=5 // pred_region
      %s190 = ssub.s32 %s14, 1
      // Predicated region
      $region13: #{fast_arcnn_forward.8} parent=11 // pred_check
        %p191 = pneg %p61
      $region14: #{fast_arcnn_forward.8} parent=11 // pred_check_branch
        %193 = sbr.rel (%p191) target = $region16
      $region15: #{fast_arcnn_forward.8} parent=11 // pred_region
        _
      $region16: #{fast_arcnn_forward.8} parent=11 // pred_fallthru
        _
      // Predicated region
      $region17: #{fast_arcnn_forward.8} parent=11 // pred_check
        %p194 = pneg %p82
      $region18: #{fast_arcnn_forward.8} parent=11 // pred_check_branch
        %196 = sbr.rel (%p194) target = $region20
      $region19: #{fast_arcnn_forward.8} parent=11 // pred_region
        _
      $region20: #{fast_arcnn_forward.8} parent=11 // pred_fallthru
        _
      // Predicated region
      $region21: #{fast_arcnn_forward.8} parent=11 // pred_check
        %p197 = pneg %p103
      $region22: #{fast_arcnn_forward.8} parent=11 // pred_check_branch
        %199 = sbr.rel (%p197) target = $region24
      $region23: #{fast_arcnn_forward.8} parent=11 // pred_region
        _
      $region24: #{fast_arcnn_forward.8} parent=11 // pred_fallthru
        _
      // Predicated region
      $region25: #{fast_arcnn_forward.8} parent=11 // pred_check
        %p200 = pneg %p124
      $region26: #{fast_arcnn_forward.8} parent=11 // pred_check_branch
        %202 = sbr.rel (%p200) target = $region28
      $region27: #{fast_arcnn_forward.8} parent=11 // pred_region
        _
      $region28: #{fast_arcnn_forward.8} parent=11 // pred_fallthru
        _
    $region12: #{fast_arcnn_forward.8} parent=5 // pred_fallthru
      _
    %p203 = scmp.lt.s32.totalorder %s14, 4
    // Predicated region
    $region29: #{fast_arcnn_forward.8} parent=5 // pred_check
      %p204 = pneg %p203
    $region30: #{fast_arcnn_forward.8} parent=5 // pred_check_branch
      %206 = sbr.rel (%p204) target = $region32
    $region31: #{fast_arcnn_forward.8} parent=5 // pred_region
      // Predicated region
      $region33: #{fast_arcnn_forward.8} parent=31 // pred_check
        %p207 = pneg %p34
      $region34: #{fast_arcnn_forward.8} parent=31 // pred_check_branch
        %209 = sbr.rel (%p207) target = $region36
      $region35: #{fast_arcnn_forward.8} parent=31 // pred_region
        %s210 = smul.u32 4, %s14
        %p211 = scmp.lt.s32.totalorder %s210, 15
        %s212 = scalar_select %p211, %s210, 15
        %s213 = smul.addr %s212, 4
        %s214 = scalar_lea.vmem %s0, %s213
        %s215 = smul.u32 4, %s14
      $region36: #{fast_arcnn_forward.8} parent=31 // pred_fallthru
        _
    $region32: #{fast_arcnn_forward.8} parent=5 // pred_fallthru
      _
    %p216 = scmp.le.s32.totalorder 1, %s14
    %p217 = scmp.lt.s32.totalorder %s14, 5
    %p218 = pnand %p216, %p217
    %p219 = pneg %p218
    // Predicated region
    $region37: #{fast_arcnn_forward.8} parent=5 // pred_check
      _
    $region38: #{fast_arcnn_forward.8} parent=5 // pred_check_branch
      %221 = sbr.rel (%p218) target = $region40
    $region39: #{fast_arcnn_forward.8} parent=5 // pred_region
      %s222 = ssub.s32 %s14, 1
      %s223 = smul.u32 4, %s19
      %p224 = scmp.lt.s32.totalorder %s223, 15
      %s225 = scalar_select %p224, %s223, 15
      %s226 = smul.addr %s225, 4
      %s227 = scalar_lea.vmem %s0, %s226
      %p228 = pneg %p40
      %p229 = pneg %p37
      %p230 = pneg %p61
      %p231 = pneg %p58
      %p232 = pneg %p82
      %p233 = pneg %p79
      %p234 = pneg %p103
      %p235 = pneg %p100
      %p236 = pneg %p124
      %p237 = pneg %p121
      %p238 = pneg %p150
      %p239 = pneg %p147
      %s240 = smul.u32 4, %s19
      %p241 = scmp.lt.s32.totalorder %s240, 15
      %s242 = scalar_select %p241, %s240, 15
      %s243 = smul.addr %s242, 4
      %s244 = scalar_lea.vmem %s5, %s243
      %p245 = pneg %p176
      %p246 = pneg %p173
      %p247 = scmp.lt.s32.totalorder %s19, 3
      %s248 = scalar_select %p247, %s19, 3
      %s249 = smul.addr %s248, 8
      %s250 = scalar_lea.vmem %s6, %s249
      %s251 = smul.u32 4, %s19
      %p252 = scmp.lt.s32.totalorder %s251, 15
      %s253 = scalar_select %p252, %s251, 15
      %s254 = smul.addr %s253, 4
      %s255 = scalar_lea.vmem %s0, %s254
      %s256 = smul.u32 4, %s19
      %s257 = smul.u32 4, %s19
      %p258 = scmp.lt.s32.totalorder %s257, 15
      %s259 = scalar_select %p258, %s257, 15
      %s260 = smul.addr %s259, 4
      %s261 = scalar_lea.vmem %s5, %s260
      %s262 = smul.u32 4, %s19
      %p263 = scmp.lt.s32.totalorder %s19, 3
      %s264 = scalar_select %p263, %s19, 3
      %s265 = smul.addr %s264, 8
      %s266 = scalar_lea.vmem %s6, %s265
      %v268 = vld [vmem:[%s255] sm:$0xf]
      %v269 = vld [vmem:[%s255 + $0x4] sm:$0xf]
      %v270 = vld [vmem:[%s255 + $0x8] sm:$0xf]
      %v271 = vld [vmem:[%s255 + $0xc] sm:$0xf]
      %v272 = vunpack.c.l.bf16 %v268
      %v273 = vunpack.c.l.bf16 %v269
      %v274 = vunpack.c.l.bf16 %v270
      %v275 = vunpack.c.l.bf16 %v271
      %v276 = vld [vmem:[%s1] sm:$0x1]
      %v278 = vlaneseq
      %v279 = vshrl.u32 %v278, 7
      %v280 = vsub.s32 0, %v279
      %v281 = vrot.slane %v276, %v280
      %v283 = vmul.f32 %v272, %v281
      %v284 = vmul.f32 %v273, %v281
      %v285 = vmul.f32 %v274, %v281
      %v286 = vmul.f32 %v275, %v281
      %v287 = vld [vmem:[%s2] sm:$0x1]
      %v289 = vlaneseq
      %v290 = vshrl.u32 %v289, 7
      %v291 = vsub.s32 0, %v290
      %v292 = vrot.slane %v287, %v291
      %v294 = vadd.f32 %v283, %v292
      %v295 = vadd.f32 %v284, %v292
      %v296 = vadd.f32 %v285, %v292
      %v297 = vadd.f32 %v286, %v292
      %s298 = sld [smem:[#allocation2]]
      %vm299 = vcmp.gt.f32.partialorder %v294, 0.0
      %vm300 = vcmp.gt.f32.partialorder %v295, 0.0
      %vm301 = vcmp.gt.f32.partialorder %v296, 0.0
      %vm302 = vcmp.gt.f32.partialorder %v297, 0.0
      %v303 = vstv %s298
      %v304 = vmul.f32 %v303, %v294
      %v305 = vmul.f32 %v303, %v295
      %v306 = vmul.f32 %v303, %v296
      %v307 = vmul.f32 %v303, %v297
      %v308 = vsel %vm299, %v294, %v304
      %v309 = vsel %vm300, %v295, %v305
      %v310 = vsel %vm301, %v296, %v306
      %v311 = vsel %vm302, %v297, %v307
      %v312 = vpack.c.bf16 %v309, %v308
      %v313 = vpack.c.bf16 %v311, %v310
      %v314 = vld [vmem:[%s4] sm:$0xf]
      %v315 = vld [vmem:[%s4 + $0x4] sm:$0xf]
      %v316 = vld [vmem:[%s4 + $0x8] sm:$0xf]
      %v317 = vld [vmem:[%s4 + $0xc] sm:$0xf]
      %v318 = vld [vmem:[%s4 + $0x10] sm:$0xf]
      %v319 = vld [vmem:[%s4 + $0x14] sm:$0xf]
      %v320 = vld [vmem:[%s4 + $0x18] sm:$0xf]
      %v321 = vld [vmem:[%s4 + $0x1c] sm:$0xf]
      %v322 = vld [vmem:[%s4 + $0x20] sm:$0xf]
      %v323 = vld [vmem:[%s4 + $0x24] sm:$0xf]
      %v324 = vld [vmem:[%s4 + $0x28] sm:$0xf]
      %v325 = vld [vmem:[%s4 + $0x2c] sm:$0xf]
      %v326 = vld [vmem:[%s4 + $0x30] sm:$0xf]
      %v327 = vld [vmem:[%s4 + $0x34] sm:$0xf]
      %v328 = vld [vmem:[%s4 + $0x38] sm:$0xf]
      %v329 = vld [vmem:[%s4 + $0x3c] sm:$0xf]
      %v346 = vunpack.c.l.b16 %v314
      %v347 = vunpack.c.l.b16 %v315
      %v348 = vunpack.c.l.b16 %v316
      %v349 = vunpack.c.l.b16 %v317
      %v350 = vunpack.c.l.b16 %v318
      %v351 = vunpack.c.l.b16 %v319
      %v352 = vunpack.c.l.b16 %v320
      %v353 = vunpack.c.l.b16 %v321
      %v354 = vunpack.c.l.b16 %v322
      %v355 = vunpack.c.l.b16 %v323
      %v356 = vunpack.c.l.b16 %v324
      %v357 = vunpack.c.l.b16 %v325
      %v358 = vunpack.c.l.b16 %v326
      %v359 = vunpack.c.l.b16 %v327
      %v360 = vunpack.c.l.b16 %v328
      %v361 = vunpack.c.l.b16 %v329
      %v362 = vpack.c.b16 %v347, %v346
      %v363 = vpack.c.b16 %v349, %v348
      %v364 = vpack.c.b16 %v351, %v350
      %v365 = vpack.c.b16 %v353, %v352
      %v366 = vpack.c.b16 %v355, %v354
      %v367 = vpack.c.b16 %v357, %v356
      %v368 = vpack.c.b16 %v359, %v358
      %v369 = vpack.c.b16 %v361, %v360
      %378 = vmatprep.subr.bf16.mxu0 0
      %379 = vmatpush1.bf16.msra.mxu0 %v362
      %380 = vmatprep.subr.bf16.mxu0 0
      %381 = vmatpush1.bf16.msra.mxu0 %v363
      %382 = vmatprep.subr.bf16.mxu0 0
      %383 = vmatpush1.bf16.msra.mxu0 %v364
      %384 = vmatprep.subr.bf16.mxu0 0
      %385 = vmatpush1.bf16.msra.mxu0 %v365
      %386 = vmatprep.subr.bf16.mxu0 0
      %387 = vmatpush1.bf16.msra.mxu0 %v366
      %388 = vmatprep.subr.bf16.mxu0 0
      %389 = vmatpush1.bf16.msra.mxu0 %v367
      %390 = vmatprep.subr.bf16.mxu0 0
      %391 = vmatpush1.bf16.msra.mxu0 %v368
      %392 = vmatprep.subr.bf16.mxu0 0
      %393 = vmatpush1.bf16.msra.mxu0 %v369
      %394 = vmatprep.subr.bf16.mxu0 0
      %395 = vmatpush1.bf16.msra.mxu0 0
      %396 = vmatprep.subr.bf16.mxu0 0
      %397 = vmatpush1.bf16.msra.mxu0 0
      %398 = vmatprep.subr.bf16.mxu0 0
      %399 = vmatpush1.bf16.msra.mxu0 0
      %400 = vmatprep.subr.bf16.mxu0 0
      %401 = vmatpush1.bf16.msra.mxu0 0
      %402 = vmatprep.subr.bf16.mxu0 0
      %403 = vmatpush1.bf16.msra.mxu0 0
      %404 = vmatprep.subr.bf16.mxu0 0
      %405 = vmatpush1.bf16.msra.mxu0 0
      %406 = vmatprep.subr.bf16.mxu0 0
      %407 = vmatpush1.bf16.msra.mxu0 0
      %408 = vmatprep.subr.bf16.mxu0 0
      %409 = vmatpush1.bf16.msra.mxu0 0
      %410 = vmatprep.mubr.bf16.mxu0 0
      %411 = vmatmul.mubr.bf16.gmra.mrb[0].mxu0 %v312
      %v412 = vpop.f32.mrb[0].mxu0
      %v413 = vadd.f32 0.0, %v412
      %v414 = vpop.f32.mrb[0].mxu0
      %v415 = vpop.f32.mrb[0].mxu0
      %v416 = vadd.f32 0.0, %v415
      %v417 = vpop.f32.mrb[0].mxu0
      %418 = vmatprep.mubr.bf16.mxu0 0
      %419 = vmatmul.mubr.bf16.gmra.mrb[0].mxu0 %v313
      %v420 = vpop.f32.mrb[0].mxu0
      %v421 = vadd.f32 0.0, %v420
      %v422 = vpop.f32.mrb[0].mxu0
      %v423 = vpop.f32.mrb[0].mxu0
      %v424 = vadd.f32 0.0, %v423
      %v425 = vpop.f32.mrb[0].mxu0
      %426 = vdwg.mxu0
      %v427 = vadd.f32 %v413, %v416
      %v428 = vadd.f32 %v427, %v421
      %v429 = vadd.f32 %v428, %v424
      %v430 = vrot.slane %v429, 4
      %v431 = vadd.f32 %v429, %v430
      %v432 = vrot.slane %v431, 2
      %v433 = vadd.f32 %v431, %v432
      %v434 = vrot.slane %v433, 1
      %v435 = vadd.f32 %v433, %v434
      %436 = vst [vmem:[%s266] sm:$0x1] %v435
      %v437 = vmul.f32 %v413, %v413
      %v438 = vmul.f32 %v416, %v416
      %v439 = vmul.f32 %v421, %v421
      %v440 = vmul.f32 %v424, %v424
      %v441 = vadd.f32 %v437, %v438
      %v442 = vadd.f32 %v441, %v439
      %v443 = vadd.f32 %v442, %v440
      %v444 = vrot.slane %v443, 4
      %v445 = vadd.f32 %v443, %v444
      %v446 = vrot.slane %v445, 2
      %v447 = vadd.f32 %v445, %v446
      %v448 = vrot.slane %v447, 1
      %v449 = vadd.f32 %v447, %v448
      %450 = vst [vmem:[%s266 + $0x1] sm:$0x1] %v449
      %v451 = vpack.c.bf16 %v416, %v413
      %v452 = vpack.c.bf16 %v424, %v421
      %v455 = vunpack.c.l.b16 %v451
      %v456 = vunpack.c.h.b16 %v451
      %v457 = vunpack.c.l.b16 %v452
      %v458 = vunpack.c.h.b16 %v452
      %v459 = vpack.c.b16 %v455, %v455
      %v460 = vpack.c.b16 %v456, %v456
      %v461 = vpack.c.b16 %v457, %v457
      %v462 = vpack.c.b16 %v458, %v458
      %467 = vst [vmem:[%s261] sm:$0xf] %v459
      %468 = vst [vmem:[%s261 + $0x4] sm:$0xf] %v460
      %469 = vst [vmem:[%s261 + $0x8] sm:$0xf] %v461
      %470 = vst [vmem:[%s261 + $0xc] sm:$0xf] %v462
      %s471 = smul.u32 4, %s19
      %p472 = scmp.lt.s32.totalorder %s471, 15
      %s473 = scalar_select %p472, %s471, 15
      %s474 = smul.addr %s473, 4
      %s475 = scalar_lea.vmem %s5, %s474
      %p476 = scmp.lt.s32.totalorder %s19, 3
      %s477 = scalar_select %p476, %s19, 3
      %s478 = smul.addr %s477, 8
      %s479 = scalar_lea.vmem %s6, %s478
      // Predicated region
      $region41: #{fast_arcnn_forward.8} parent=39 // pred_check
        %p480 = pneg %p147
      $region42: #{fast_arcnn_forward.8} parent=39 // pred_check_branch
        %482 = sbr.rel (%p480) target = $region44
      $region43: #{fast_arcnn_forward.8} parent=39 // pred_region
        %s483 = smul.u32 4, %s19
      $region44: #{fast_arcnn_forward.8} parent=39 // pred_fallthru
        _
      // Predicated region
      $region45: #{fast_arcnn_forward.8} parent=39 // pred_check
        %p484 = pneg %p173
      $region46: #{fast_arcnn_forward.8} parent=39 // pred_check_branch
        %486 = sbr.rel (%p484) target = $region48
      $region47: #{fast_arcnn_forward.8} parent=39 // pred_region
        _
      $region48: #{fast_arcnn_forward.8} parent=39 // pred_fallthru
        _
    $region40: #{fast_arcnn_forward.8} parent=5 // pred_fallthru
      _
    %p487 = scmp.le.s32.totalorder 2, %s14
    // Predicated region
    $region49: #{fast_arcnn_forward.8} parent=5 // pred_check
      %p488 = pneg %p487
    $region50: #{fast_arcnn_forward.8} parent=5 // pred_check_branch
      %490 = sbr.rel (%p488) target = $region52
    $region51: #{fast_arcnn_forward.8} parent=5 // pred_region
      %s491 = ssub.s32 %s14, 2
      // Predicated region
      $region53: #{fast_arcnn_forward.8} parent=51 // pred_check
        %p492 = pneg %p153
      $region54: #{fast_arcnn_forward.8} parent=51 // pred_check_branch
        %494 = sbr.rel (%p492) target = $region56
      $region55: #{fast_arcnn_forward.8} parent=51 // pred_region
        %s495 = smul.u32 4, %s20
        %p496 = scmp.lt.s32.totalorder %s495, 15
        %s497 = scalar_select %p496, %s495, 15
        %s498 = smul.addr %s497, 4
        %s499 = scalar_lea.vmem %s5, %s498
      $region56: #{fast_arcnn_forward.8} parent=51 // pred_fallthru
        _
      // Predicated region
      $region57: #{fast_arcnn_forward.8} parent=51 // pred_check
        %p500 = pneg %p179
      $region58: #{fast_arcnn_forward.8} parent=51 // pred_check_branch
        %502 = sbr.rel (%p500) target = $region60
      $region59: #{fast_arcnn_forward.8} parent=51 // pred_region
        %p503 = scmp.lt.s32.totalorder %s20, 3
        %s504 = scalar_select %p503, %s20, 3
        %s505 = smul.addr %s504, 8
        %s506 = scalar_lea.vmem %s6, %s505
      $region60: #{fast_arcnn_forward.8} parent=51 // pred_fallthru
        _
    $region52: #{fast_arcnn_forward.8} parent=5 // pred_fallthru
      _
  $region6: #{fast_arcnn_forward.8} parent=0 // loop_footer
    %s18 = sadd.s32 1, %s14
  $region7: #{fast_arcnn_forward.8} parent=0 // loop_footer_branch
    %13 = sbr.rel target = $region3
  $region8: #{fast_arcnn_forward.8} parent=0 // loop_exit
    _

// kernel: fast_arcnn_forward.10
$region0: #{fast_arcnn_forward.10}
  #allocation0 [shape = 'u32[]', space=smem, size = 0x4, offset = 0x4, fixed_abs, tag = 'smem constant byte address 0x4 - core index']
  #allocation1 [shape = 'u32[144,128]{1,0:T(1,128)}', space=vmem, size = 0x12000, scoped, tag = 'internal scratch']
  %s0 = inlined_call_operand.vmem [shape: bf16[128,1568], index: 0, kind: input, shape index: {}]
  %s1 = inlined_call_operand.vmem [shape: bf16[1568,128], index: 1, kind: input, shape index: {}]
  %s2 = inlined_call_operand.vmem [shape: bf16[128,128], index: 2, kind: output, shape index: {0}]
  %s3 = inlined_call_operand.vmem [shape: f32[32,128], index: 3, kind: output, shape index: {1}]
  %4 = xla_tuple %s2, %s3
  %s5 = sld [smem:[#allocation0]]
  $region49: #{fast_arcnn_forward.10} parent=0
    _
  %s7 = ssub.s32 1, %s5
  %s8 = scalar_select 0, %s7, %s5
  loop: start=0, step=1, limit=6
  $region2: #{fast_arcnn_forward.10} parent=0 // loop_pre_header
    _
  $region3: #{fast_arcnn_forward.10} parent=0 // loop_header
    %s10 = sphi 0, %s14
    %p11 = scmp.ge.s32.totalorder %s10, 6
    %s20 = sphi 0, %s22
    %s23 = sphi 0, %s20
    %s24 = sphi 0, %s23
    %s40 = sphi 0, %s24
    %s44 = sphi 0, %s44
    %s46 = sphi 0, %s44
    %s47 = sphi 0, %s46
    %s61 = sphi 0, %s47
    %s67 = sphi 0, %s69
    %s70 = sphi 0, %s67
    %s71 = sphi 0, %s70
    %s87 = sphi 0, %s71
    %s93 = sphi 0, %s95
    %s96 = sphi 0, %s93
    %s97 = sphi 0, %s96
    %s113 = sphi 0, %s97
  $region4: #{fast_arcnn_forward.10} parent=0 // loop_header_branch
    %13 = sbr.rel (%p11) target = $region8
  $region5: #{fast_arcnn_forward.10} parent=0 // loop_body
    %s15 = ssub.s32 %s10, 1
    %s16 = ssub.s32 %s10, 2
    %s17 = sadd.s32 %s10, 1
    %s18 = ssub.s32 %s10, %s17
    %p19 = scmp.eq.s32.totalorder %s18, 0
    %s21 = sadd.s32 %s20, 1
    %s22 = scalar_select %p19, %s20, %s21
    %p25 = pneg %p19
    %p26 = scmp.eq.s32.totalorder %s10, 3
    %p27 = por %p25, %p26
    %p28 = scmp.ne.s32.totalorder %s20, %s23
    %p29 = scmp.eq.s32.totalorder %s10, 0
    %p30 = por %p28, %p29
    %p31 = scmp.ne.s32.totalorder %s20, %s23
    %p32 = scmp.eq.s32.totalorder %s15, 3
    %p33 = por %p31, %p32
    %p34 = scmp.ne.s32.totalorder %s23, %s24
    %p35 = scmp.eq.s32.totalorder %s15, 0
    %p36 = por %p34, %p35
    %p37 = scmp.ne.s32.totalorder %s23, %s24
    %p38 = scmp.eq.s32.totalorder %s16, 3
    %p39 = por %p37, %p38
    %p41 = scmp.ne.s32.totalorder %s24, %s40
    %p42 = scmp.eq.s32.totalorder %s16, 0
    %p43 = por %p41, %p42
    %s45 = sadd.s32 %s44, 1
    %p48 = scmp.eq.s32.totalorder %s10, 3
    %p49 = scmp.ne.s32.totalorder %s44, %s46
    %p50 = scmp.eq.s32.totalorder %s10, 0
    %p51 = por %p49, %p50
    %p52 = scmp.ne.s32.totalorder %s44, %s46
    %p53 = scmp.eq.s32.totalorder %s15, 3
    %p54 = por %p52, %p53
    %p55 = scmp.ne.s32.totalorder %s46, %s47
    %p56 = scmp.eq.s32.totalorder %s15, 0
    %p57 = por %p55, %p56
    %p58 = scmp.ne.s32.totalorder %s46, %s47
    %p59 = scmp.eq.s32.totalorder %s16, 3
    %p60 = por %p58, %p59
    %p62 = scmp.ne.s32.totalorder %s47, %s61
    %p63 = scmp.eq.s32.totalorder %s16, 0
    %p64 = por %p62, %p63
    %s65 = ssub.s32 %s10, %s17
    %p66 = scmp.eq.s32.totalorder %s65, 0
    %s68 = sadd.s32 %s67, 1
    %s69 = scalar_select %p66, %s67, %s68
    %p72 = pneg %p66
    %p73 = scmp.eq.s32.totalorder %s10, 3
    %p74 = por %p72, %p73
    %p75 = scmp.ne.s32.totalorder %s67, %s70
    %p76 = scmp.eq.s32.totalorder %s10, 0
    %p77 = por %p75, %p76
    %p78 = scmp.ne.s32.totalorder %s67, %s70
    %p79 = scmp.eq.s32.totalorder %s15, 3
    %p80 = por %p78, %p79
    %p81 = scmp.ne.s32.totalorder %s70, %s71
    %p82 = scmp.eq.s32.totalorder %s15, 0
    %p83 = por %p81, %p82
    %p84 = scmp.ne.s32.totalorder %s70, %s71
    %p85 = scmp.eq.s32.totalorder %s16, 3
    %p86 = por %p84, %p85
    %p88 = scmp.ne.s32.totalorder %s71, %s87
    %p89 = scmp.eq.s32.totalorder %s16, 0
    %p90 = por %p88, %p89
    %s91 = ssub.s32 %s10, %s17
    %p92 = scmp.eq.s32.totalorder %s91, 0
    %s94 = sadd.s32 %s93, 1
    %s95 = scalar_select %p92, %s93, %s94
    %p98 = pneg %p92
    %p99 = scmp.eq.s32.totalorder %s10, 3
    %p100 = por %p98, %p99
    %p101 = scmp.ne.s32.totalorder %s93, %s96
    %p102 = scmp.eq.s32.totalorder %s10, 0
    %p103 = por %p101, %p102
    %p104 = scmp.ne.s32.totalorder %s93, %s96
    %p105 = scmp.eq.s32.totalorder %s15, 3
    %p106 = por %p104, %p105
    %p107 = scmp.ne.s32.totalorder %s96, %s97
    %p108 = scmp.eq.s32.totalorder %s15, 0
    %p109 = por %p107, %p108
    %p110 = scmp.ne.s32.totalorder %s96, %s97
    %p111 = scmp.eq.s32.totalorder %s16, 3
    %p112 = por %p110, %p111
    %p114 = scmp.ne.s32.totalorder %s97, %s113
    %p115 = scmp.eq.s32.totalorder %s16, 0
    %p116 = por %p114, %p115
    %p117 = scmp.le.s32.totalorder 1, %s10
    %p118 = scmp.lt.s32.totalorder %s10, 5
    %p119 = pnand %p117, %p118
    %p120 = pneg %p119
    // Predicated region
    $region9: #{fast_arcnn_forward.10} parent=5 // pred_check
      _
    $region10: #{fast_arcnn_forward.10} parent=5 // pred_check_branch
      %122 = sbr.rel (%p119) target = $region12
    $region11: #{fast_arcnn_forward.10} parent=5 // pred_region
      %s123 = ssub.s32 %s10, 1
      // Predicated region
      $region13: #{fast_arcnn_forward.10} parent=11 // pred_check
        %p124 = pneg %p57
      $region14: #{fast_arcnn_forward.10} parent=11 // pred_check_branch
        %126 = sbr.rel (%p124) target = $region16
      $region15: #{fast_arcnn_forward.10} parent=11 // pred_region
        _
      $region16: #{fast_arcnn_forward.10} parent=11 // pred_fallthru
        _
    $region12: #{fast_arcnn_forward.10} parent=5 // pred_fallthru
      _
    %p127 = scmp.lt.s32.totalorder %s10, 4
    // Predicated region
    $region17: #{fast_arcnn_forward.10} parent=5 // pred_check
      %p128 = pneg %p127
    $region18: #{fast_arcnn_forward.10} parent=5 // pred_check_branch
      %130 = sbr.rel (%p128) target = $region20
    $region19: #{fast_arcnn_forward.10} parent=5 // pred_region
      // Predicated region
      $region21: #{fast_arcnn_forward.10} parent=19 // pred_check
        %p131 = pneg %p30
      $region22: #{fast_arcnn_forward.10} parent=19 // pred_check_branch
        %133 = sbr.rel (%p131) target = $region24
      $region23: #{fast_arcnn_forward.10} parent=19 // pred_region
        %s134 = smul.u32 4, %s10
        %p135 = scmp.lt.s32.totalorder %s134, 15
        %s136 = scalar_select %p135, %s134, 15
        %s137 = smul.addr %s136, 13
        %s138 = smul.addr %s137, 4
        %s139 = scalar_lea.vmem %s0, %s138
        %s140 = smul.u32 4, %s10
      $region24: #{fast_arcnn_forward.10} parent=19 // pred_fallthru
        _
    $region20: #{fast_arcnn_forward.10} parent=5 // pred_fallthru
      _
    %p141 = scmp.le.s32.totalorder 1, %s10
    %p142 = scmp.lt.s32.totalorder %s10, 5
    %p143 = pnand %p141, %p142
    %p144 = pneg %p143
    // Predicated region
    $region25: #{fast_arcnn_forward.10} parent=5 // pred_check
      _
    $region26: #{fast_arcnn_forward.10} parent=5 // pred_check_branch
      %146 = sbr.rel (%p143) target = $region28
    $region27: #{fast_arcnn_forward.10} parent=5 // pred_region
      %s147 = ssub.s32 %s10, 1
      %s148 = smul.u32 4, %s15
      %p149 = scmp.lt.s32.totalorder %s148, 15
      %s150 = scalar_select %p149, %s148, 15
      %s151 = smul.addr %s150, 13
      %s152 = smul.addr %s151, 4
      %s153 = scalar_lea.vmem %s0, %s152
      %p154 = pneg %p36
      %p155 = pneg %p33
      %p156 = pneg %p57
      %p157 = pneg %p54
      %p158 = pneg %p83
      %p159 = pneg %p80
      %s160 = smul.u32 4, %s15
      %p161 = scmp.lt.s32.totalorder %s160, 15
      %s162 = scalar_select %p161, %s160, 15
      %s163 = smul.addr %s162, 4
      %s164 = scalar_lea.vmem %s2, %s163
      %p165 = pneg %p109
      %p166 = pneg %p106
      %p167 = scmp.lt.s32.totalorder %s15, 3
      %s168 = scalar_select %p167, %s15, 3
      %s169 = smul.addr %s168, 8
      %s170 = scalar_lea.vmem %s3, %s169
      %s171 = smul.u32 4, %s15
      %p172 = scmp.lt.s32.totalorder %s171, 15
      %s173 = scalar_select %p172, %s171, 15
      %s174 = smul.addr %s173, 13
      %s175 = smul.addr %s174, 4
      %s176 = scalar_lea.vmem %s0, %s175
      %s177 = smul.u32 4, %s15
      %s178 = smul.u32 4, %s15
      %p179 = scmp.lt.s32.totalorder %s178, 15
      %s180 = scalar_select %p179, %s178, 15
      %s181 = smul.addr %s180, 4
      %s182 = scalar_lea.vmem %s2, %s181
      %s183 = smul.u32 4, %s15
      %p184 = scmp.lt.s32.totalorder %s15, 3
      %s185 = scalar_select %p184, %s15, 3
      %s186 = smul.addr %s185, 8
      %s187 = scalar_lea.vmem %s3, %s186
      %v189 = vld [vmem:[%s176] sm:$0xff]
      %v190 = vld [vmem:[%s176 + $0x8] sm:$0xff]
      %v191 = vld [vmem:[%s176 + $0x10] sm:$0xff]
      %v192 = vld [vmem:[%s176 + $0x18] sm:$0xff]
      %v193 = vld [vmem:[%s176 + $0x20] sm:$0xff]
      %v194 = vld [vmem:[%s176 + $0x28] sm:$0xff]
      %v195 = vld [vmem:[%s176 + $0x30] sm:$0xf]
      %v196 = vld [vmem:[%s176 + $0x34] sm:$0xff]
      %v197 = vld [vmem:[%s176 + $0x3c] sm:$0xff]
      %v198 = vld [vmem:[%s176 + $0x44] sm:$0xff]
      %v199 = vld [vmem:[%s176 + $0x4c] sm:$0xff]
      %v200 = vld [vmem:[%s176 + $0x54] sm:$0xff]
      %v201 = vld [vmem:[%s176 + $0x5c] sm:$0xff]
      %v202 = vld [vmem:[%s176 + $0x64] sm:$0xf]
      %v203 = vld [vmem:[%s176 + $0x68] sm:$0xff]
      %v204 = vld [vmem:[%s176 + $0x70] sm:$0xff]
      %v205 = vld [vmem:[%s176 + $0x78] sm:$0xff]
      %v206 = vld [vmem:[%s176 + $0x80] sm:$0xff]
      %v207 = vld [vmem:[%s176 + $0x88] sm:$0xff]
      %v208 = vld [vmem:[%s176 + $0x90] sm:$0xff]
      %v209 = vld [vmem:[%s176 + $0x98] sm:$0xf]
      %v210 = vld [vmem:[%s176 + $0x9c] sm:$0xff]
      %v211 = vld [vmem:[%s176 + $0xa4] sm:$0xff]
      %v212 = vld [vmem:[%s176 + $0xac] sm:$0xff]
      %v213 = vld [vmem:[%s176 + $0xb4] sm:$0xff]
      %v214 = vld [vmem:[%s176 + $0xbc] sm:$0xff]
      %v215 = vld [vmem:[%s176 + $0xc4] sm:$0xff]
      %v216 = vld [vmem:[%s176 + $0xcc] sm:$0xf]
      %v217 = vld [vmem:[%s1] sm:$0xf]
      %v218 = vld [vmem:[%s1 + $0x4] sm:$0xf]
      %v219 = vld [vmem:[%s1 + $0x8] sm:$0xf]
      %v220 = vld [vmem:[%s1 + $0xc] sm:$0xf]
      %v221 = vld [vmem:[%s1 + $0x10] sm:$0xf]
      %v222 = vld [vmem:[%s1 + $0x14] sm:$0xf]
      %v223 = vld [vmem:[%s1 + $0x18] sm:$0xf]
      %v224 = vld [vmem:[%s1 + $0x1c] sm:$0xf]
      %v225 = vld [vmem:[%s1 + $0x20] sm:$0xf]
      %v226 = vld [vmem:[%s1 + $0x24] sm:$0xf]
      %v227 = vld [vmem:[%s1 + $0x28] sm:$0xf]
      %v228 = vld [vmem:[%s1 + $0x2c] sm:$0xf]
      %v229 = vld [vmem:[%s1 + $0x30] sm:$0xf]
      %v230 = vld [vmem:[%s1 + $0x34] sm:$0xf]
      %v231 = vld [vmem:[%s1 + $0x38] sm:$0xf]
      %v232 = vld [vmem:[%s1 + $0x3c] sm:$0xf]
      %v233 = vld [vmem:[%s1 + $0x40] sm:$0xf]
      %v234 = vld [vmem:[%s1 + $0x44] sm:$0xf]
      %v235 = vld [vmem:[%s1 + $0x48] sm:$0xf]
      %v236 = vld [vmem:[%s1 + $0x4c] sm:$0xf]
      %v237 = vld [vmem:[%s1 + $0x50] sm:$0xf]
      %v238 = vld [vmem:[%s1 + $0x54] sm:$0xf]
      %v239 = vld [vmem:[%s1 + $0x58] sm:$0xf]
      %v240 = vld [vmem:[%s1 + $0x5c] sm:$0xf]
      %v241 = vld [vmem:[%s1 + $0x60] sm:$0xf]
      %v242 = vld [vmem:[%s1 + $0x64] sm:$0xf]
      %v243 = vld [vmem:[%s1 + $0x68] sm:$0xf]
      %v244 = vld [vmem:[%s1 + $0x6c] sm:$0xf]
      %v245 = vld [vmem:[%s1 + $0x70] sm:$0xf]
      %v246 = vld [vmem:[%s1 + $0x74] sm:$0xf]
      %v247 = vld [vmem:[%s1 + $0x78] sm:$0xf]
      %v248 = vld [vmem:[%s1 + $0x7c] sm:$0xf]
      %v249 = vld [vmem:[%s1 + $0x80] sm:$0xf]
      %v250 = vld [vmem:[%s1 + $0x84] sm:$0xf]
      %v251 = vld [vmem:[%s1 + $0x88] sm:$0xf]
      %v252 = vld [vmem:[%s1 + $0x8c] sm:$0xf]
      %v253 = vld [vmem:[%s1 + $0x90] sm:$0xf]
      %v254 = vld [vmem:[%s1 + $0x94] sm:$0xf]
      %v255 = vld [vmem:[%s1 + $0x98] sm:$0xf]
      %v256 = vld [vmem:[%s1 + $0x9c] sm:$0xf]
      %v257 = vld [vmem:[%s1 + $0xa0] sm:$0xf]
      %v258 = vld [vmem:[%s1 + $0xa4] sm:$0xf]
      %v259 = vld [vmem:[%s1 + $0xa8] sm:$0xf]
      %v260 = vld [vmem:[%s1 + $0xac] sm:$0xf]
      %v261 = vld [vmem:[%s1 + $0xb0] sm:$0xf]
      %v262 = vld [vmem:[%s1 + $0xb4] sm:$0xf]
      %v263 = vld [vmem:[%s1 + $0xb8] sm:$0xf]
      %v264 = vld [vmem:[%s1 + $0xbc] sm:$0xf]
      %v265 = vld [vmem:[%s1 + $0xc0] sm:$0xf]
      %v266 = vld [vmem:[%s1 + $0xc4] sm:$0xf]
      %v267 = vld [vmem:[%s1 + $0xc8] sm:$0xf]
      %v268 = vld [vmem:[%s1 + $0xcc] sm:$0xf]
      %v269 = vld [vmem:[%s1 + $0xd0] sm:$0xf]
      %v270 = vld [vmem:[%s1 + $0xd4] sm:$0xf]
      %v271 = vld [vmem:[%s1 + $0xd8] sm:$0xf]
      %v272 = vld [vmem:[%s1 + $0xdc] sm:$0xf]
      %v273 = vld [vmem:[%s1 + $0xe0] sm:$0xf]
      %v274 = vld [vmem:[%s1 + $0xe4] sm:$0xf]
      %v275 = vld [vmem:[%s1 + $0xe8] sm:$0xf]
      %v276 = vld [vmem:[%s1 + $0xec] sm:$0xf]
      %v277 = vld [vmem:[%s1 + $0xf0] sm:$0xf]
      %v278 = vld [vmem:[%s1 + $0xf4] sm:$0xf]
      %v279 = vld [vmem:[%s1 + $0xf8] sm:$0xf]
      %v280 = vld [vmem:[%s1 + $0xfc] sm:$0xf]
      %v281 = vld [vmem:[%s1 + $0x100] sm:$0xf]
      %v282 = vld [vmem:[%s1 + $0x104] sm:$0xf]
      %v283 = vld [vmem:[%s1 + $0x108] sm:$0xf]
      %v284 = vld [vmem:[%s1 + $0x10c] sm:$0xf]
      %v285 = vld [vmem:[%s1 + $0x110] sm:$0xf]
      %v286 = vld [vmem:[%s1 + $0x114] sm:$0xf]
      %v287 = vld [vmem:[%s1 + $0x118] sm:$0xf]
      %v288 = vld [vmem:[%s1 + $0x11c] sm:$0xf]
      %v289 = vld [vmem:[%s1 + $0x120] sm:$0xf]
      %v290 = vld [vmem:[%s1 + $0x124] sm:$0xf]
      %v291 = vld [vmem:[%s1 + $0x128] sm:$0xf]
      %v292 = vld [vmem:[%s1 + $0x12c] sm:$0xf]
      %v293 = vld [vmem:[%s1 + $0x130] sm:$0xf]
      %v294 = vld [vmem:[%s1 + $0x134] sm:$0xf]
      %v295 = vld [vmem:[%s1 + $0x138] sm:$0xf]
      %v296 = vld [vmem:[%s1 + $0x13c] sm:$0xf]
      %v297 = vld [vmem:[%s1 + $0x140] sm:$0xf]
      %v298 = vld [vmem:[%s1 + $0x144] sm:$0xf]
      %v299 = vld [vmem:[%s1 + $0x148] sm:$0xf]
      %v300 = vld [vmem:[%s1 + $0x14c] sm:$0xf]
      %v301 = vld [vmem:[%s1 + $0x150] sm:$0xf]
      %v302 = vld [vmem:[%s1 + $0x154] sm:$0xf]
      %v303 = vld [vmem:[%s1 + $0x158] sm:$0xf]
      %v304 = vld [vmem:[%s1 + $0x15c] sm:$0xf]
      %v305 = vld [vmem:[%s1 + $0x160] sm:$0xf]
      %v306 = vld [vmem:[%s1 + $0x164] sm:$0xf]
      %v307 = vld [vmem:[%s1 + $0x168] sm:$0xf]
      %v308 = vld [vmem:[%s1 + $0x16c] sm:$0xf]
      %v309 = vld [vmem:[%s1 + $0x170] sm:$0xf]
      %v310 = vld [vmem:[%s1 + $0x174] sm:$0xf]
      %v311 = vld [vmem:[%s1 + $0x178] sm:$0xf]
      %v312 = vld [vmem:[%s1 + $0x17c] sm:$0xf]
      %v313 = vld [vmem:[%s1 + $0x180] sm:$0xf]
      %v314 = vld [vmem:[%s1 + $0x184] sm:$0xf]
      %v315 = vld [vmem:[%s1 + $0x188] sm:$0xf]
      %v316 = vld [vmem:[%s1 + $0x18c] sm:$0xf]
      %v317 = vld [vmem:[%s1 + $0x190] sm:$0xf]
      %v318 = vld [vmem:[%s1 + $0x194] sm:$0xf]
      %v319 = vld [vmem:[%s1 + $0x198] sm:$0xf]
      %v320 = vld [vmem:[%s1 + $0x19c] sm:$0xf]
      %v321 = vld [vmem:[%s1 + $0x1a0] sm:$0xf]
      %v322 = vld [vmem:[%s1 + $0x1a4] sm:$0xf]
      %v323 = vld [vmem:[%s1 + $0x1a8] sm:$0xf]
      %v324 = vld [vmem:[%s1 + $0x1ac] sm:$0xf]
      %v325 = vld [vmem:[%s1 + $0x1b0] sm:$0xf]
      %v326 = vld [vmem:[%s1 + $0x1b4] sm:$0xf]
      %v327 = vld [vmem:[%s1 + $0x1b8] sm:$0xf]
      %v328 = vld [vmem:[%s1 + $0x1bc] sm:$0xf]
      %v329 = vld [vmem:[%s1 + $0x1c0] sm:$0xf]
      %v330 = vld [vmem:[%s1 + $0x1c4] sm:$0xf]
      %v331 = vld [vmem:[%s1 + $0x1c8] sm:$0xf]
      %v332 = vld [vmem:[%s1 + $0x1cc] sm:$0xf]
      %v333 = vld [vmem:[%s1 + $0x1d0] sm:$0xf]
      %v334 = vld [vmem:[%s1 + $0x1d4] sm:$0xf]
      %v335 = vld [vmem:[%s1 + $0x1d8] sm:$0xf]
      %v336 = vld [vmem:[%s1 + $0x1dc] sm:$0xf]
      %v337 = vld [vmem:[%s1 + $0x1e0] sm:$0xf]
      %v338 = vld [vmem:[%s1 + $0x1e4] sm:$0xf]
      %v339 = vld [vmem:[%s1 + $0x1e8] sm:$0xf]
      %v340 = vld [vmem:[%s1 + $0x1ec] sm:$0xf]
      %v341 = vld [vmem:[%s1 + $0x1f0] sm:$0xf]
      %v342 = vld [vmem:[%s1 + $0x1f4] sm:$0xf]
      %v343 = vld [vmem:[%s1 + $0x1f8] sm:$0xf]
      %v344 = vld [vmem:[%s1 + $0x1fc] sm:$0xf]
      %v345 = vld [vmem:[%s1 + $0x200] sm:$0xf]
      %v346 = vld [vmem:[%s1 + $0x204] sm:$0xf]
      %v347 = vld [vmem:[%s1 + $0x208] sm:$0xf]
      %v348 = vld [vmem:[%s1 + $0x20c] sm:$0xf]
      %v349 = vld [vmem:[%s1 + $0x210] sm:$0xf]
      %v350 = vld [vmem:[%s1 + $0x214] sm:$0xf]
      %v351 = vld [vmem:[%s1 + $0x218] sm:$0xf]
      %v352 = vld [vmem:[%s1 + $0x21c] sm:$0xf]
      %v353 = vld [vmem:[%s1 + $0x220] sm:$0xf]
      %v354 = vld [vmem:[%s1 + $0x224] sm:$0xf]
      %v355 = vld [vmem:[%s1 + $0x228] sm:$0xf]
      %v356 = vld [vmem:[%s1 + $0x22c] sm:$0xf]
      %v357 = vld [vmem:[%s1 + $0x230] sm:$0xf]
      %v358 = vld [vmem:[%s1 + $0x234] sm:$0xf]
      %v359 = vld [vmem:[%s1 + $0x238] sm:$0xf]
      %v360 = vld [vmem:[%s1 + $0x23c] sm:$0xf]
      %v361 = vld [vmem:[%s1 + $0x240] sm:$0xf]
      %v362 = vld [vmem:[%s1 + $0x244] sm:$0xf]
      %v363 = vld [vmem:[%s1 + $0x248] sm:$0xf]
      %v364 = vld [vmem:[%s1 + $0x24c] sm:$0xf]
      %v365 = vld [vmem:[%s1 + $0x250] sm:$0xf]
      %v366 = vld [vmem:[%s1 + $0x254] sm:$0xf]
      %v367 = vld [vmem:[%s1 + $0x258] sm:$0xf]
      %v368 = vld [vmem:[%s1 + $0x25c] sm:$0xf]
      %v369 = vld [vmem:[%s1 + $0x260] sm:$0xf]
      %v370 = vld [vmem:[%s1 + $0x264] sm:$0xf]
      %v371 = vld [vmem:[%s1 + $0x268] sm:$0xf]
      %v372 = vld [vmem:[%s1 + $0x26c] sm:$0xf]
      %v373 = vld [vmem:[%s1 + $0x270] sm:$0xf]
      %v374 = vld [vmem:[%s1 + $0x274] sm:$0xf]
      %v375 = vld [vmem:[%s1 + $0x278] sm:$0xf]
      %v376 = vld [vmem:[%s1 + $0x27c] sm:$0xf]
      %v377 = vld [vmem:[%s1 + $0x280] sm:$0xf]
      %v378 = vld [vmem:[%s1 + $0x284] sm:$0xf]
      %v379 = vld [vmem:[%s1 + $0x288] sm:$0xf]
      %v380 = vld [vmem:[%s1 + $0x28c] sm:$0xf]
      %v381 = vld [vmem:[%s1 + $0x290] sm:$0xf]
      %v382 = vld [vmem:[%s1 + $0x294] sm:$0xf]
      %v383 = vld [vmem:[%s1 + $0x298] sm:$0xf]
      %v384 = vld [vmem:[%s1 + $0x29c] sm:$0xf]
      %v385 = vld [vmem:[%s1 + $0x2a0] sm:$0xf]
      %v386 = vld [vmem:[%s1 + $0x2a4] sm:$0xf]
      %v387 = vld [vmem:[%s1 + $0x2a8] sm:$0xf]
      %v388 = vld [vmem:[%s1 + $0x2ac] sm:$0xf]
      %v389 = vld [vmem:[%s1 + $0x2b0] sm:$0xf]
      %v390 = vld [vmem:[%s1 + $0x2b4] sm:$0xf]
      %v391 = vld [vmem:[%s1 + $0x2b8] sm:$0xf]
      %v392 = vld [vmem:[%s1 + $0x2bc] sm:$0xf]
      %v393 = vld [vmem:[%s1 + $0x2c0] sm:$0xf]
      %v394 = vld [vmem:[%s1 + $0x2c4] sm:$0xf]
      %v395 = vld [vmem:[%s1 + $0x2c8] sm:$0xf]
      %v396 = vld [vmem:[%s1 + $0x2cc] sm:$0xf]
      %v397 = vld [vmem:[%s1 + $0x2d0] sm:$0xf]
      %v398 = vld [vmem:[%s1 + $0x2d4] sm:$0xf]
      %v399 = vld [vmem:[%s1 + $0x2d8] sm:$0xf]
      %v400 = vld [vmem:[%s1 + $0x2dc] sm:$0xf]
      %v401 = vld [vmem:[%s1 + $0x2e0] sm:$0xf]
      %v402 = vld [vmem:[%s1 + $0x2e4] sm:$0xf]
      %v403 = vld [vmem:[%s1 + $0x2e8] sm:$0xf]
      %v404 = vld [vmem:[%s1 + $0x2ec] sm:$0xf]
      %v405 = vld [vmem:[%s1 + $0x2f0] sm:$0xf]
      %v406 = vld [vmem:[%s1 + $0x2f4] sm:$0xf]
      %v407 = vld [vmem:[%s1 + $0x2f8] sm:$0xf]
      %v408 = vld [vmem:[%s1 + $0x2fc] sm:$0xf]
      %v409 = vld [vmem:[%s1 + $0x300] sm:$0xf]
      %v410 = vld [vmem:[%s1 + $0x304] sm:$0xf]
      %v411 = vld [vmem:[%s1 + $0x308] sm:$0xf]
      %v412 = vld [vmem:[%s1 + $0x30c] sm:$0xf]
      %v441 = vunpack.c.l.b16 %v189
      %v442 = vunpack.c.h.b16 %v189
      %v443 = vunpack.c.l.b16 %v190
      %v444 = vunpack.c.h.b16 %v190
      %v445 = vunpack.c.l.b16 %v191
      %v446 = vunpack.c.h.b16 %v191
      %v447 = vunpack.c.l.b16 %v192
      %v448 = vunpack.c.h.b16 %v192
      %v449 = vunpack.c.l.b16 %v193
      %v450 = vunpack.c.h.b16 %v193
      %v451 = vunpack.c.l.b16 %v194
      %v452 = vunpack.c.h.b16 %v194
      %v453 = vunpack.c.l.b16 %v195
      %v454 = vunpack.c.l.b16 %v196
      %v455 = vunpack.c.h.b16 %v196
      %v456 = vunpack.c.l.b16 %v197
      %v457 = vunpack.c.h.b16 %v197
      %v458 = vunpack.c.l.b16 %v198
      %v459 = vunpack.c.h.b16 %v198
      %v460 = vunpack.c.l.b16 %v199
      %v461 = vunpack.c.h.b16 %v199
      %v462 = vunpack.c.l.b16 %v200
      %v463 = vunpack.c.h.b16 %v200
      %v464 = vunpack.c.l.b16 %v201
      %v465 = vunpack.c.h.b16 %v201
      %v466 = vunpack.c.l.b16 %v202
      %v467 = vunpack.c.l.b16 %v203
      %v468 = vunpack.c.h.b16 %v203
      %v469 = vunpack.c.l.b16 %v204
      %v470 = vunpack.c.h.b16 %v204
      %v471 = vunpack.c.l.b16 %v205
      %v472 = vunpack.c.h.b16 %v205
      %v473 = vunpack.c.l.b16 %v206
      %v474 = vunpack.c.h.b16 %v206
      %v475 = vunpack.c.l.b16 %v207
      %v476 = vunpack.c.h.b16 %v207
      %v477 = vunpack.c.l.b16 %v208
      %v478 = vunpack.c.h.b16 %v208
      %v479 = vunpack.c.l.b16 %v209
      %v480 = vunpack.c.l.b16 %v210
      %v481 = vunpack.c.h.b16 %v210
      %v482 = vunpack.c.l.b16 %v211
      %v483 = vunpack.c.h.b16 %v211
      %v484 = vunpack.c.l.b16 %v212
      %v485 = vunpack.c.h.b16 %v212
      %v486 = vunpack.c.l.b16 %v213
      %v487 = vunpack.c.h.b16 %v213
      %v488 = vunpack.c.l.b16 %v214
      %v489 = vunpack.c.h.b16 %v214
      %v490 = vunpack.c.l.b16 %v215
      %v491 = vunpack.c.h.b16 %v215
      %v492 = vunpack.c.l.b16 %v216
      %v493 = vpack.c.b16 %v454, %v441
      %v494 = vpack.c.b16 %v455, %v442
      %v495 = vpack.c.b16 %v456, %v443
      %v496 = vpack.c.b16 %v457, %v444
      %v497 = vpack.c.b16 %v458, %v445
      %v498 = vpack.c.b16 %v459, %v446
      %v499 = vpack.c.b16 %v460, %v447
      %v500 = vpack.c.b16 %v461, %v448
      %v501 = vpack.c.b16 %v462, %v449
      %v502 = vpack.c.b16 %v463, %v450
      %v503 = vpack.c.b16 %v464, %v451
      %v504 = vpack.c.b16 %v465, %v452
      %v505 = vpack.c.b16 %v466, %v453
      %v506 = vpack.c.b16 %v480, %v467
      %v507 = vpack.c.b16 %v481, %v468
      %v508 = vpack.c.b16 %v482, %v469
      %v509 = vpack.c.b16 %v483, %v470
      %v510 = vpack.c.b16 %v484, %v471
      %v511 = vpack.c.b16 %v485, %v472
      %v512 = vpack.c.b16 %v486, %v473
      %v513 = vpack.c.b16 %v487, %v474
      %v514 = vpack.c.b16 %v488, %v475
      %v515 = vpack.c.b16 %v489, %v476
      %v516 = vpack.c.b16 %v490, %v477
      %v517 = vpack.c.b16 %v491, %v478
      %v518 = vpack.c.b16 %v492, %v479
      %v739 = vunpack.c.l.b16 %v217
      %v740 = vunpack.c.l.b16 %v218
      %v741 = vunpack.c.l.b16 %v219
      %v742 = vunpack.c.l.b16 %v220
      %v743 = vunpack.c.l.b16 %v221
      %v744 = vunpack.c.l.b16 %v222
      %v745 = vunpack.c.l.b16 %v223
      %v746 = vunpack.c.l.b16 %v224
      %v747 = vunpack.c.l.b16 %v225
      %v748 = vunpack.c.l.b16 %v226
      %v749 = vunpack.c.l.b16 %v227
      %v750 = vunpack.c.l.b16 %v228
      %v751 = vunpack.c.l.b16 %v229
      %v752 = vunpack.c.l.b16 %v230
      %v753 = vunpack.c.l.b16 %v231
      %v754 = vunpack.c.l.b16 %v232
      %v755 = vunpack.c.l.b16 %v233
      %v756 = vunpack.c.l.b16 %v234
      %v757 = vunpack.c.l.b16 %v235
      %v758 = vunpack.c.l.b16 %v236
      %v759 = vunpack.c.l.b16 %v237
      %v760 = vunpack.c.l.b16 %v238
      %v761 = vunpack.c.l.b16 %v239
      %v762 = vunpack.c.l.b16 %v240
      %v763 = vunpack.c.l.b16 %v241
      %v764 = vunpack.c.l.b16 %v242
      %v765 = vunpack.c.l.b16 %v243
      %v766 = vunpack.c.l.b16 %v244
      %v767 = vunpack.c.l.b16 %v245
      %v768 = vunpack.c.l.b16 %v246
      %v769 = vunpack.c.l.b16 %v247
      %v770 = vunpack.c.l.b16 %v248
      %v771 = vunpack.c.l.b16 %v249
      %v772 = vunpack.c.l.b16 %v250
      %v773 = vunpack.c.l.b16 %v251
      %v774 = vunpack.c.l.b16 %v252
      %v775 = vunpack.c.l.b16 %v253
      %v776 = vunpack.c.l.b16 %v254
      %v777 = vunpack.c.l.b16 %v255
      %v778 = vunpack.c.l.b16 %v256
      %v779 = vunpack.c.l.b16 %v257
      %v780 = vunpack.c.l.b16 %v258
      %v781 = vunpack.c.l.b16 %v259
      %v782 = vunpack.c.l.b16 %v260
      %v783 = vunpack.c.l.b16 %v261
      %v784 = vunpack.c.l.b16 %v262
      %v785 = vunpack.c.l.b16 %v263
      %v786 = vunpack.c.l.b16 %v264
      %v787 = vunpack.c.l.b16 %v265
      %v788 = vunpack.c.l.b16 %v266
      %v789 = vunpack.c.l.b16 %v267
      %v790 = vunpack.c.l.b16 %v268
      %v791 = vunpack.c.l.b16 %v269
      %v792 = vunpack.c.l.b16 %v270
      %v793 = vunpack.c.l.b16 %v271
      %v794 = vunpack.c.l.b16 %v272
      %v795 = vunpack.c.l.b16 %v273
      %v796 = vunpack.c.l.b16 %v274
      %v797 = vunpack.c.l.b16 %v275
      %v798 = vunpack.c.l.b16 %v276
      %v799 = vunpack.c.l.b16 %v277
      %v800 = vunpack.c.l.b16 %v278
      %v801 = vunpack.c.l.b16 %v279
      %v802 = vunpack.c.l.b16 %v280
      %v803 = vunpack.c.l.b16 %v281
      %v804 = vunpack.c.l.b16 %v282
      %v805 = vunpack.c.l.b16 %v283
      %v806 = vunpack.c.l.b16 %v284
      %v807 = vunpack.c.l.b16 %v285
      %v808 = vunpack.c.l.b16 %v286
      %v809 = vunpack.c.l.b16 %v287
      %v810 = vunpack.c.l.b16 %v288
      %v811 = vunpack.c.l.b16 %v289
      %v812 = vunpack.c.l.b16 %v290
      %v813 = vunpack.c.l.b16 %v291
      %v814 = vunpack.c.l.b16 %v292
      %v815 = vunpack.c.l.b16 %v293
      %v816 = vunpack.c.l.b16 %v294
      %v817 = vunpack.c.l.b16 %v295
      %v818 = vunpack.c.l.b16 %v296
      %v819 = vunpack.c.l.b16 %v297
      %v820 = vunpack.c.l.b16 %v298
      %v821 = vunpack.c.l.b16 %v299
      %v822 = vunpack.c.l.b16 %v300
      %v823 = vunpack.c.l.b16 %v301
      %v824 = vunpack.c.l.b16 %v302
      %v825 = vunpack.c.l.b16 %v303
      %v826 = vunpack.c.l.b16 %v304
      %v827 = vunpack.c.l.b16 %v305
      %v828 = vunpack.c.l.b16 %v306
      %v829 = vunpack.c.l.b16 %v307
      %v830 = vunpack.c.l.b16 %v308
      %v831 = vunpack.c.l.b16 %v309
      %v832 = vunpack.c.l.b16 %v310
      %v833 = vunpack.c.l.b16 %v311
      %v834 = vunpack.c.l.b16 %v312
      %v835 = vunpack.c.l.b16 %v313
      %v836 = vunpack.c.l.b16 %v314
      %v837 = vunpack.c.l.b16 %v315
      %v838 = vunpack.c.l.b16 %v316
      %v839 = vunpack.c.l.b16 %v317
      %v840 = vunpack.c.l.b16 %v318
      %v841 = vunpack.c.l.b16 %v319
      %v842 = vunpack.c.l.b16 %v320
      %v843 = vunpack.c.l.b16 %v321
      %v844 = vunpack.c.l.b16 %v322
      %v845 = vunpack.c.l.b16 %v323
      %v846 = vunpack.c.l.b16 %v324
      %v847 = vunpack.c.l.b16 %v325
      %v848 = vunpack.c.l.b16 %v326
      %v849 = vunpack.c.l.b16 %v327
      %v850 = vunpack.c.l.b16 %v328
      %v851 = vunpack.c.l.b16 %v329
      %v852 = vunpack.c.l.b16 %v330
      %v853 = vunpack.c.l.b16 %v331
      %v854 = vunpack.c.l.b16 %v332
      %v855 = vunpack.c.l.b16 %v333
      %v856 = vunpack.c.l.b16 %v334
      %v857 = vunpack.c.l.b16 %v335
      %v858 = vunpack.c.l.b16 %v336
      %v859 = vunpack.c.l.b16 %v337
      %v860 = vunpack.c.l.b16 %v338
      %v861 = vunpack.c.l.b16 %v339
      %v862 = vunpack.c.l.b16 %v340
      %v863 = vunpack.c.l.b16 %v341
      %v864 = vunpack.c.l.b16 %v342
      %v865 = vunpack.c.l.b16 %v343
      %v866 = vunpack.c.l.b16 %v344
      %v867 = vunpack.c.l.b16 %v345
      %v868 = vunpack.c.l.b16 %v346
      %v869 = vunpack.c.l.b16 %v347
      %v870 = vunpack.c.l.b16 %v348
      %v871 = vunpack.c.l.b16 %v349
      %v872 = vunpack.c.l.b16 %v350
      %v873 = vunpack.c.l.b16 %v351
      %v874 = vunpack.c.l.b16 %v352
      %v875 = vunpack.c.l.b16 %v353
      %v876 = vunpack.c.l.b16 %v354
      %v877 = vunpack.c.l.b16 %v355
      %v878 = vunpack.c.l.b16 %v356
      %v879 = vunpack.c.l.b16 %v357
      %v880 = vunpack.c.l.b16 %v358
      %v881 = vunpack.c.l.b16 %v359
      %v882 = vunpack.c.l.b16 %v360
      %v883 = vunpack.c.l.b16 %v361
      %v884 = vunpack.c.l.b16 %v362
      %v885 = vunpack.c.l.b16 %v363
      %v886 = vunpack.c.l.b16 %v364
      %v887 = vunpack.c.l.b16 %v365
      %v888 = vunpack.c.l.b16 %v366
      %v889 = vunpack.c.l.b16 %v367
      %v890 = vunpack.c.l.b16 %v368
      %v891 = vunpack.c.l.b16 %v369
      %v892 = vunpack.c.l.b16 %v370
      %v893 = vunpack.c.l.b16 %v371
      %v894 = vunpack.c.l.b16 %v372
      %v895 = vunpack.c.l.b16 %v373
      %v896 = vunpack.c.l.b16 %v374
      %v897 = vunpack.c.l.b16 %v375
      %v898 = vunpack.c.l.b16 %v376
      %v899 = vunpack.c.l.b16 %v377
      %v900 = vunpack.c.l.b16 %v378
      %v901 = vunpack.c.l.b16 %v379
      %v902 = vunpack.c.l.b16 %v380
      %v903 = vunpack.c.l.b16 %v381
      %v904 = vunpack.c.l.b16 %v382
      %v905 = vunpack.c.l.b16 %v383
      %v906 = vunpack.c.l.b16 %v384
      %v907 = vunpack.c.l.b16 %v385
      %v908 = vunpack.c.l.b16 %v386
      %v909 = vunpack.c.l.b16 %v387
      %v910 = vunpack.c.l.b16 %v388
      %v911 = vunpack.c.l.b16 %v389
      %v912 = vunpack.c.l.b16 %v390
      %v913 = vunpack.c.l.b16 %v391
      %v914 = vunpack.c.l.b16 %v392
      %v915 = vunpack.c.l.b16 %v393
      %v916 = vunpack.c.l.b16 %v394
      %v917 = vunpack.c.l.b16 %v395
      %v918 = vunpack.c.l.b16 %v396
      %v919 = vunpack.c.l.b16 %v397
      %v920 = vunpack.c.l.b16 %v398
      %v921 = vunpack.c.l.b16 %v399
      %v922 = vunpack.c.l.b16 %v400
      %v923 = vunpack.c.l.b16 %v401
      %v924 = vunpack.c.l.b16 %v402
      %v925 = vunpack.c.l.b16 %v403
      %v926 = vunpack.c.l.b16 %v404
      %v927 = vunpack.c.l.b16 %v405
      %v928 = vunpack.c.l.b16 %v406
      %v929 = vunpack.c.l.b16 %v407
      %v930 = vunpack.c.l.b16 %v408
      %v931 = vunpack.c.l.b16 %v409
      %v932 = vunpack.c.l.b16 %v410
      %v933 = vunpack.c.l.b16 %v411
      %v934 = vunpack.c.l.b16 %v412
      %v935 = vpack.c.b16 %v740, %v739
      %v936 = vpack.c.b16 %v742, %v741
      %v937 = vpack.c.b16 %v744, %v743
      %v938 = vpack.c.b16 %v746, %v745
      %v939 = vpack.c.b16 %v748, %v747
      %v940 = vpack.c.b16 %v750, %v749
      %v941 = vpack.c.b16 %v752, %v751
      %v942 = vpack.c.b16 %v754, %v753
      %v943 = vpack.c.b16 %v756, %v755
      %v944 = vpack.c.b16 %v758, %v757
      %v945 = vpack.c.b16 %v760, %v759
      %v946 = vpack.c.b16 %v762, %v761
      %v947 = vpack.c.b16 %v764, %v763
      %v948 = vpack.c.b16 %v766, %v765
      %v949 = vpack.c.b16 %v768, %v767
      %v950 = vpack.c.b16 %v770, %v769
      %v951 = vpack.c.b16 %v772, %v771
      %v952 = vpack.c.b16 %v774, %v773
      %v953 = vpack.c.b16 %v776, %v775
      %v954 = vpack.c.b16 %v778, %v777
      %v955 = vpack.c.b16 %v780, %v779
      %v956 = vpack.c.b16 %v782, %v781
      %v957 = vpack.c.b16 %v784, %v783
      %v958 = vpack.c.b16 %v786, %v785
      %v959 = vpack.c.b16 %v788, %v787
      %v960 = vpack.c.b16 %v790, %v789
      %v961 = vpack.c.b16 %v792, %v791
      %v962 = vpack.c.b16 %v794, %v793
      %v963 = vpack.c.b16 %v796, %v795
      %v964 = vpack.c.b16 %v798, %v797
      %v965 = vpack.c.b16 %v800, %v799
      %v966 = vpack.c.b16 %v802, %v801
      %v967 = vpack.c.b16 %v804, %v803
      %v968 = vpack.c.b16 %v806, %v805
      %v969 = vpack.c.b16 %v808, %v807
      %v970 = vpack.c.b16 %v810, %v809
      %v971 = vpack.c.b16 %v812, %v811
      %v972 = vpack.c.b16 %v814, %v813
      %v973 = vpack.c.b16 %v816, %v815
      %v974 = vpack.c.b16 %v818, %v817
      %v975 = vpack.c.b16 %v820, %v819
      %v976 = vpack.c.b16 %v822, %v821
      %v977 = vpack.c.b16 %v824, %v823
      %v978 = vpack.c.b16 %v826, %v825
      %v979 = vpack.c.b16 %v828, %v827
      %v980 = vpack.c.b16 %v830, %v829
      %v981 = vpack.c.b16 %v832, %v831
      %v982 = vpack.c.b16 %v834, %v833
      %v983 = vpack.c.b16 %v836, %v835
      %v984 = vpack.c.b16 %v838, %v837
      %v985 = vpack.c.b16 %v840, %v839
      %v986 = vpack.c.b16 %v842, %v841
      %v987 = vpack.c.b16 %v844, %v843
      %v988 = vpack.c.b16 %v846, %v845
      %v989 = vpack.c.b16 %v848, %v847
      %v990 = vpack.c.b16 %v850, %v849
      %v991 = vpack.c.b16 %v852, %v851
      %v992 = vpack.c.b16 %v854, %v853
      %v993 = vpack.c.b16 %v856, %v855
      %v994 = vpack.c.b16 %v858, %v857
      %v995 = vpack.c.b16 %v860, %v859
      %v996 = vpack.c.b16 %v862, %v861
      %v997 = vpack.c.b16 %v864, %v863
      %v998 = vpack.c.b16 %v866, %v865
      %v999 = vpack.c.b16 %v868, %v867
      %v1000 = vpack.c.b16 %v870, %v869
      %v1001 = vpack.c.b16 %v872, %v871
      %v1002 = vpack.c.b16 %v874, %v873
      %v1003 = vpack.c.b16 %v876, %v875
      %v1004 = vpack.c.b16 %v878, %v877
      %v1005 = vpack.c.b16 %v880, %v879
      %v1006 = vpack.c.b16 %v882, %v881
      %v1007 = vpack.c.b16 %v884, %v883
      %v1008 = vpack.c.b16 %v886, %v885
      %v1009 = vpack.c.b16 %v888, %v887
      %v1010 = vpack.c.b16 %v890, %v889
      %v1011 = vpack.c.b16 %v892, %v891
      %v1012 = vpack.c.b16 %v894, %v893
      %v1013 = vpack.c.b16 %v896, %v895
      %v1014 = vpack.c.b16 %v898, %v897
      %v1015 = vpack.c.b16 %v900, %v899
      %v1016 = vpack.c.b16 %v902, %v901
      %v1017 = vpack.c.b16 %v904, %v903
      %v1018 = vpack.c.b16 %v906, %v905
      %v1019 = vpack.c.b16 %v908, %v907
      %v1020 = vpack.c.b16 %v910, %v909
      %v1021 = vpack.c.b16 %v912, %v911
      %v1022 = vpack.c.b16 %v914, %v913
      %v1023 = vpack.c.b16 %v916, %v915
      %v1024 = vpack.c.b16 %v918, %v917
      %v1025 = vpack.c.b16 %v920, %v919
      %v1026 = vpack.c.b16 %v922, %v921
      %v1027 = vpack.c.b16 %v924, %v923
      %v1028 = vpack.c.b16 %v926, %v925
      %v1029 = vpack.c.b16 %v928, %v927
      %v1030 = vpack.c.b16 %v930, %v929
      %v1031 = vpack.c.b16 %v932, %v931
      %v1032 = vpack.c.b16 %v934, %v933
      %vm1131 = vcmask 261120
      %v1133 = vsel %vm1131, %v505, 0
      %v1136 = vsel %vm1131, %v518, 0
      %1138 = vmatprep.subr.bf16.mxu0 0
      %1139 = vmatpush1.bf16.msra.mxu0 %v935
      %1140 = vmatprep.subr.bf16.mxu0 0
      %1141 = vmatpush1.bf16.msra.mxu0 %v936
      %1142 = vmatprep.subr.bf16.mxu0 0
      %1143 = vmatpush1.bf16.msra.mxu0 %v937
      %1144 = vmatprep.subr.bf16.mxu0 0
      %1145 = vmatpush1.bf16.msra.mxu0 %v938
      %1146 = vmatprep.subr.bf16.mxu0 0
      %1147 = vmatpush1.bf16.msra.mxu0 %v939
      %1148 = vmatprep.subr.bf16.mxu0 0
      %1149 = vmatpush1.bf16.msra.mxu0 %v940
      %1150 = vmatprep.subr.bf16.mxu0 0
      %1151 = vmatpush1.bf16.msra.mxu0 %v941
      %1152 = vmatprep.subr.bf16.mxu0 0
      %1153 = vmatpush1.bf16.msra.mxu0 %v942
      %1154 = vmatprep.subr.bf16.mxu0 0
      %1155 = vmatpush1.bf16.msra.mxu0 %v943
      %1156 = vmatprep.subr.bf16.mxu0 0
      %1157 = vmatpush1.bf16.msra.mxu0 %v944
      %1158 = vmatprep.subr.bf16.mxu0 0
      %1159 = vmatpush1.bf16.msra.mxu0 %v945
      %1160 = vmatprep.subr.bf16.mxu0 0
      %1161 = vmatpush1.bf16.msra.mxu0 %v946
      %1162 = vmatprep.subr.bf16.mxu0 0
      %1163 = vmatpush1.bf16.msra.mxu0 %v947
      %1164 = vmatprep.subr.bf16.mxu0 0
      %1165 = vmatpush1.bf16.msra.mxu0 %v948
      %1166 = vmatprep.subr.bf16.mxu0 0
      %1167 = vmatpush1.bf16.msra.mxu0 %v949
      %1168 = vmatprep.subr.bf16.mxu0 0
      %1169 = vmatpush1.bf16.msra.mxu0 %v950
      %1170 = vmatprep.mubr.bf16.mxu0 %v494
      %1171 = vmatmul.mubr.bf16.gmra.mrb[0].mxu0 %v493
      %v1172 = vpop.f32.mrb[0].mxu0
      %v1173 = vadd.f32 0.0, %v1172
      %v1174 = vpop.f32.mrb[0].mxu0
      %v1175 = vpop.f32.mrb[0].mxu0
      %v1176 = vadd.f32 0.0, %v1175
      %v1177 = vpop.f32.mrb[0].mxu0
      %1178 = vmatprep.mubr.bf16.mxu0 %v507
      %1179 = vmatmul.mubr.bf16.gmra.mrb[0].mxu0 %v506
      %v1180 = vpop.f32.mrb[0].mxu0
      %v1181 = vadd.f32 0.0, %v1180
      %v1182 = vpop.f32.mrb[0].mxu0
      %v1183 = vpop.f32.mrb[0].mxu0
      %v1184 = vadd.f32 0.0, %v1183
      %v1185 = vpop.f32.mrb[0].mxu0
      %1186 = vdwg.mxu0
      %1187 = vmatprep.subr.bf16.mxu0 0
      %1188 = vmatpush1.bf16.msra.mxu0 %v951
      %1189 = vmatprep.subr.bf16.mxu0 0
      %1190 = vmatpush1.bf16.msra.mxu0 %v952
      %1191 = vmatprep.subr.bf16.mxu0 0
      %1192 = vmatpush1.bf16.msra.mxu0 %v953
      %1193 = vmatprep.subr.bf16.mxu0 0
      %1194 = vmatpush1.bf16.msra.mxu0 %v954
      %1195 = vmatprep.subr.bf16.mxu0 0
      %1196 = vmatpush1.bf16.msra.mxu0 %v955
      %1197 = vmatprep.subr.bf16.mxu0 0
      %1198 = vmatpush1.bf16.msra.mxu0 %v956
      %1199 = vmatprep.subr.bf16.mxu0 0
      %1200 = vmatpush1.bf16.msra.mxu0 %v957
      %1201 = vmatprep.subr.bf16.mxu0 0
      %1202 = vmatpush1.bf16.msra.mxu0 %v958
      %1203 = vmatprep.subr.bf16.mxu0 0
      %1204 = vmatpush1.bf16.msra.mxu0 %v959
      %1205 = vmatprep.subr.bf16.mxu0 0
      %1206 = vmatpush1.bf16.msra.mxu0 %v960
      %1207 = vmatprep.subr.bf16.mxu0 0
      %1208 = vmatpush1.bf16.msra.mxu0 %v961
      %1209 = vmatprep.subr.bf16.mxu0 0
      %1210 = vmatpush1.bf16.msra.mxu0 %v962
      %1211 = vmatprep.subr.bf16.mxu0 0
      %1212 = vmatpush1.bf16.msra.mxu0 %v963
      %1213 = vmatprep.subr.bf16.mxu0 0
      %1214 = vmatpush1.bf16.msra.mxu0 %v964
      %1215 = vmatprep.subr.bf16.mxu0 0
      %1216 = vmatpush1.bf16.msra.mxu0 %v965
      %1217 = vmatprep.subr.bf16.mxu0 0
      %1218 = vmatpush1.bf16.msra.mxu0 %v966
      %1219 = vmatprep.mubr.bf16.mxu0 %v496
      %1220 = vmatmul.mubr.bf16.gmra.mrb[0].mxu0 %v495
      %v1221 = vpop.f32.mrb[0].mxu0
      %v1222 = vadd.f32 %v1173, %v1221
      %v1223 = vpop.f32.mrb[0].mxu0
      %v1224 = vpop.f32.mrb[0].mxu0
      %v1225 = vadd.f32 %v1176, %v1224
      %v1226 = vpop.f32.mrb[0].mxu0
      %1227 = vmatprep.mubr.bf16.mxu0 %v509
      %1228 = vmatmul.mubr.bf16.gmra.mrb[0].mxu0 %v508
      %v1229 = vpop.f32.mrb[0].mxu0
      %v1230 = vadd.f32 %v1181, %v1229
      %v1231 = vpop.f32.mrb[0].mxu0
      %v1232 = vpop.f32.mrb[0].mxu0
      %v1233 = vadd.f32 %v1184, %v1232
      %v1234 = vpop.f32.mrb[0].mxu0
      %1235 = vdwg.mxu0
      %1236 = vmatprep.subr.bf16.mxu0 0
      %1237 = vmatpush1.bf16.msra.mxu0 %v967
      %1238 = vmatprep.subr.bf16.mxu0 0
      %1239 = vmatpush1.bf16.msra.mxu0 %v968
      %1240 = vmatprep.subr.bf16.mxu0 0
      %1241 = vmatpush1.bf16.msra.mxu0 %v969
      %1242 = vmatprep.subr.bf16.mxu0 0
      %1243 = vmatpush1.bf16.msra.mxu0 %v970
      %1244 = vmatprep.subr.bf16.mxu0 0
      %1245 = vmatpush1.bf16.msra.mxu0 %v971
      %1246 = vmatprep.subr.bf16.mxu0 0
      %1247 = vmatpush1.bf16.msra.mxu0 %v972
      %1248 = vmatprep.subr.bf16.mxu0 0
      %1249 = vmatpush1.bf16.msra.mxu0 %v973
      %1250 = vmatprep.subr.bf16.mxu0 0
      %1251 = vmatpush1.bf16.msra.mxu0 %v974
      %1252 = vmatprep.subr.bf16.mxu0 0
      %1253 = vmatpush1.bf16.msra.mxu0 %v975
      %1254 = vmatprep.subr.bf16.mxu0 0
      %1255 = vmatpush1.bf16.msra.mxu0 %v976
      %1256 = vmatprep.subr.bf16.mxu0 0
      %1257 = vmatpush1.bf16.msra.mxu0 %v977
      %1258 = vmatprep.subr.bf16.mxu0 0
      %1259 = vmatpush1.bf16.msra.mxu0 %v978
      %1260 = vmatprep.subr.bf16.mxu0 0
      %1261 = vmatpush1.bf16.msra.mxu0 %v979
      %1262 = vmatprep.subr.bf16.mxu0 0
      %1263 = vmatpush1.bf16.msra.mxu0 %v980
      %1264 = vmatprep.subr.bf16.mxu0 0
      %1265 = vmatpush1.bf16.msra.mxu0 %v981
      %1266 = vmatprep.subr.bf16.mxu0 0
      %1267 = vmatpush1.bf16.msra.mxu0 %v982
      %1268 = vmatprep.mubr.bf16.mxu0 %v498
      %1269 = vmatmul.mubr.bf16.gmra.mrb[0].mxu0 %v497
      %v1270 = vpop.f32.mrb[0].mxu0
      %v1271 = vadd.f32 %v1222, %v1270
      %v1272 = vpop.f32.mrb[0].mxu0
      %v1273 = vpop.f32.mrb[0].mxu0
      %v1274 = vadd.f32 %v1225, %v1273
      %v1275 = vpop.f32.mrb[0].mxu0
      %1276 = vmatprep.mubr.bf16.mxu0 %v511
      %1277 = vmatmul.mubr.bf16.gmra.mrb[0].mxu0 %v510
      %v1278 = vpop.f32.mrb[0].mxu0
      %v1279 = vadd.f32 %v1230, %v1278
      %v1280 = vpop.f32.mrb[0].mxu0
      %v1281 = vpop.f32.mrb[0].mxu0
      %v1282 = vadd.f32 %v1233, %v1281
      %v1283 = vpop.f32.mrb[0].mxu0
      %1284 = vdwg.mxu0
      %1285 = vmatprep.subr.bf16.mxu0 0
      %1286 = vmatpush1.bf16.msra.mxu0 %v983
      %1287 = vmatprep.subr.bf16.mxu0 0
      %1288 = vmatpush1.bf16.msra.mxu0 %v984
      %1289 = vmatprep.subr.bf16.mxu0 0
      %1290 = vmatpush1.bf16.msra.mxu0 %v985
      %1291 = vmatprep.subr.bf16.mxu0 0
      %1292 = vmatpush1.bf16.msra.mxu0 %v986
      %1293 = vmatprep.subr.bf16.mxu0 0
      %1294 = vmatpush1.bf16.msra.mxu0 %v987
      %1295 = vmatprep.subr.bf16.mxu0 0
      %1296 = vmatpush1.bf16.msra.mxu0 %v988
      %1297 = vmatprep.subr.bf16.mxu0 0
      %1298 = vmatpush1.bf16.msra.mxu0 %v989
      %1299 = vmatprep.subr.bf16.mxu0 0
      %1300 = vmatpush1.bf16.msra.mxu0 %v990
      %1301 = vmatprep.subr.bf16.mxu0 0
      %1302 = vmatpush1.bf16.msra.mxu0 %v991
      %1303 = vmatprep.subr.bf16.mxu0 0
      %1304 = vmatpush1.bf16.msra.mxu0 %v992
      %1305 = vmatprep.subr.bf16.mxu0 0
      %1306 = vmatpush1.bf16.msra.mxu0 %v993
      %1307 = vmatprep.subr.bf16.mxu0 0
      %1308 = vmatpush1.bf16.msra.mxu0 %v994
      %1309 = vmatprep.subr.bf16.mxu0 0
      %1310 = vmatpush1.bf16.msra.mxu0 %v995
      %1311 = vmatprep.subr.bf16.mxu0 0
      %1312 = vmatpush1.bf16.msra.mxu0 %v996
      %1313 = vmatprep.subr.bf16.mxu0 0
      %1314 = vmatpush1.bf16.msra.mxu0 %v997
      %1315 = vmatprep.subr.bf16.mxu0 0
      %1316 = vmatpush1.bf16.msra.mxu0 %v998
      %1317 = vmatprep.mubr.bf16.mxu0 %v500
      %1318 = vmatmul.mubr.bf16.gmra.mrb[0].mxu0 %v499
      %v1319 = vpop.f32.mrb[0].mxu0
      %v1320 = vadd.f32 %v1271, %v1319
      %v1321 = vpop.f32.mrb[0].mxu0
      %v1322 = vpop.f32.mrb[0].mxu0
      %v1323 = vadd.f32 %v1274, %v1322
      %v1324 = vpop.f32.mrb[0].mxu0
      %1325 = vmatprep.mubr.bf16.mxu0 %v513
      %1326 = vmatmul.mubr.bf16.gmra.mrb[0].mxu0 %v512
      %v1327 = vpop.f32.mrb[0].mxu0
      %v1328 = vadd.f32 %v1279, %v1327
      %v1329 = vpop.f32.mrb[0].mxu0
      %v1330 = vpop.f32.mrb[0].mxu0
      %v1331 = vadd.f32 %v1282, %v1330
      %v1332 = vpop.f32.mrb[0].mxu0
      %1333 = vdwg.mxu0
      %1334 = vmatprep.subr.bf16.mxu0 0
      %1335 = vmatpush1.bf16.msra.mxu0 %v999
      %1336 = vmatprep.subr.bf16.mxu0 0
      %1337 = vmatpush1.bf16.msra.mxu0 %v1000
      %1338 = vmatprep.subr.bf16.mxu0 0
      %1339 = vmatpush1.bf16.msra.mxu0 %v1001
      %1340 = vmatprep.subr.bf16.mxu0 0
      %1341 = vmatpush1.bf16.msra.mxu0 %v1002
      %1342 = vmatprep.subr.bf16.mxu0 0
      %1343 = vmatpush1.bf16.msra.mxu0 %v1003
      %1344 = vmatprep.subr.bf16.mxu0 0
      %1345 = vmatpush1.bf16.msra.mxu0 %v1004
      %1346 = vmatprep.subr.bf16.mxu0 0
      %1347 = vmatpush1.bf16.msra.mxu0 %v1005
      %1348 = vmatprep.subr.bf16.mxu0 0
      %1349 = vmatpush1.bf16.msra.mxu0 %v1006
      %1350 = vmatprep.subr.bf16.mxu0 0
      %1351 = vmatpush1.bf16.msra.mxu0 %v1007
      %1352 = vmatprep.subr.bf16.mxu0 0
      %1353 = vmatpush1.bf16.msra.mxu0 %v1008
      %1354 = vmatprep.subr.bf16.mxu0 0
      %1355 = vmatpush1.bf16.msra.mxu0 %v1009
      %1356 = vmatprep.subr.bf16.mxu0 0
      %1357 = vmatpush1.bf16.msra.mxu0 %v1010
      %1358 = vmatprep.subr.bf16.mxu0 0
      %1359 = vmatpush1.bf16.msra.mxu0 %v1011
      %1360 = vmatprep.subr.bf16.mxu0 0
      %1361 = vmatpush1.bf16.msra.mxu0 %v1012
      %1362 = vmatprep.subr.bf16.mxu0 0
      %1363 = vmatpush1.bf16.msra.mxu0 %v1013
      %1364 = vmatprep.subr.bf16.mxu0 0
      %1365 = vmatpush1.bf16.msra.mxu0 %v1014
      %1366 = vmatprep.mubr.bf16.mxu0 %v502
      %1367 = vmatmul.mubr.bf16.gmra.mrb[0].mxu0 %v501
      %v1368 = vpop.f32.mrb[0].mxu0
      %v1369 = vadd.f32 %v1320, %v1368
      %v1370 = vpop.f32.mrb[0].mxu0
      %v1371 = vpop.f32.mrb[0].mxu0
      %v1372 = vadd.f32 %v1323, %v1371
      %v1373 = vpop.f32.mrb[0].mxu0
      %1374 = vmatprep.mubr.bf16.mxu0 %v515
      %1375 = vmatmul.mubr.bf16.gmra.mrb[0].mxu0 %v514
      %v1376 = vpop.f32.mrb[0].mxu0
      %v1377 = vadd.f32 %v1328, %v1376
      %v1378 = vpop.f32.mrb[0].mxu0
      %v1379 = vpop.f32.mrb[0].mxu0
      %v1380 = vadd.f32 %v1331, %v1379
      %v1381 = vpop.f32.mrb[0].mxu0
      %1382 = vdwg.mxu0
      %1383 = vmatprep.subr.bf16.mxu0 0
      %1384 = vmatpush1.bf16.msra.mxu0 %v1015
      %1385 = vmatprep.subr.bf16.mxu0 0
      %1386 = vmatpush1.bf16.msra.mxu0 %v1016
      %1387 = vmatprep.subr.bf16.mxu0 0
      %1388 = vmatpush1.bf16.msra.mxu0 %v1017
      %1389 = vmatprep.subr.bf16.mxu0 0
      %1390 = vmatpush1.bf16.msra.mxu0 %v1018
      %1391 = vmatprep.subr.bf16.mxu0 0
      %1392 = vmatpush1.bf16.msra.mxu0 %v1019
      %1393 = vmatprep.subr.bf16.mxu0 0
      %1394 = vmatpush1.bf16.msra.mxu0 %v1020
      %1395 = vmatprep.subr.bf16.mxu0 0
      %1396 = vmatpush1.bf16.msra.mxu0 %v1021
      %1397 = vmatprep.subr.bf16.mxu0 0
      %1398 = vmatpush1.bf16.msra.mxu0 %v1022
      %1399 = vmatprep.subr.bf16.mxu0 0
      %1400 = vmatpush1.bf16.msra.mxu0 %v1023
      %1401 = vmatprep.subr.bf16.mxu0 0
      %1402 = vmatpush1.bf16.msra.mxu0 %v1024
      %1403 = vmatprep.subr.bf16.mxu0 0
      %1404 = vmatpush1.bf16.msra.mxu0 %v1025
      %1405 = vmatprep.subr.bf16.mxu0 0
      %1406 = vmatpush1.bf16.msra.mxu0 %v1026
      %1407 = vmatprep.subr.bf16.mxu0 0
      %1408 = vmatpush1.bf16.msra.mxu0 %v1027
      %1409 = vmatprep.subr.bf16.mxu0 0
      %1410 = vmatpush1.bf16.msra.mxu0 %v1028
      %1411 = vmatprep.subr.bf16.mxu0 0
      %1412 = vmatpush1.bf16.msra.mxu0 %v1029
      %1413 = vmatprep.subr.bf16.mxu0 0
      %1414 = vmatpush1.bf16.msra.mxu0 %v1030
      %1415 = vmatprep.mubr.bf16.mxu0 %v504
      %1416 = vmatmul.mubr.bf16.gmra.mrb[0].mxu0 %v503
      %v1417 = vpop.f32.mrb[0].mxu0
      %v1418 = vadd.f32 %v1369, %v1417
      %v1419 = vpop.f32.mrb[0].mxu0
      %v1420 = vpop.f32.mrb[0].mxu0
      %v1421 = vadd.f32 %v1372, %v1420
      %v1422 = vpop.f32.mrb[0].mxu0
      %1423 = vmatprep.mubr.bf16.mxu0 %v517
      %1424 = vmatmul.mubr.bf16.gmra.mrb[0].mxu0 %v516
      %v1425 = vpop.f32.mrb[0].mxu0
      %v1426 = vadd.f32 %v1377, %v1425
      %v1427 = vpop.f32.mrb[0].mxu0
      %v1428 = vpop.f32.mrb[0].mxu0
      %v1429 = vadd.f32 %v1380, %v1428
      %v1430 = vpop.f32.mrb[0].mxu0
      %1431 = vdwg.mxu0
      %1432 = vmatprep.subr.bf16.mxu0 0
      %1433 = vmatpush1.bf16.msra.mxu0 %v1031
      %1434 = vmatprep.subr.bf16.mxu0 0
      %1435 = vmatpush1.bf16.msra.mxu0 %v1032
      %1436 = vmatprep.subr.bf16.mxu0 0
      %1437 = vmatpush1.bf16.msra.mxu0 0
      %1438 = vmatprep.subr.bf16.mxu0 0
      %1439 = vmatpush1.bf16.msra.mxu0 0
      %1440 = vmatprep.subr.bf16.mxu0 0
      %1441 = vmatpush1.bf16.msra.mxu0 0
      %1442 = vmatprep.subr.bf16.mxu0 0
      %1443 = vmatpush1.bf16.msra.mxu0 0
      %1444 = vmatprep.subr.bf16.mxu0 0
      %1445 = vmatpush1.bf16.msra.mxu0 0
      %1446 = vmatprep.subr.bf16.mxu0 0
      %1447 = vmatpush1.bf16.msra.mxu0 0
      %1448 = vmatprep.subr.bf16.mxu0 0
      %1449 = vmatpush1.bf16.msra.mxu0 0
      %1450 = vmatprep.subr.bf16.mxu0 0
      %1451 = vmatpush1.bf16.msra.mxu0 0
      %1452 = vmatprep.subr.bf16.mxu0 0
      %1453 = vmatpush1.bf16.msra.mxu0 0
      %1454 = vmatprep.subr.bf16.mxu0 0
      %1455 = vmatpush1.bf16.msra.mxu0 0
      %1456 = vmatprep.subr.bf16.mxu0 0
      %1457 = vmatpush1.bf16.msra.mxu0 0
      %1458 = vmatprep.subr.bf16.mxu0 0
      %1459 = vmatpush1.bf16.msra.mxu0 0
      %1460 = vmatprep.subr.bf16.mxu0 0
      %1461 = vmatpush1.bf16.msra.mxu0 0
      %1462 = vmatprep.subr.bf16.mxu0 0
      %1463 = vmatpush1.bf16.msra.mxu0 0
      %1464 = vmatprep.mubr.bf16.mxu0 0
      %1465 = vmatmul.mubr.bf16.gmra.mrb[0].mxu0 %v1133
      %v1466 = vpop.f32.mrb[0].mxu0
      %v1467 = vadd.f32 %v1418, %v1466
      %v1468 = vpop.f32.mrb[0].mxu0
      %v1469 = vpop.f32.mrb[0].mxu0
      %v1470 = vadd.f32 %v1421, %v1469
      %v1471 = vpop.f32.mrb[0].mxu0
      %1472 = vmatprep.mubr.bf16.mxu0 0
      %1473 = vmatmul.mubr.bf16.gmra.mrb[0].mxu0 %v1136
      %v1474 = vpop.f32.mrb[0].mxu0
      %v1475 = vadd.f32 %v1426, %v1474
      %v1476 = vpop.f32.mrb[0].mxu0
      %v1477 = vpop.f32.mrb[0].mxu0
      %v1478 = vadd.f32 %v1429, %v1477
      %v1479 = vpop.f32.mrb[0].mxu0
      %1480 = vdwg.mxu0
      %v1481 = vadd.f32 %v1467, %v1470
      %v1482 = vadd.f32 %v1481, %v1475
      %v1483 = vadd.f32 %v1482, %v1478
      %v1484 = vrot.slane %v1483, 4
      %v1485 = vadd.f32 %v1483, %v1484
      %v1486 = vrot.slane %v1485, 2
      %v1487 = vadd.f32 %v1485, %v1486
      %v1488 = vrot.slane %v1487, 1
      %v1489 = vadd.f32 %v1487, %v1488
      %1490 = vst [vmem:[%s187] sm:$0x1] %v1489
      %v1491 = vmul.f32 %v1467, %v1467
      %v1492 = vmul.f32 %v1470, %v1470
      %v1493 = vmul.f32 %v1475, %v1475
      %v1494 = vmul.f32 %v1478, %v1478
      %v1495 = vadd.f32 %v1491, %v1492
      %v1496 = vadd.f32 %v1495, %v1493
      %v1497 = vadd.f32 %v1496, %v1494
      %v1498 = vrot.slane %v1497, 4
      %v1499 = vadd.f32 %v1497, %v1498
      %v1500 = vrot.slane %v1499, 2
      %v1501 = vadd.f32 %v1499, %v1500
      %v1502 = vrot.slane %v1501, 1
      %v1503 = vadd.f32 %v1501, %v1502
      %1504 = vst [vmem:[%s187 + $0x1] sm:$0x1] %v1503
      %v1505 = vpack.c.bf16 %v1470, %v1467
      %v1506 = vpack.c.bf16 %v1478, %v1475
      %v1509 = vunpack.c.l.b16 %v1505
      %v1510 = vunpack.c.h.b16 %v1505
      %v1511 = vunpack.c.l.b16 %v1506
      %v1512 = vunpack.c.h.b16 %v1506
      %v1513 = vpack.c.b16 %v1509, %v1509
      %v1514 = vpack.c.b16 %v1510, %v1510
      %v1515 = vpack.c.b16 %v1511, %v1511
      %v1516 = vpack.c.b16 %v1512, %v1512
      %1521 = vst [vmem:[%s182] sm:$0xf] %v1513
      %1522 = vst [vmem:[%s182 + $0x4] sm:$0xf] %v1514
      %1523 = vst [vmem:[%s182 + $0x8] sm:$0xf] %v1515
      %1524 = vst [vmem:[%s182 + $0xc] sm:$0xf] %v1516
      %s1525 = smul.u32 4, %s15
      %p1526 = scmp.lt.s32.totalorder %s1525, 15
      %s1527 = scalar_select %p1526, %s1525, 15
      %s1528 = smul.addr %s1527, 4
      %s1529 = scalar_lea.vmem %s2, %s1528
      %p1530 = scmp.lt.s32.totalorder %s15, 3
      %s1531 = scalar_select %p1530, %s15, 3
      %s1532 = smul.addr %s1531, 8
      %s1533 = scalar_lea.vmem %s3, %s1532
      // Predicated region
      $region29: #{fast_arcnn_forward.10} parent=27 // pred_check
        %p1534 = pneg %p80
      $region30: #{fast_arcnn_forward.10} parent=27 // pred_check_branch
        %1536 = sbr.rel (%p1534) target = $region32
      $region31: #{fast_arcnn_forward.10} parent=27 // pred_region
        %s1537 = smul.u32 4, %s15
      $region32: #{fast_arcnn_forward.10} parent=27 // pred_fallthru
        _
      // Predicated region
      $region33: #{fast_arcnn_forward.10} parent=27 // pred_check
        %p1538 = pneg %p106
      $region34: #{fast_arcnn_forward.10} parent=27 // pred_check_branch
        %1540 = sbr.rel (%p1538) target = $region36
      $region35: #{fast_arcnn_forward.10} parent=27 // pred_region
        _
      $region36: #{fast_arcnn_forward.10} parent=27 // pred_fallthru
        _
    $region28: #{fast_arcnn_forward.10} parent=5 // pred_fallthru
      _
    %p1541 = scmp.le.s32.totalorder 2, %s10
    // Predicated region
    $region37: #{fast_arcnn_forward.10} parent=5 // pred_check
      %p1542 = pneg %p1541
    $region38: #{fast_arcnn_forward.10} parent=5 // pred_check_branch
      %1544 = sbr.rel (%p1542) target = $region40
    $region39: #{fast_arcnn_forward.10} parent=5 // pred_region
      %s1545 = ssub.s32 %s10, 2
      // Predicated region
      $region41: #{fast_arcnn_forward.10} parent=39 // pred_check
        %p1546 = pneg %p86
      $region42: #{fast_arcnn_forward.10} parent=39 // pred_check_branch
        %1548 = sbr.rel (%p1546) target = $region44
      $region43: #{fast_arcnn_forward.10} parent=39 // pred_region
        %s1549 = smul.u32 4, %s16
        %p1550 = scmp.lt.s32.totalorder %s1549, 15
        %s1551 = scalar_select %p1550, %s1549, 15
        %s1552 = smul.addr %s1551, 4
        %s1553 = scalar_lea.vmem %s2, %s1552
      $region44: #{fast_arcnn_forward.10} parent=39 // pred_fallthru
        _
      // Predicated region
      $region45: #{fast_arcnn_forward.10} parent=39 // pred_check
        %p1554 = pneg %p112
      $region46: #{fast_arcnn_forward.10} parent=39 // pred_check_branch
        %1556 = sbr.rel (%p1554) target = $region48
      $region47: #{fast_arcnn_forward.10} parent=39 // pred_region
        %p1557 = scmp.lt.s32.totalorder %s16, 3
        %s1558 = scalar_select %p1557, %s16, 3
        %s1559 = smul.addr %s1558, 8
        %s1560 = scalar_lea.vmem %s3, %s1559
      $region48: #{fast_arcnn_forward.10} parent=39 // pred_fallthru
        _
    $region40: #{fast_arcnn_forward.10} parent=5 // pred_fallthru
      _
  $region6: #{fast_arcnn_forward.10} parent=0 // loop_footer
    %s14 = sadd.s32 1, %s10
  $region7: #{fast_arcnn_forward.10} parent=0 // loop_footer_branch
    %9 = sbr.rel target = $region3
  $region8: #{fast_arcnn_forward.10} parent=0 // loop_exit
    _

// kernel: tile.8
$region0: #{tile.8}
  #allocation0 [shape = 's32[1]{0}', space=sflag, size = 0x4, scoped, tag = 'scoped memory for tile.8']
  %s0 = inlined_call_operand.vmem [shape: f32[3], index: 0, kind: input, shape index: {}]
  %s1 = inlined_call_operand.vmem [shape: f32[4,3], index: 1, kind: output, shape index: {}]
  // Predicated region
  $region2: #{tile.8} parent=0 // pred_check
    _
  $region3: #{tile.8} parent=0 // pred_check_branch
    %3 = sbr.rel (0) target = $region5
  $region4: #{tile.8} parent=0 // pred_region
    _
  $region5: #{tile.8} parent=0 // pred_fallthru
    _
  %v4 = vld [vmem:[%s0] ss:$0 sm:$0xff]
  %5 = vst [vmem:[%s1] sm:$0xf] %v4

// kernel: tile.9
$region0: #{tile.9}
  %s0 = inlined_call_operand.vmem [shape: f32[4,3], index: 0, kind: input, shape index: {}]
  %s1 = inlined_call_operand.vmem [shape: f32[12], index: 1, kind: output, shape index: {}]
  $region1: #{tile.9} parent=0
    #allocation0 [shape = 'u8[4096]{0}', space=vmem, size = 0x1000, scoped, tag = 'scoped mem for output reshape']
    #allocation1 [shape = 'u8[4096]{0}', space=vmem, size = 0x1000, scoped, tag = 'scoped mem for input reshape']
    %s3 = sshllo.u32 0, 4
    %v4 = vld [vmem:[%s0] sm:%s3]
    %5 = vst [vmem:[#allocation1] sm:%s3] %v4
    %v6 = vld [vmem:[#allocation1] sm:$0x1]
    %vm7 = vcmask 23552
    %8 = vst.msk [vmem:[#allocation0] sm:$0x1] %vm7, %v6
    %s9 = scalar_lea.vmem [#allocation1], 3
    %v10 = vld [vmem:[%s9] sm:$0x1]
    %11 = vrot.lane.b32.xlu0 %v10, 9
    %v12 = vpop.permute.xlu0 %11
    %vm13 = vcmask 97352
    %14 = vst.msk [vmem:[#allocation0] sm:$0x1] %vm13, %v12
    %s15 = scalar_lea.vmem [#allocation1], 2
    %v16 = vld [vmem:[%s15] sm:$0x1]
    %17 = vrot.lane.b32.xlu0 %v16, 6
    %v18 = vpop.permute.xlu0 %17
    %vm19 = vcmask 72752
    %20 = vst.msk [vmem:[#allocation0] sm:$0x1] %vm19, %v18
    %s21 = scalar_lea.vmem [#allocation1], 1
    %v22 = vld [vmem:[%s21] sm:$0x1]
    %23 = vrot.lane.b32.xlu0 %v22, 3
    %v24 = vpop.permute.xlu0 %23
    %vm25 = vcmask 48152
    %26 = vst.msk [vmem:[#allocation0] sm:$0x1] %vm25, %v24
    %s28 = sshllo.u32 0, 1
    %v30 = vld [vmem:[#allocation0] sm:%s28]
    %s31 = sshllo.u32 0, 1
    %32 = vst [vmem:[%s1] sm:%s31] %v30

// kernel: fast_arcnn_forward.13
$region0: #{fast_arcnn_forward.13}
  #allocation0 [shape = 'u32[]', space=smem, size = 0x4, offset = 0x4, fixed_abs, tag = 'smem constant byte address 0x4 - core index']
  #allocation1 [shape = 'u32[144,128]{1,0:T(1,128)}', space=vmem, size = 0x12000, scoped, tag = 'internal scratch']
  %s0 = inlined_call_operand.vmem [shape: bf16[128,1600], index: 0, kind: input, shape index: {}]
  %s1 = inlined_call_operand.vmem [shape: bf16[1600,128], index: 1, kind: input, shape index: {}]
  %s2 = inlined_call_operand.vmem [shape: f32[1,128], index: 2, kind: input, shape index: {}]
  %s3 = inlined_call_operand.vmem [shape: f32[128,128], index: 3, kind: output, shape index: {}]
  %s4 = sld [smem:[#allocation0]]
  $region45: #{fast_arcnn_forward.13} parent=0
    _
  %s6 = ssub.s32 1, %s4
  %s7 = scalar_select 0, %s6, %s4
  loop: start=0, step=1, limit=6
  $region2: #{fast_arcnn_forward.13} parent=0 // loop_pre_header
    _
  $region3: #{fast_arcnn_forward.13} parent=0 // loop_header
    %s9 = sphi 0, %s13
    %p10 = scmp.ge.s32.totalorder %s9, 6
    %s19 = sphi 0, %s21
    %s22 = sphi 0, %s19
    %s23 = sphi 0, %s22
    %s39 = sphi 0, %s23
    %s43 = sphi 0, %s43
    %s45 = sphi 0, %s43
    %s46 = sphi 0, %s45
    %s60 = sphi 0, %s46
    %s64 = sphi 0, %s64
    %s66 = sphi 0, %s64
    %s67 = sphi 0, %s66
    %s81 = sphi 0, %s67
    %s87 = sphi 0, %s89
    %s90 = sphi 0, %s87
    %s91 = sphi 0, %s90
    %s107 = sphi 0, %s91
  $region4: #{fast_arcnn_forward.13} parent=0 // loop_header_branch
    %12 = sbr.rel (%p10) target = $region8
  $region5: #{fast_arcnn_forward.13} parent=0 // loop_body
    %s14 = ssub.s32 %s9, 1
    %s15 = ssub.s32 %s9, 2
    %s16 = sadd.s32 %s9, 1
    %s17 = ssub.s32 %s9, %s16
    %p18 = scmp.eq.s32.totalorder %s17, 0
    %s20 = sadd.s32 %s19, 1
    %s21 = scalar_select %p18, %s19, %s20
    %p24 = pneg %p18
    %p25 = scmp.eq.s32.totalorder %s9, 3
    %p26 = por %p24, %p25
    %p27 = scmp.ne.s32.totalorder %s19, %s22
    %p28 = scmp.eq.s32.totalorder %s9, 0
    %p29 = por %p27, %p28
    %p30 = scmp.ne.s32.totalorder %s19, %s22
    %p31 = scmp.eq.s32.totalorder %s14, 3
    %p32 = por %p30, %p31
    %p33 = scmp.ne.s32.totalorder %s22, %s23
    %p34 = scmp.eq.s32.totalorder %s14, 0
    %p35 = por %p33, %p34
    %p36 = scmp.ne.s32.totalorder %s22, %s23
    %p37 = scmp.eq.s32.totalorder %s15, 3
    %p38 = por %p36, %p37
    %p40 = scmp.ne.s32.totalorder %s23, %s39
    %p41 = scmp.eq.s32.totalorder %s15, 0
    %p42 = por %p40, %p41
    %s44 = sadd.s32 %s43, 1
    %p47 = scmp.eq.s32.totalorder %s9, 3
    %p48 = scmp.ne.s32.totalorder %s43, %s45
    %p49 = scmp.eq.s32.totalorder %s9, 0
    %p50 = por %p48, %p49
    %p51 = scmp.ne.s32.totalorder %s43, %s45
    %p52 = scmp.eq.s32.totalorder %s14, 3
    %p53 = por %p51, %p52
    %p54 = scmp.ne.s32.totalorder %s45, %s46
    %p55 = scmp.eq.s32.totalorder %s14, 0
    %p56 = por %p54, %p55
    %p57 = scmp.ne.s32.totalorder %s45, %s46
    %p58 = scmp.eq.s32.totalorder %s15, 3
    %p59 = por %p57, %p58
    %p61 = scmp.ne.s32.totalorder %s46, %s60
    %p62 = scmp.eq.s32.totalorder %s15, 0
    %p63 = por %p61, %p62
    %s65 = sadd.s32 %s64, 1
    %p68 = scmp.eq.s32.totalorder %s9, 3
    %p69 = scmp.ne.s32.totalorder %s64, %s66
    %p70 = scmp.eq.s32.totalorder %s9, 0
    %p71 = por %p69, %p70
    %p72 = scmp.ne.s32.totalorder %s64, %s66
    %p73 = scmp.eq.s32.totalorder %s14, 3
    %p74 = por %p72, %p73
    %p75 = scmp.ne.s32.totalorder %s66, %s67
    %p76 = scmp.eq.s32.totalorder %s14, 0
    %p77 = por %p75, %p76
    %p78 = scmp.ne.s32.totalorder %s66, %s67
    %p79 = scmp.eq.s32.totalorder %s15, 3
    %p80 = por %p78, %p79
    %p82 = scmp.ne.s32.totalorder %s67, %s81
    %p83 = scmp.eq.s32.totalorder %s15, 0
    %p84 = por %p82, %p83
    %s85 = ssub.s32 %s9, %s16
    %p86 = scmp.eq.s32.totalorder %s85, 0
    %s88 = sadd.s32 %s87, 1
    %s89 = scalar_select %p86, %s87, %s88
    %p92 = pneg %p86
    %p93 = scmp.eq.s32.totalorder %s9, 3
    %p94 = por %p92, %p93
    %p95 = scmp.ne.s32.totalorder %s87, %s90
    %p96 = scmp.eq.s32.totalorder %s9, 0
    %p97 = por %p95, %p96
    %p98 = scmp.ne.s32.totalorder %s87, %s90
    %p99 = scmp.eq.s32.totalorder %s14, 3
    %p100 = por %p98, %p99
    %p101 = scmp.ne.s32.totalorder %s90, %s91
    %p102 = scmp.eq.s32.totalorder %s14, 0
    %p103 = por %p101, %p102
    %p104 = scmp.ne.s32.totalorder %s90, %s91
    %p105 = scmp.eq.s32.totalorder %s15, 3
    %p106 = por %p104, %p105
    %p108 = scmp.ne.s32.totalorder %s91, %s107
    %p109 = scmp.eq.s32.totalorder %s15, 0
    %p110 = por %p108, %p109
    %p111 = scmp.le.s32.totalorder 1, %s9
    %p112 = scmp.lt.s32.totalorder %s9, 5
    %p113 = pnand %p111, %p112
    %p114 = pneg %p113
    // Predicated region
    $region9: #{fast_arcnn_forward.13} parent=5 // pred_check
      _
    $region10: #{fast_arcnn_forward.13} parent=5 // pred_check_branch
      %116 = sbr.rel (%p113) target = $region12
    $region11: #{fast_arcnn_forward.13} parent=5 // pred_region
      %s117 = ssub.s32 %s9, 1
      // Predicated region
      $region13: #{fast_arcnn_forward.13} parent=11 // pred_check
        %p118 = pneg %p56
      $region14: #{fast_arcnn_forward.13} parent=11 // pred_check_branch
        %120 = sbr.rel (%p118) target = $region16
      $region15: #{fast_arcnn_forward.13} parent=11 // pred_region
        _
      $region16: #{fast_arcnn_forward.13} parent=11 // pred_fallthru
        _
      // Predicated region
      $region17: #{fast_arcnn_forward.13} parent=11 // pred_check
        %p121 = pneg %p77
      $region18: #{fast_arcnn_forward.13} parent=11 // pred_check_branch
        %123 = sbr.rel (%p121) target = $region20
      $region19: #{fast_arcnn_forward.13} parent=11 // pred_region
        _
      $region20: #{fast_arcnn_forward.13} parent=11 // pred_fallthru
        _
    $region12: #{fast_arcnn_forward.13} parent=5 // pred_fallthru
      _
    %p124 = scmp.lt.s32.totalorder %s9, 4
    // Predicated region
    $region21: #{fast_arcnn_forward.13} parent=5 // pred_check
      %p125 = pneg %p124
    $region22: #{fast_arcnn_forward.13} parent=5 // pred_check_branch
      %127 = sbr.rel (%p125) target = $region24
    $region23: #{fast_arcnn_forward.13} parent=5 // pred_region
      // Predicated region
      $region25: #{fast_arcnn_forward.13} parent=23 // pred_check
        %p128 = pneg %p29
      $region26: #{fast_arcnn_forward.13} parent=23 // pred_check_branch
        %130 = sbr.rel (%p128) target = $region28
      $region27: #{fast_arcnn_forward.13} parent=23 // pred_region
        %s131 = smul.u32 4, %s9
        %p132 = scmp.lt.s32.totalorder %s131, 15
        %s133 = scalar_select %p132, %s131, 15
        %s134 = smul.addr %s133, 13
        %s135 = smul.addr %s134, 4
        %s136 = scalar_lea.vmem %s0, %s135
        %s137 = smul.u32 4, %s9
      $region28: #{fast_arcnn_forward.13} parent=23 // pred_fallthru
        _
    $region24: #{fast_arcnn_forward.13} parent=5 // pred_fallthru
      _
    %p138 = scmp.le.s32.totalorder 1, %s9
    %p139 = scmp.lt.s32.totalorder %s9, 5
    %p140 = pnand %p138, %p139
    %p141 = pneg %p140
    // Predicated region
    $region29: #{fast_arcnn_forward.13} parent=5 // pred_check
      _
    $region30: #{fast_arcnn_forward.13} parent=5 // pred_check_branch
      %143 = sbr.rel (%p140) target = $region32
    $region31: #{fast_arcnn_forward.13} parent=5 // pred_region
      %s144 = ssub.s32 %s9, 1
      %s145 = smul.u32 4, %s14
      %p146 = scmp.lt.s32.totalorder %s145, 15
      %s147 = scalar_select %p146, %s145, 15
      %s148 = smul.addr %s147, 13
      %s149 = smul.addr %s148, 4
      %s150 = scalar_lea.vmem %s0, %s149
      %p151 = pneg %p35
      %p152 = pneg %p32
      %p153 = pneg %p56
      %p154 = pneg %p53
      %p155 = pneg %p77
      %p156 = pneg %p74
      %p157 = pneg %p103
      %p158 = pneg %p100
      %s159 = smul.u32 4, %s14
      %p160 = scmp.lt.s32.totalorder %s159, 15
      %s161 = scalar_select %p160, %s159, 15
      %s162 = smul.addr %s161, 8
      %s163 = scalar_lea.vmem %s3, %s162
      %s164 = smul.u32 4, %s14
      %p165 = scmp.lt.s32.totalorder %s164, 15
      %s166 = scalar_select %p165, %s164, 15
      %s167 = smul.addr %s166, 13
      %s168 = smul.addr %s167, 4
      %s169 = scalar_lea.vmem %s0, %s168
      %s170 = smul.u32 4, %s14
      %s171 = smul.u32 4, %s14
      %p172 = scmp.lt.s32.totalorder %s171, 15
      %s173 = scalar_select %p172, %s171, 15
      %s174 = smul.addr %s173, 8
      %s175 = scalar_lea.vmem %s3, %s174
      %s176 = smul.u32 4, %s14
      %v178 = vld [vmem:[%s169] sm:$0xff]
      %v179 = vld [vmem:[%s169 + $0x8] sm:$0xff]
      %v180 = vld [vmem:[%s169 + $0x10] sm:$0xff]
      %v181 = vld [vmem:[%s169 + $0x18] sm:$0xff]
      %v182 = vld [vmem:[%s169 + $0x20] sm:$0xff]
      %v183 = vld [vmem:[%s169 + $0x28] sm:$0xff]
      %v184 = vld [vmem:[%s169 + $0x30] sm:$0xf]
      %v185 = vld [vmem:[%s169 + $0x34] sm:$0xff]
      %v186 = vld [vmem:[%s169 + $0x3c] sm:$0xff]
      %v187 = vld [vmem:[%s169 + $0x44] sm:$0xff]
      %v188 = vld [vmem:[%s169 + $0x4c] sm:$0xff]
      %v189 = vld [vmem:[%s169 + $0x54] sm:$0xff]
      %v190 = vld [vmem:[%s169 + $0x5c] sm:$0xff]
      %v191 = vld [vmem:[%s169 + $0x64] sm:$0xf]
      %v192 = vld [vmem:[%s169 + $0x68] sm:$0xff]
      %v193 = vld [vmem:[%s169 + $0x70] sm:$0xff]
      %v194 = vld [vmem:[%s169 + $0x78] sm:$0xff]
      %v195 = vld [vmem:[%s169 + $0x80] sm:$0xff]
      %v196 = vld [vmem:[%s169 + $0x88] sm:$0xff]
      %v197 = vld [vmem:[%s169 + $0x90] sm:$0xff]
      %v198 = vld [vmem:[%s169 + $0x98] sm:$0xf]
      %v199 = vld [vmem:[%s169 + $0x9c] sm:$0xff]
      %v200 = vld [vmem:[%s169 + $0xa4] sm:$0xff]
      %v201 = vld [vmem:[%s169 + $0xac] sm:$0xff]
      %v202 = vld [vmem:[%s169 + $0xb4] sm:$0xff]
      %v203 = vld [vmem:[%s169 + $0xbc] sm:$0xff]
      %v204 = vld [vmem:[%s169 + $0xc4] sm:$0xff]
      %v205 = vld [vmem:[%s169 + $0xcc] sm:$0xf]
      %v206 = vld [vmem:[%s1] sm:$0xf]
      %v207 = vld [vmem:[%s1 + $0x4] sm:$0xf]
      %v208 = vld [vmem:[%s1 + $0x8] sm:$0xf]
      %v209 = vld [vmem:[%s1 + $0xc] sm:$0xf]
      %v210 = vld [vmem:[%s1 + $0x10] sm:$0xf]
      %v211 = vld [vmem:[%s1 + $0x14] sm:$0xf]
      %v212 = vld [vmem:[%s1 + $0x18] sm:$0xf]
      %v213 = vld [vmem:[%s1 + $0x1c] sm:$0xf]
      %v214 = vld [vmem:[%s1 + $0x20] sm:$0xf]
      %v215 = vld [vmem:[%s1 + $0x24] sm:$0xf]
      %v216 = vld [vmem:[%s1 + $0x28] sm:$0xf]
      %v217 = vld [vmem:[%s1 + $0x2c] sm:$0xf]
      %v218 = vld [vmem:[%s1 + $0x30] sm:$0xf]
      %v219 = vld [vmem:[%s1 + $0x34] sm:$0xf]
      %v220 = vld [vmem:[%s1 + $0x38] sm:$0xf]
      %v221 = vld [vmem:[%s1 + $0x3c] sm:$0xf]
      %v222 = vld [vmem:[%s1 + $0x40] sm:$0xf]
      %v223 = vld [vmem:[%s1 + $0x44] sm:$0xf]
      %v224 = vld [vmem:[%s1 + $0x48] sm:$0xf]
      %v225 = vld [vmem:[%s1 + $0x4c] sm:$0xf]
      %v226 = vld [vmem:[%s1 + $0x50] sm:$0xf]
      %v227 = vld [vmem:[%s1 + $0x54] sm:$0xf]
      %v228 = vld [vmem:[%s1 + $0x58] sm:$0xf]
      %v229 = vld [vmem:[%s1 + $0x5c] sm:$0xf]
      %v230 = vld [vmem:[%s1 + $0x60] sm:$0xf]
      %v231 = vld [vmem:[%s1 + $0x64] sm:$0xf]
      %v232 = vld [vmem:[%s1 + $0x68] sm:$0xf]
      %v233 = vld [vmem:[%s1 + $0x6c] sm:$0xf]
      %v234 = vld [vmem:[%s1 + $0x70] sm:$0xf]
      %v235 = vld [vmem:[%s1 + $0x74] sm:$0xf]
      %v236 = vld [vmem:[%s1 + $0x78] sm:$0xf]
      %v237 = vld [vmem:[%s1 + $0x7c] sm:$0xf]
      %v238 = vld [vmem:[%s1 + $0x80] sm:$0xf]
      %v239 = vld [vmem:[%s1 + $0x84] sm:$0xf]
      %v240 = vld [vmem:[%s1 + $0x88] sm:$0xf]
      %v241 = vld [vmem:[%s1 + $0x8c] sm:$0xf]
      %v242 = vld [vmem:[%s1 + $0x90] sm:$0xf]
      %v243 = vld [vmem:[%s1 + $0x94] sm:$0xf]
      %v244 = vld [vmem:[%s1 + $0x98] sm:$0xf]
      %v245 = vld [vmem:[%s1 + $0x9c] sm:$0xf]
      %v246 = vld [vmem:[%s1 + $0xa0] sm:$0xf]
      %v247 = vld [vmem:[%s1 + $0xa4] sm:$0xf]
      %v248 = vld [vmem:[%s1 + $0xa8] sm:$0xf]
      %v249 = vld [vmem:[%s1 + $0xac] sm:$0xf]
      %v250 = vld [vmem:[%s1 + $0xb0] sm:$0xf]
      %v251 = vld [vmem:[%s1 + $0xb4] sm:$0xf]
      %v252 = vld [vmem:[%s1 + $0xb8] sm:$0xf]
      %v253 = vld [vmem:[%s1 + $0xbc] sm:$0xf]
      %v254 = vld [vmem:[%s1 + $0xc0] sm:$0xf]
      %v255 = vld [vmem:[%s1 + $0xc4] sm:$0xf]
      %v256 = vld [vmem:[%s1 + $0xc8] sm:$0xf]
      %v257 = vld [vmem:[%s1 + $0xcc] sm:$0xf]
      %v258 = vld [vmem:[%s1 + $0xd0] sm:$0xf]
      %v259 = vld [vmem:[%s1 + $0xd4] sm:$0xf]
      %v260 = vld [vmem:[%s1 + $0xd8] sm:$0xf]
      %v261 = vld [vmem:[%s1 + $0xdc] sm:$0xf]
      %v262 = vld [vmem:[%s1 + $0xe0] sm:$0xf]
      %v263 = vld [vmem:[%s1 + $0xe4] sm:$0xf]
      %v264 = vld [vmem:[%s1 + $0xe8] sm:$0xf]
      %v265 = vld [vmem:[%s1 + $0xec] sm:$0xf]
      %v266 = vld [vmem:[%s1 + $0xf0] sm:$0xf]
      %v267 = vld [vmem:[%s1 + $0xf4] sm:$0xf]
      %v268 = vld [vmem:[%s1 + $0xf8] sm:$0xf]
      %v269 = vld [vmem:[%s1 + $0xfc] sm:$0xf]
      %v270 = vld [vmem:[%s1 + $0x100] sm:$0xf]
      %v271 = vld [vmem:[%s1 + $0x104] sm:$0xf]
      %v272 = vld [vmem:[%s1 + $0x108] sm:$0xf]
      %v273 = vld [vmem:[%s1 + $0x10c] sm:$0xf]
      %v274 = vld [vmem:[%s1 + $0x110] sm:$0xf]
      %v275 = vld [vmem:[%s1 + $0x114] sm:$0xf]
      %v276 = vld [vmem:[%s1 + $0x118] sm:$0xf]
      %v277 = vld [vmem:[%s1 + $0x11c] sm:$0xf]
      %v278 = vld [vmem:[%s1 + $0x120] sm:$0xf]
      %v279 = vld [vmem:[%s1 + $0x124] sm:$0xf]
      %v280 = vld [vmem:[%s1 + $0x128] sm:$0xf]
      %v281 = vld [vmem:[%s1 + $0x12c] sm:$0xf]
      %v282 = vld [vmem:[%s1 + $0x130] sm:$0xf]
      %v283 = vld [vmem:[%s1 + $0x134] sm:$0xf]
      %v284 = vld [vmem:[%s1 + $0x138] sm:$0xf]
      %v285 = vld [vmem:[%s1 + $0x13c] sm:$0xf]
      %v286 = vld [vmem:[%s1 + $0x140] sm:$0xf]
      %v287 = vld [vmem:[%s1 + $0x144] sm:$0xf]
      %v288 = vld [vmem:[%s1 + $0x148] sm:$0xf]
      %v289 = vld [vmem:[%s1 + $0x14c] sm:$0xf]
      %v290 = vld [vmem:[%s1 + $0x150] sm:$0xf]
      %v291 = vld [vmem:[%s1 + $0x154] sm:$0xf]
      %v292 = vld [vmem:[%s1 + $0x158] sm:$0xf]
      %v293 = vld [vmem:[%s1 + $0x15c] sm:$0xf]
      %v294 = vld [vmem:[%s1 + $0x160] sm:$0xf]
      %v295 = vld [vmem:[%s1 + $0x164] sm:$0xf]
      %v296 = vld [vmem:[%s1 + $0x168] sm:$0xf]
      %v297 = vld [vmem:[%s1 + $0x16c] sm:$0xf]
      %v298 = vld [vmem:[%s1 + $0x170] sm:$0xf]
      %v299 = vld [vmem:[%s1 + $0x174] sm:$0xf]
      %v300 = vld [vmem:[%s1 + $0x178] sm:$0xf]
      %v301 = vld [vmem:[%s1 + $0x17c] sm:$0xf]
      %v302 = vld [vmem:[%s1 + $0x180] sm:$0xf]
      %v303 = vld [vmem:[%s1 + $0x184] sm:$0xf]
      %v304 = vld [vmem:[%s1 + $0x188] sm:$0xf]
      %v305 = vld [vmem:[%s1 + $0x18c] sm:$0xf]
      %v306 = vld [vmem:[%s1 + $0x190] sm:$0xf]
      %v307 = vld [vmem:[%s1 + $0x194] sm:$0xf]
      %v308 = vld [vmem:[%s1 + $0x198] sm:$0xf]
      %v309 = vld [vmem:[%s1 + $0x19c] sm:$0xf]
      %v310 = vld [vmem:[%s1 + $0x1a0] sm:$0xf]
      %v311 = vld [vmem:[%s1 + $0x1a4] sm:$0xf]
      %v312 = vld [vmem:[%s1 + $0x1a8] sm:$0xf]
      %v313 = vld [vmem:[%s1 + $0x1ac] sm:$0xf]
      %v314 = vld [vmem:[%s1 + $0x1b0] sm:$0xf]
      %v315 = vld [vmem:[%s1 + $0x1b4] sm:$0xf]
      %v316 = vld [vmem:[%s1 + $0x1b8] sm:$0xf]
      %v317 = vld [vmem:[%s1 + $0x1bc] sm:$0xf]
      %v318 = vld [vmem:[%s1 + $0x1c0] sm:$0xf]
      %v319 = vld [vmem:[%s1 + $0x1c4] sm:$0xf]
      %v320 = vld [vmem:[%s1 + $0x1c8] sm:$0xf]
      %v321 = vld [vmem:[%s1 + $0x1cc] sm:$0xf]
      %v322 = vld [vmem:[%s1 + $0x1d0] sm:$0xf]
      %v323 = vld [vmem:[%s1 + $0x1d4] sm:$0xf]
      %v324 = vld [vmem:[%s1 + $0x1d8] sm:$0xf]
      %v325 = vld [vmem:[%s1 + $0x1dc] sm:$0xf]
      %v326 = vld [vmem:[%s1 + $0x1e0] sm:$0xf]
      %v327 = vld [vmem:[%s1 + $0x1e4] sm:$0xf]
      %v328 = vld [vmem:[%s1 + $0x1e8] sm:$0xf]
      %v329 = vld [vmem:[%s1 + $0x1ec] sm:$0xf]
      %v330 = vld [vmem:[%s1 + $0x1f0] sm:$0xf]
      %v331 = vld [vmem:[%s1 + $0x1f4] sm:$0xf]
      %v332 = vld [vmem:[%s1 + $0x1f8] sm:$0xf]
      %v333 = vld [vmem:[%s1 + $0x1fc] sm:$0xf]
      %v334 = vld [vmem:[%s1 + $0x200] sm:$0xf]
      %v335 = vld [vmem:[%s1 + $0x204] sm:$0xf]
      %v336 = vld [vmem:[%s1 + $0x208] sm:$0xf]
      %v337 = vld [vmem:[%s1 + $0x20c] sm:$0xf]
      %v338 = vld [vmem:[%s1 + $0x210] sm:$0xf]
      %v339 = vld [vmem:[%s1 + $0x214] sm:$0xf]
      %v340 = vld [vmem:[%s1 + $0x218] sm:$0xf]
      %v341 = vld [vmem:[%s1 + $0x21c] sm:$0xf]
      %v342 = vld [vmem:[%s1 + $0x220] sm:$0xf]
      %v343 = vld [vmem:[%s1 + $0x224] sm:$0xf]
      %v344 = vld [vmem:[%s1 + $0x228] sm:$0xf]
      %v345 = vld [vmem:[%s1 + $0x22c] sm:$0xf]
      %v346 = vld [vmem:[%s1 + $0x230] sm:$0xf]
      %v347 = vld [vmem:[%s1 + $0x234] sm:$0xf]
      %v348 = vld [vmem:[%s1 + $0x238] sm:$0xf]
      %v349 = vld [vmem:[%s1 + $0x23c] sm:$0xf]
      %v350 = vld [vmem:[%s1 + $0x240] sm:$0xf]
      %v351 = vld [vmem:[%s1 + $0x244] sm:$0xf]
      %v352 = vld [vmem:[%s1 + $0x248] sm:$0xf]
      %v353 = vld [vmem:[%s1 + $0x24c] sm:$0xf]
      %v354 = vld [vmem:[%s1 + $0x250] sm:$0xf]
      %v355 = vld [vmem:[%s1 + $0x254] sm:$0xf]
      %v356 = vld [vmem:[%s1 + $0x258] sm:$0xf]
      %v357 = vld [vmem:[%s1 + $0x25c] sm:$0xf]
      %v358 = vld [vmem:[%s1 + $0x260] sm:$0xf]
      %v359 = vld [vmem:[%s1 + $0x264] sm:$0xf]
      %v360 = vld [vmem:[%s1 + $0x268] sm:$0xf]
      %v361 = vld [vmem:[%s1 + $0x26c] sm:$0xf]
      %v362 = vld [vmem:[%s1 + $0x270] sm:$0xf]
      %v363 = vld [vmem:[%s1 + $0x274] sm:$0xf]
      %v364 = vld [vmem:[%s1 + $0x278] sm:$0xf]
      %v365 = vld [vmem:[%s1 + $0x27c] sm:$0xf]
      %v366 = vld [vmem:[%s1 + $0x280] sm:$0xf]
      %v367 = vld [vmem:[%s1 + $0x284] sm:$0xf]
      %v368 = vld [vmem:[%s1 + $0x288] sm:$0xf]
      %v369 = vld [vmem:[%s1 + $0x28c] sm:$0xf]
      %v370 = vld [vmem:[%s1 + $0x290] sm:$0xf]
      %v371 = vld [vmem:[%s1 + $0x294] sm:$0xf]
      %v372 = vld [vmem:[%s1 + $0x298] sm:$0xf]
      %v373 = vld [vmem:[%s1 + $0x29c] sm:$0xf]
      %v374 = vld [vmem:[%s1 + $0x2a0] sm:$0xf]
      %v375 = vld [vmem:[%s1 + $0x2a4] sm:$0xf]
      %v376 = vld [vmem:[%s1 + $0x2a8] sm:$0xf]
      %v377 = vld [vmem:[%s1 + $0x2ac] sm:$0xf]
      %v378 = vld [vmem:[%s1 + $0x2b0] sm:$0xf]
      %v379 = vld [vmem:[%s1 + $0x2b4] sm:$0xf]
      %v380 = vld [vmem:[%s1 + $0x2b8] sm:$0xf]
      %v381 = vld [vmem:[%s1 + $0x2bc] sm:$0xf]
      %v382 = vld [vmem:[%s1 + $0x2c0] sm:$0xf]
      %v383 = vld [vmem:[%s1 + $0x2c4] sm:$0xf]
      %v384 = vld [vmem:[%s1 + $0x2c8] sm:$0xf]
      %v385 = vld [vmem:[%s1 + $0x2cc] sm:$0xf]
      %v386 = vld [vmem:[%s1 + $0x2d0] sm:$0xf]
      %v387 = vld [vmem:[%s1 + $0x2d4] sm:$0xf]
      %v388 = vld [vmem:[%s1 + $0x2d8] sm:$0xf]
      %v389 = vld [vmem:[%s1 + $0x2dc] sm:$0xf]
      %v390 = vld [vmem:[%s1 + $0x2e0] sm:$0xf]
      %v391 = vld [vmem:[%s1 + $0x2e4] sm:$0xf]
      %v392 = vld [vmem:[%s1 + $0x2e8] sm:$0xf]
      %v393 = vld [vmem:[%s1 + $0x2ec] sm:$0xf]
      %v394 = vld [vmem:[%s1 + $0x2f0] sm:$0xf]
      %v395 = vld [vmem:[%s1 + $0x2f4] sm:$0xf]
      %v396 = vld [vmem:[%s1 + $0x2f8] sm:$0xf]
      %v397 = vld [vmem:[%s1 + $0x2fc] sm:$0xf]
      %v398 = vld [vmem:[%s1 + $0x300] sm:$0xf]
      %v399 = vld [vmem:[%s1 + $0x304] sm:$0xf]
      %v400 = vld [vmem:[%s1 + $0x308] sm:$0xf]
      %v401 = vld [vmem:[%s1 + $0x30c] sm:$0xf]
      %v402 = vld [vmem:[%s1 + $0x310] sm:$0xf]
      %v403 = vld [vmem:[%s1 + $0x314] sm:$0xf]
      %v404 = vld [vmem:[%s1 + $0x318] sm:$0xf]
      %v405 = vld [vmem:[%s1 + $0x31c] sm:$0xf]
      %v406 = vld [vmem:[%s2] sm:$0x1]
      %v408 = vlaneseq
      %v409 = vshrl.u32 %v408, 7
      %v410 = vsub.s32 0, %v409
      %v411 = vrot.slane %v406, %v410
      %v441 = vunpack.c.l.b16 %v178
      %v442 = vunpack.c.h.b16 %v178
      %v443 = vunpack.c.l.b16 %v179
      %v444 = vunpack.c.h.b16 %v179
      %v445 = vunpack.c.l.b16 %v180
      %v446 = vunpack.c.h.b16 %v180
      %v447 = vunpack.c.l.b16 %v181
      %v448 = vunpack.c.h.b16 %v181
      %v449 = vunpack.c.l.b16 %v182
      %v450 = vunpack.c.h.b16 %v182
      %v451 = vunpack.c.l.b16 %v183
      %v452 = vunpack.c.h.b16 %v183
      %v453 = vunpack.c.l.b16 %v184
      %v454 = vunpack.c.l.b16 %v185
      %v455 = vunpack.c.h.b16 %v185
      %v456 = vunpack.c.l.b16 %v186
      %v457 = vunpack.c.h.b16 %v186
      %v458 = vunpack.c.l.b16 %v187
      %v459 = vunpack.c.h.b16 %v187
      %v460 = vunpack.c.l.b16 %v188
      %v461 = vunpack.c.h.b16 %v188
      %v462 = vunpack.c.l.b16 %v189
      %v463 = vunpack.c.h.b16 %v189
      %v464 = vunpack.c.l.b16 %v190
      %v465 = vunpack.c.h.b16 %v190
      %v466 = vunpack.c.l.b16 %v191
      %v467 = vunpack.c.l.b16 %v192
      %v468 = vunpack.c.h.b16 %v192
      %v469 = vunpack.c.l.b16 %v193
      %v470 = vunpack.c.h.b16 %v193
      %v471 = vunpack.c.l.b16 %v194
      %v472 = vunpack.c.h.b16 %v194
      %v473 = vunpack.c.l.b16 %v195
      %v474 = vunpack.c.h.b16 %v195
      %v475 = vunpack.c.l.b16 %v196
      %v476 = vunpack.c.h.b16 %v196
      %v477 = vunpack.c.l.b16 %v197
      %v478 = vunpack.c.h.b16 %v197
      %v479 = vunpack.c.l.b16 %v198
      %v480 = vunpack.c.l.b16 %v199
      %v481 = vunpack.c.h.b16 %v199
      %v482 = vunpack.c.l.b16 %v200
      %v483 = vunpack.c.h.b16 %v200
      %v484 = vunpack.c.l.b16 %v201
      %v485 = vunpack.c.h.b16 %v201
      %v486 = vunpack.c.l.b16 %v202
      %v487 = vunpack.c.h.b16 %v202
      %v488 = vunpack.c.l.b16 %v203
      %v489 = vunpack.c.h.b16 %v203
      %v490 = vunpack.c.l.b16 %v204
      %v491 = vunpack.c.h.b16 %v204
      %v492 = vunpack.c.l.b16 %v205
      %v493 = vpack.c.b16 %v454, %v441
      %v494 = vpack.c.b16 %v455, %v442
      %v495 = vpack.c.b16 %v456, %v443
      %v496 = vpack.c.b16 %v457, %v444
      %v497 = vpack.c.b16 %v458, %v445
      %v498 = vpack.c.b16 %v459, %v446
      %v499 = vpack.c.b16 %v460, %v447
      %v500 = vpack.c.b16 %v461, %v448
      %v501 = vpack.c.b16 %v462, %v449
      %v502 = vpack.c.b16 %v463, %v450
      %v503 = vpack.c.b16 %v464, %v451
      %v504 = vpack.c.b16 %v465, %v452
      %v505 = vpack.c.b16 %v466, %v453
      %v506 = vpack.c.b16 %v480, %v467
      %v507 = vpack.c.b16 %v481, %v468
      %v508 = vpack.c.b16 %v482, %v469
      %v509 = vpack.c.b16 %v483, %v470
      %v510 = vpack.c.b16 %v484, %v471
      %v511 = vpack.c.b16 %v485, %v472
      %v512 = vpack.c.b16 %v486, %v473
      %v513 = vpack.c.b16 %v487, %v474
      %v514 = vpack.c.b16 %v488, %v475
      %v515 = vpack.c.b16 %v489, %v476
      %v516 = vpack.c.b16 %v490, %v477
      %v517 = vpack.c.b16 %v491, %v478
      %v518 = vpack.c.b16 %v492, %v479
      %v743 = vunpack.c.l.b16 %v206
      %v744 = vunpack.c.l.b16 %v207
      %v745 = vunpack.c.l.b16 %v208
      %v746 = vunpack.c.l.b16 %v209
      %v747 = vunpack.c.l.b16 %v210
      %v748 = vunpack.c.l.b16 %v211
      %v749 = vunpack.c.l.b16 %v212
      %v750 = vunpack.c.l.b16 %v213
      %v751 = vunpack.c.l.b16 %v214
      %v752 = vunpack.c.l.b16 %v215
      %v753 = vunpack.c.l.b16 %v216
      %v754 = vunpack.c.l.b16 %v217
      %v755 = vunpack.c.l.b16 %v218
      %v756 = vunpack.c.l.b16 %v219
      %v757 = vunpack.c.l.b16 %v220
      %v758 = vunpack.c.l.b16 %v221
      %v759 = vunpack.c.l.b16 %v222
      %v760 = vunpack.c.l.b16 %v223
      %v761 = vunpack.c.l.b16 %v224
      %v762 = vunpack.c.l.b16 %v225
      %v763 = vunpack.c.l.b16 %v226
      %v764 = vunpack.c.l.b16 %v227
      %v765 = vunpack.c.l.b16 %v228
      %v766 = vunpack.c.l.b16 %v229
      %v767 = vunpack.c.l.b16 %v230
      %v768 = vunpack.c.l.b16 %v231
      %v769 = vunpack.c.l.b16 %v232
      %v770 = vunpack.c.l.b16 %v233
      %v771 = vunpack.c.l.b16 %v234
      %v772 = vunpack.c.l.b16 %v235
      %v773 = vunpack.c.l.b16 %v236
      %v774 = vunpack.c.l.b16 %v237
      %v775 = vunpack.c.l.b16 %v238
      %v776 = vunpack.c.l.b16 %v239
      %v777 = vunpack.c.l.b16 %v240
      %v778 = vunpack.c.l.b16 %v241
      %v779 = vunpack.c.l.b16 %v242
      %v780 = vunpack.c.l.b16 %v243
      %v781 = vunpack.c.l.b16 %v244
      %v782 = vunpack.c.l.b16 %v245
      %v783 = vunpack.c.l.b16 %v246
      %v784 = vunpack.c.l.b16 %v247
      %v785 = vunpack.c.l.b16 %v248
      %v786 = vunpack.c.l.b16 %v249
      %v787 = vunpack.c.l.b16 %v250
      %v788 = vunpack.c.l.b16 %v251
      %v789 = vunpack.c.l.b16 %v252
      %v790 = vunpack.c.l.b16 %v253
      %v791 = vunpack.c.l.b16 %v254
      %v792 = vunpack.c.l.b16 %v255
      %v793 = vunpack.c.l.b16 %v256
      %v794 = vunpack.c.l.b16 %v257
      %v795 = vunpack.c.l.b16 %v258
      %v796 = vunpack.c.l.b16 %v259
      %v797 = vunpack.c.l.b16 %v260
      %v798 = vunpack.c.l.b16 %v261
      %v799 = vunpack.c.l.b16 %v262
      %v800 = vunpack.c.l.b16 %v263
      %v801 = vunpack.c.l.b16 %v264
      %v802 = vunpack.c.l.b16 %v265
      %v803 = vunpack.c.l.b16 %v266
      %v804 = vunpack.c.l.b16 %v267
      %v805 = vunpack.c.l.b16 %v268
      %v806 = vunpack.c.l.b16 %v269
      %v807 = vunpack.c.l.b16 %v270
      %v808 = vunpack.c.l.b16 %v271
      %v809 = vunpack.c.l.b16 %v272
      %v810 = vunpack.c.l.b16 %v273
      %v811 = vunpack.c.l.b16 %v274
      %v812 = vunpack.c.l.b16 %v275
      %v813 = vunpack.c.l.b16 %v276
      %v814 = vunpack.c.l.b16 %v277
      %v815 = vunpack.c.l.b16 %v278
      %v816 = vunpack.c.l.b16 %v279
      %v817 = vunpack.c.l.b16 %v280
      %v818 = vunpack.c.l.b16 %v281
      %v819 = vunpack.c.l.b16 %v282
      %v820 = vunpack.c.l.b16 %v283
      %v821 = vunpack.c.l.b16 %v284
      %v822 = vunpack.c.l.b16 %v285
      %v823 = vunpack.c.l.b16 %v286
      %v824 = vunpack.c.l.b16 %v287
      %v825 = vunpack.c.l.b16 %v288
      %v826 = vunpack.c.l.b16 %v289
      %v827 = vunpack.c.l.b16 %v290
      %v828 = vunpack.c.l.b16 %v291
      %v829 = vunpack.c.l.b16 %v292
      %v830 = vunpack.c.l.b16 %v293
      %v831 = vunpack.c.l.b16 %v294
      %v832 = vunpack.c.l.b16 %v295
      %v833 = vunpack.c.l.b16 %v296
      %v834 = vunpack.c.l.b16 %v297
      %v835 = vunpack.c.l.b16 %v298
      %v836 = vunpack.c.l.b16 %v299
      %v837 = vunpack.c.l.b16 %v300
      %v838 = vunpack.c.l.b16 %v301
      %v839 = vunpack.c.l.b16 %v302
      %v840 = vunpack.c.l.b16 %v303
      %v841 = vunpack.c.l.b16 %v304
      %v842 = vunpack.c.l.b16 %v305
      %v843 = vunpack.c.l.b16 %v306
      %v844 = vunpack.c.l.b16 %v307
      %v845 = vunpack.c.l.b16 %v308
      %v846 = vunpack.c.l.b16 %v309
      %v847 = vunpack.c.l.b16 %v310
      %v848 = vunpack.c.l.b16 %v311
      %v849 = vunpack.c.l.b16 %v312
      %v850 = vunpack.c.l.b16 %v313
      %v851 = vunpack.c.l.b16 %v314
      %v852 = vunpack.c.l.b16 %v315
      %v853 = vunpack.c.l.b16 %v316
      %v854 = vunpack.c.l.b16 %v317
      %v855 = vunpack.c.l.b16 %v318
      %v856 = vunpack.c.l.b16 %v319
      %v857 = vunpack.c.l.b16 %v320
      %v858 = vunpack.c.l.b16 %v321
      %v859 = vunpack.c.l.b16 %v322
      %v860 = vunpack.c.l.b16 %v323
      %v861 = vunpack.c.l.b16 %v324
      %v862 = vunpack.c.l.b16 %v325
      %v863 = vunpack.c.l.b16 %v326
      %v864 = vunpack.c.l.b16 %v327
      %v865 = vunpack.c.l.b16 %v328
      %v866 = vunpack.c.l.b16 %v329
      %v867 = vunpack.c.l.b16 %v330
      %v868 = vunpack.c.l.b16 %v331
      %v869 = vunpack.c.l.b16 %v332
      %v870 = vunpack.c.l.b16 %v333
      %v871 = vunpack.c.l.b16 %v334
      %v872 = vunpack.c.l.b16 %v335
      %v873 = vunpack.c.l.b16 %v336
      %v874 = vunpack.c.l.b16 %v337
      %v875 = vunpack.c.l.b16 %v338
      %v876 = vunpack.c.l.b16 %v339
      %v877 = vunpack.c.l.b16 %v340
      %v878 = vunpack.c.l.b16 %v341
      %v879 = vunpack.c.l.b16 %v342
      %v880 = vunpack.c.l.b16 %v343
      %v881 = vunpack.c.l.b16 %v344
      %v882 = vunpack.c.l.b16 %v345
      %v883 = vunpack.c.l.b16 %v346
      %v884 = vunpack.c.l.b16 %v347
      %v885 = vunpack.c.l.b16 %v348
      %v886 = vunpack.c.l.b16 %v349
      %v887 = vunpack.c.l.b16 %v350
      %v888 = vunpack.c.l.b16 %v351
      %v889 = vunpack.c.l.b16 %v352
      %v890 = vunpack.c.l.b16 %v353
      %v891 = vunpack.c.l.b16 %v354
      %v892 = vunpack.c.l.b16 %v355
      %v893 = vunpack.c.l.b16 %v356
      %v894 = vunpack.c.l.b16 %v357
      %v895 = vunpack.c.l.b16 %v358
      %v896 = vunpack.c.l.b16 %v359
      %v897 = vunpack.c.l.b16 %v360
      %v898 = vunpack.c.l.b16 %v361
      %v899 = vunpack.c.l.b16 %v362
      %v900 = vunpack.c.l.b16 %v363
      %v901 = vunpack.c.l.b16 %v364
      %v902 = vunpack.c.l.b16 %v365
      %v903 = vunpack.c.l.b16 %v366
      %v904 = vunpack.c.l.b16 %v367
      %v905 = vunpack.c.l.b16 %v368
      %v906 = vunpack.c.l.b16 %v369
      %v907 = vunpack.c.l.b16 %v370
      %v908 = vunpack.c.l.b16 %v371
      %v909 = vunpack.c.l.b16 %v372
      %v910 = vunpack.c.l.b16 %v373
      %v911 = vunpack.c.l.b16 %v374
      %v912 = vunpack.c.l.b16 %v375
      %v913 = vunpack.c.l.b16 %v376
      %v914 = vunpack.c.l.b16 %v377
      %v915 = vunpack.c.l.b16 %v378
      %v916 = vunpack.c.l.b16 %v379
      %v917 = vunpack.c.l.b16 %v380
      %v918 = vunpack.c.l.b16 %v381
      %v919 = vunpack.c.l.b16 %v382
      %v920 = vunpack.c.l.b16 %v383
      %v921 = vunpack.c.l.b16 %v384
      %v922 = vunpack.c.l.b16 %v385
      %v923 = vunpack.c.l.b16 %v386
      %v924 = vunpack.c.l.b16 %v387
      %v925 = vunpack.c.l.b16 %v388
      %v926 = vunpack.c.l.b16 %v389
      %v927 = vunpack.c.l.b16 %v390
      %v928 = vunpack.c.l.b16 %v391
      %v929 = vunpack.c.l.b16 %v392
      %v930 = vunpack.c.l.b16 %v393
      %v931 = vunpack.c.l.b16 %v394
      %v932 = vunpack.c.l.b16 %v395
      %v933 = vunpack.c.l.b16 %v396
      %v934 = vunpack.c.l.b16 %v397
      %v935 = vunpack.c.l.b16 %v398
      %v936 = vunpack.c.l.b16 %v399
      %v937 = vunpack.c.l.b16 %v400
      %v938 = vunpack.c.l.b16 %v401
      %v939 = vunpack.c.l.b16 %v402
      %v940 = vunpack.c.l.b16 %v403
      %v941 = vunpack.c.l.b16 %v404
      %v942 = vunpack.c.l.b16 %v405
      %v943 = vpack.c.b16 %v744, %v743
      %v944 = vpack.c.b16 %v746, %v745
      %v945 = vpack.c.b16 %v748, %v747
      %v946 = vpack.c.b16 %v750, %v749
      %v947 = vpack.c.b16 %v752, %v751
      %v948 = vpack.c.b16 %v754, %v753
      %v949 = vpack.c.b16 %v756, %v755
      %v950 = vpack.c.b16 %v758, %v757
      %v951 = vpack.c.b16 %v760, %v759
      %v952 = vpack.c.b16 %v762, %v761
      %v953 = vpack.c.b16 %v764, %v763
      %v954 = vpack.c.b16 %v766, %v765
      %v955 = vpack.c.b16 %v768, %v767
      %v956 = vpack.c.b16 %v770, %v769
      %v957 = vpack.c.b16 %v772, %v771
      %v958 = vpack.c.b16 %v774, %v773
      %v959 = vpack.c.b16 %v776, %v775
      %v960 = vpack.c.b16 %v778, %v777
      %v961 = vpack.c.b16 %v780, %v779
      %v962 = vpack.c.b16 %v782, %v781
      %v963 = vpack.c.b16 %v784, %v783
      %v964 = vpack.c.b16 %v786, %v785
      %v965 = vpack.c.b16 %v788, %v787
      %v966 = vpack.c.b16 %v790, %v789
      %v967 = vpack.c.b16 %v792, %v791
      %v968 = vpack.c.b16 %v794, %v793
      %v969 = vpack.c.b16 %v796, %v795
      %v970 = vpack.c.b16 %v798, %v797
      %v971 = vpack.c.b16 %v800, %v799
      %v972 = vpack.c.b16 %v802, %v801
      %v973 = vpack.c.b16 %v804, %v803
      %v974 = vpack.c.b16 %v806, %v805
      %v975 = vpack.c.b16 %v808, %v807
      %v976 = vpack.c.b16 %v810, %v809
      %v977 = vpack.c.b16 %v812, %v811
      %v978 = vpack.c.b16 %v814, %v813
      %v979 = vpack.c.b16 %v816, %v815
      %v980 = vpack.c.b16 %v818, %v817
      %v981 = vpack.c.b16 %v820, %v819
      %v982 = vpack.c.b16 %v822, %v821
      %v983 = vpack.c.b16 %v824, %v823
      %v984 = vpack.c.b16 %v826, %v825
      %v985 = vpack.c.b16 %v828, %v827
      %v986 = vpack.c.b16 %v830, %v829
      %v987 = vpack.c.b16 %v832, %v831
      %v988 = vpack.c.b16 %v834, %v833
      %v989 = vpack.c.b16 %v836, %v835
      %v990 = vpack.c.b16 %v838, %v837
      %v991 = vpack.c.b16 %v840, %v839
      %v992 = vpack.c.b16 %v842, %v841
      %v993 = vpack.c.b16 %v844, %v843
      %v994 = vpack.c.b16 %v846, %v845
      %v995 = vpack.c.b16 %v848, %v847
      %v996 = vpack.c.b16 %v850, %v849
      %v997 = vpack.c.b16 %v852, %v851
      %v998 = vpack.c.b16 %v854, %v853
      %v999 = vpack.c.b16 %v856, %v855
      %v1000 = vpack.c.b16 %v858, %v857
      %v1001 = vpack.c.b16 %v860, %v859
      %v1002 = vpack.c.b16 %v862, %v861
      %v1003 = vpack.c.b16 %v864, %v863
      %v1004 = vpack.c.b16 %v866, %v865
      %v1005 = vpack.c.b16 %v868, %v867
      %v1006 = vpack.c.b16 %v870, %v869
      %v1007 = vpack.c.b16 %v872, %v871
      %v1008 = vpack.c.b16 %v874, %v873
      %v1009 = vpack.c.b16 %v876, %v875
      %v1010 = vpack.c.b16 %v878, %v877
      %v1011 = vpack.c.b16 %v880, %v879
      %v1012 = vpack.c.b16 %v882, %v881
      %v1013 = vpack.c.b16 %v884, %v883
      %v1014 = vpack.c.b16 %v886, %v885
      %v1015 = vpack.c.b16 %v888, %v887
      %v1016 = vpack.c.b16 %v890, %v889
      %v1017 = vpack.c.b16 %v892, %v891
      %v1018 = vpack.c.b16 %v894, %v893
      %v1019 = vpack.c.b16 %v896, %v895
      %v1020 = vpack.c.b16 %v898, %v897
      %v1021 = vpack.c.b16 %v900, %v899
      %v1022 = vpack.c.b16 %v902, %v901
      %v1023 = vpack.c.b16 %v904, %v903
      %v1024 = vpack.c.b16 %v906, %v905
      %v1025 = vpack.c.b16 %v908, %v907
      %v1026 = vpack.c.b16 %v910, %v909
      %v1027 = vpack.c.b16 %v912, %v911
      %v1028 = vpack.c.b16 %v914, %v913
      %v1029 = vpack.c.b16 %v916, %v915
      %v1030 = vpack.c.b16 %v918, %v917
      %v1031 = vpack.c.b16 %v920, %v919
      %v1032 = vpack.c.b16 %v922, %v921
      %v1033 = vpack.c.b16 %v924, %v923
      %v1034 = vpack.c.b16 %v926, %v925
      %v1035 = vpack.c.b16 %v928, %v927
      %v1036 = vpack.c.b16 %v930, %v929
      %v1037 = vpack.c.b16 %v932, %v931
      %v1038 = vpack.c.b16 %v934, %v933
      %v1039 = vpack.c.b16 %v936, %v935
      %v1040 = vpack.c.b16 %v938, %v937
      %v1041 = vpack.c.b16 %v940, %v939
      %v1042 = vpack.c.b16 %v942, %v941
      %vm1143 = vcmask 523264
      %v1145 = vsel %vm1143, %v505, 0
      %v1148 = vsel %vm1143, %v518, 0
      %1150 = vmatprep.subr.bf16.mxu0 0
      %1151 = vmatpush1.bf16.msra.mxu0 %v943
      %1152 = vmatprep.subr.bf16.mxu0 0
      %1153 = vmatpush1.bf16.msra.mxu0 %v944
      %1154 = vmatprep.subr.bf16.mxu0 0
      %1155 = vmatpush1.bf16.msra.mxu0 %v945
      %1156 = vmatprep.subr.bf16.mxu0 0
      %1157 = vmatpush1.bf16.msra.mxu0 %v946
      %1158 = vmatprep.subr.bf16.mxu0 0
      %1159 = vmatpush1.bf16.msra.mxu0 %v947
      %1160 = vmatprep.subr.bf16.mxu0 0
      %1161 = vmatpush1.bf16.msra.mxu0 %v948
      %1162 = vmatprep.subr.bf16.mxu0 0
      %1163 = vmatpush1.bf16.msra.mxu0 %v949
      %1164 = vmatprep.subr.bf16.mxu0 0
      %1165 = vmatpush1.bf16.msra.mxu0 %v950
      %1166 = vmatprep.subr.bf16.mxu0 0
      %1167 = vmatpush1.bf16.msra.mxu0 %v951
      %1168 = vmatprep.subr.bf16.mxu0 0
      %1169 = vmatpush1.bf16.msra.mxu0 %v952
      %1170 = vmatprep.subr.bf16.mxu0 0
      %1171 = vmatpush1.bf16.msra.mxu0 %v953
      %1172 = vmatprep.subr.bf16.mxu0 0
      %1173 = vmatpush1.bf16.msra.mxu0 %v954
      %1174 = vmatprep.subr.bf16.mxu0 0
      %1175 = vmatpush1.bf16.msra.mxu0 %v955
      %1176 = vmatprep.subr.bf16.mxu0 0
      %1177 = vmatpush1.bf16.msra.mxu0 %v956
      %1178 = vmatprep.subr.bf16.mxu0 0
      %1179 = vmatpush1.bf16.msra.mxu0 %v957
      %1180 = vmatprep.subr.bf16.mxu0 0
      %1181 = vmatpush1.bf16.msra.mxu0 %v958
      %1182 = vmatprep.mubr.bf16.mxu0 %v494
      %1183 = vmatmul.mubr.bf16.gmra.mrb[0].mxu0 %v493
      %v1184 = vpop.f32.mrb[0].mxu0
      %v1185 = vadd.f32 %v411, %v1184
      %v1186 = vpop.f32.mrb[0].mxu0
      %v1187 = vpop.f32.mrb[0].mxu0
      %v1188 = vadd.f32 %v411, %v1187
      %v1189 = vpop.f32.mrb[0].mxu0
      %1190 = vmatprep.mubr.bf16.mxu0 %v507
      %1191 = vmatmul.mubr.bf16.gmra.mrb[0].mxu0 %v506
      %v1192 = vpop.f32.mrb[0].mxu0
      %v1193 = vadd.f32 %v411, %v1192
      %v1194 = vpop.f32.mrb[0].mxu0
      %v1195 = vpop.f32.mrb[0].mxu0
      %v1196 = vadd.f32 %v411, %v1195
      %v1197 = vpop.f32.mrb[0].mxu0
      %1198 = vdwg.mxu0
      %1199 = vmatprep.subr.bf16.mxu0 0
      %1200 = vmatpush1.bf16.msra.mxu0 %v959
      %1201 = vmatprep.subr.bf16.mxu0 0
      %1202 = vmatpush1.bf16.msra.mxu0 %v960
      %1203 = vmatprep.subr.bf16.mxu0 0
      %1204 = vmatpush1.bf16.msra.mxu0 %v961
      %1205 = vmatprep.subr.bf16.mxu0 0
      %1206 = vmatpush1.bf16.msra.mxu0 %v962
      %1207 = vmatprep.subr.bf16.mxu0 0
      %1208 = vmatpush1.bf16.msra.mxu0 %v963
      %1209 = vmatprep.subr.bf16.mxu0 0
      %1210 = vmatpush1.bf16.msra.mxu0 %v964
      %1211 = vmatprep.subr.bf16.mxu0 0
      %1212 = vmatpush1.bf16.msra.mxu0 %v965
      %1213 = vmatprep.subr.bf16.mxu0 0
      %1214 = vmatpush1.bf16.msra.mxu0 %v966
      %1215 = vmatprep.subr.bf16.mxu0 0
      %1216 = vmatpush1.bf16.msra.mxu0 %v967
      %1217 = vmatprep.subr.bf16.mxu0 0
      %1218 = vmatpush1.bf16.msra.mxu0 %v968
      %1219 = vmatprep.subr.bf16.mxu0 0
      %1220 = vmatpush1.bf16.msra.mxu0 %v969
      %1221 = vmatprep.subr.bf16.mxu0 0
      %1222 = vmatpush1.bf16.msra.mxu0 %v970
      %1223 = vmatprep.subr.bf16.mxu0 0
      %1224 = vmatpush1.bf16.msra.mxu0 %v971
      %1225 = vmatprep.subr.bf16.mxu0 0
      %1226 = vmatpush1.bf16.msra.mxu0 %v972
      %1227 = vmatprep.subr.bf16.mxu0 0
      %1228 = vmatpush1.bf16.msra.mxu0 %v973
      %1229 = vmatprep.subr.bf16.mxu0 0
      %1230 = vmatpush1.bf16.msra.mxu0 %v974
      %1231 = vmatprep.mubr.bf16.mxu0 %v496
      %1232 = vmatmul.mubr.bf16.gmra.mrb[0].mxu0 %v495
      %v1233 = vpop.f32.mrb[0].mxu0
      %v1234 = vadd.f32 %v1185, %v1233
      %v1235 = vpop.f32.mrb[0].mxu0
      %v1236 = vpop.f32.mrb[0].mxu0
      %v1237 = vadd.f32 %v1188, %v1236
      %v1238 = vpop.f32.mrb[0].mxu0
      %1239 = vmatprep.mubr.bf16.mxu0 %v509
      %1240 = vmatmul.mubr.bf16.gmra.mrb[0].mxu0 %v508
      %v1241 = vpop.f32.mrb[0].mxu0
      %v1242 = vadd.f32 %v1193, %v1241
      %v1243 = vpop.f32.mrb[0].mxu0
      %v1244 = vpop.f32.mrb[0].mxu0
      %v1245 = vadd.f32 %v1196, %v1244
      %v1246 = vpop.f32.mrb[0].mxu0
      %1247 = vdwg.mxu0
      %1248 = vmatprep.subr.bf16.mxu0 0
      %1249 = vmatpush1.bf16.msra.mxu0 %v975
      %1250 = vmatprep.subr.bf16.mxu0 0
      %1251 = vmatpush1.bf16.msra.mxu0 %v976
      %1252 = vmatprep.subr.bf16.mxu0 0
      %1253 = vmatpush1.bf16.msra.mxu0 %v977
      %1254 = vmatprep.subr.bf16.mxu0 0
      %1255 = vmatpush1.bf16.msra.mxu0 %v978
      %1256 = vmatprep.subr.bf16.mxu0 0
      %1257 = vmatpush1.bf16.msra.mxu0 %v979
      %1258 = vmatprep.subr.bf16.mxu0 0
      %1259 = vmatpush1.bf16.msra.mxu0 %v980
      %1260 = vmatprep.subr.bf16.mxu0 0
      %1261 = vmatpush1.bf16.msra.mxu0 %v981
      %1262 = vmatprep.subr.bf16.mxu0 0
      %1263 = vmatpush1.bf16.msra.mxu0 %v982
      %1264 = vmatprep.subr.bf16.mxu0 0
      %1265 = vmatpush1.bf16.msra.mxu0 %v983
      %1266 = vmatprep.subr.bf16.mxu0 0
      %1267 = vmatpush1.bf16.msra.mxu0 %v984
      %1268 = vmatprep.subr.bf16.mxu0 0
      %1269 = vmatpush1.bf16.msra.mxu0 %v985
      %1270 = vmatprep.subr.bf16.mxu0 0
      %1271 = vmatpush1.bf16.msra.mxu0 %v986
      %1272 = vmatprep.subr.bf16.mxu0 0
      %1273 = vmatpush1.bf16.msra.mxu0 %v987
      %1274 = vmatprep.subr.bf16.mxu0 0
      %1275 = vmatpush1.bf16.msra.mxu0 %v988
      %1276 = vmatprep.subr.bf16.mxu0 0
      %1277 = vmatpush1.bf16.msra.mxu0 %v989
      %1278 = vmatprep.subr.bf16.mxu0 0
      %1279 = vmatpush1.bf16.msra.mxu0 %v990
      %1280 = vmatprep.mubr.bf16.mxu0 %v498
      %1281 = vmatmul.mubr.bf16.gmra.mrb[0].mxu0 %v497
      %v1282 = vpop.f32.mrb[0].mxu0
      %v1283 = vadd.f32 %v1234, %v1282
      %v1284 = vpop.f32.mrb[0].mxu0
      %v1285 = vpop.f32.mrb[0].mxu0
      %v1286 = vadd.f32 %v1237, %v1285
      %v1287 = vpop.f32.mrb[0].mxu0
      %1288 = vmatprep.mubr.bf16.mxu0 %v511
      %1289 = vmatmul.mubr.bf16.gmra.mrb[0].mxu0 %v510
      %v1290 = vpop.f32.mrb[0].mxu0
      %v1291 = vadd.f32 %v1242, %v1290
      %v1292 = vpop.f32.mrb[0].mxu0
      %v1293 = vpop.f32.mrb[0].mxu0
      %v1294 = vadd.f32 %v1245, %v1293
      %v1295 = vpop.f32.mrb[0].mxu0
      %1296 = vdwg.mxu0
      %1297 = vmatprep.subr.bf16.mxu0 0
      %1298 = vmatpush1.bf16.msra.mxu0 %v991
      %1299 = vmatprep.subr.bf16.mxu0 0
      %1300 = vmatpush1.bf16.msra.mxu0 %v992
      %1301 = vmatprep.subr.bf16.mxu0 0
      %1302 = vmatpush1.bf16.msra.mxu0 %v993
      %1303 = vmatprep.subr.bf16.mxu0 0
      %1304 = vmatpush1.bf16.msra.mxu0 %v994
      %1305 = vmatprep.subr.bf16.mxu0 0
      %1306 = vmatpush1.bf16.msra.mxu0 %v995
      %1307 = vmatprep.subr.bf16.mxu0 0
      %1308 = vmatpush1.bf16.msra.mxu0 %v996
      %1309 = vmatprep.subr.bf16.mxu0 0
      %1310 = vmatpush1.bf16.msra.mxu0 %v997
      %1311 = vmatprep.subr.bf16.mxu0 0
      %1312 = vmatpush1.bf16.msra.mxu0 %v998
      %1313 = vmatprep.subr.bf16.mxu0 0
      %1314 = vmatpush1.bf16.msra.mxu0 %v999
      %1315 = vmatprep.subr.bf16.mxu0 0
      %1316 = vmatpush1.bf16.msra.mxu0 %v1000
      %1317 = vmatprep.subr.bf16.mxu0 0
      %1318 = vmatpush1.bf16.msra.mxu0 %v1001
      %1319 = vmatprep.subr.bf16.mxu0 0
      %1320 = vmatpush1.bf16.msra.mxu0 %v1002
      %1321 = vmatprep.subr.bf16.mxu0 0
      %1322 = vmatpush1.bf16.msra.mxu0 %v1003
      %1323 = vmatprep.subr.bf16.mxu0 0
      %1324 = vmatpush1.bf16.msra.mxu0 %v1004
      %1325 = vmatprep.subr.bf16.mxu0 0
      %1326 = vmatpush1.bf16.msra.mxu0 %v1005
      %1327 = vmatprep.subr.bf16.mxu0 0
      %1328 = vmatpush1.bf16.msra.mxu0 %v1006
      %1329 = vmatprep.mubr.bf16.mxu0 %v500
      %1330 = vmatmul.mubr.bf16.gmra.mrb[0].mxu0 %v499
      %v1331 = vpop.f32.mrb[0].mxu0
      %v1332 = vadd.f32 %v1283, %v1331
      %v1333 = vpop.f32.mrb[0].mxu0
      %v1334 = vpop.f32.mrb[0].mxu0
      %v1335 = vadd.f32 %v1286, %v1334
      %v1336 = vpop.f32.mrb[0].mxu0
      %1337 = vmatprep.mubr.bf16.mxu0 %v513
      %1338 = vmatmul.mubr.bf16.gmra.mrb[0].mxu0 %v512
      %v1339 = vpop.f32.mrb[0].mxu0
      %v1340 = vadd.f32 %v1291, %v1339
      %v1341 = vpop.f32.mrb[0].mxu0
      %v1342 = vpop.f32.mrb[0].mxu0
      %v1343 = vadd.f32 %v1294, %v1342
      %v1344 = vpop.f32.mrb[0].mxu0
      %1345 = vdwg.mxu0
      %1346 = vmatprep.subr.bf16.mxu0 0
      %1347 = vmatpush1.bf16.msra.mxu0 %v1007
      %1348 = vmatprep.subr.bf16.mxu0 0
      %1349 = vmatpush1.bf16.msra.mxu0 %v1008
      %1350 = vmatprep.subr.bf16.mxu0 0
      %1351 = vmatpush1.bf16.msra.mxu0 %v1009
      %1352 = vmatprep.subr.bf16.mxu0 0
      %1353 = vmatpush1.bf16.msra.mxu0 %v1010
      %1354 = vmatprep.subr.bf16.mxu0 0
      %1355 = vmatpush1.bf16.msra.mxu0 %v1011
      %1356 = vmatprep.subr.bf16.mxu0 0
      %1357 = vmatpush1.bf16.msra.mxu0 %v1012
      %1358 = vmatprep.subr.bf16.mxu0 0
      %1359 = vmatpush1.bf16.msra.mxu0 %v1013
      %1360 = vmatprep.subr.bf16.mxu0 0
      %1361 = vmatpush1.bf16.msra.mxu0 %v1014
      %1362 = vmatprep.subr.bf16.mxu0 0
      %1363 = vmatpush1.bf16.msra.mxu0 %v1015
      %1364 = vmatprep.subr.bf16.mxu0 0
      %1365 = vmatpush1.bf16.msra.mxu0 %v1016
      %1366 = vmatprep.subr.bf16.mxu0 0
      %1367 = vmatpush1.bf16.msra.mxu0 %v1017
      %1368 = vmatprep.subr.bf16.mxu0 0
      %1369 = vmatpush1.bf16.msra.mxu0 %v1018
      %1370 = vmatprep.subr.bf16.mxu0 0
      %1371 = vmatpush1.bf16.msra.mxu0 %v1019
      %1372 = vmatprep.subr.bf16.mxu0 0
      %1373 = vmatpush1.bf16.msra.mxu0 %v1020
      %1374 = vmatprep.subr.bf16.mxu0 0
      %1375 = vmatpush1.bf16.msra.mxu0 %v1021
      %1376 = vmatprep.subr.bf16.mxu0 0
      %1377 = vmatpush1.bf16.msra.mxu0 %v1022
      %1378 = vmatprep.mubr.bf16.mxu0 %v502
      %1379 = vmatmul.mubr.bf16.gmra.mrb[0].mxu0 %v501
      %v1380 = vpop.f32.mrb[0].mxu0
      %v1381 = vadd.f32 %v1332, %v1380
      %v1382 = vpop.f32.mrb[0].mxu0
      %v1383 = vpop.f32.mrb[0].mxu0
      %v1384 = vadd.f32 %v1335, %v1383
      %v1385 = vpop.f32.mrb[0].mxu0
      %1386 = vmatprep.mubr.bf16.mxu0 %v515
      %1387 = vmatmul.mubr.bf16.gmra.mrb[0].mxu0 %v514
      %v1388 = vpop.f32.mrb[0].mxu0
      %v1389 = vadd.f32 %v1340, %v1388
      %v1390 = vpop.f32.mrb[0].mxu0
      %v1391 = vpop.f32.mrb[0].mxu0
      %v1392 = vadd.f32 %v1343, %v1391
      %v1393 = vpop.f32.mrb[0].mxu0
      %1394 = vdwg.mxu0
      %1395 = vmatprep.subr.bf16.mxu0 0
      %1396 = vmatpush1.bf16.msra.mxu0 %v1023
      %1397 = vmatprep.subr.bf16.mxu0 0
      %1398 = vmatpush1.bf16.msra.mxu0 %v1024
      %1399 = vmatprep.subr.bf16.mxu0 0
      %1400 = vmatpush1.bf16.msra.mxu0 %v1025
      %1401 = vmatprep.subr.bf16.mxu0 0
      %1402 = vmatpush1.bf16.msra.mxu0 %v1026
      %1403 = vmatprep.subr.bf16.mxu0 0
      %1404 = vmatpush1.bf16.msra.mxu0 %v1027
      %1405 = vmatprep.subr.bf16.mxu0 0
      %1406 = vmatpush1.bf16.msra.mxu0 %v1028
      %1407 = vmatprep.subr.bf16.mxu0 0
      %1408 = vmatpush1.bf16.msra.mxu0 %v1029
      %1409 = vmatprep.subr.bf16.mxu0 0
      %1410 = vmatpush1.bf16.msra.mxu0 %v1030
      %1411 = vmatprep.subr.bf16.mxu0 0
      %1412 = vmatpush1.bf16.msra.mxu0 %v1031
      %1413 = vmatprep.subr.bf16.mxu0 0
      %1414 = vmatpush1.bf16.msra.mxu0 %v1032
      %1415 = vmatprep.subr.bf16.mxu0 0
      %1416 = vmatpush1.bf16.msra.mxu0 %v1033
      %1417 = vmatprep.subr.bf16.mxu0 0
      %1418 = vmatpush1.bf16.msra.mxu0 %v1034
      %1419 = vmatprep.subr.bf16.mxu0 0
      %1420 = vmatpush1.bf16.msra.mxu0 %v1035
      %1421 = vmatprep.subr.bf16.mxu0 0
      %1422 = vmatpush1.bf16.msra.mxu0 %v1036
      %1423 = vmatprep.subr.bf16.mxu0 0
      %1424 = vmatpush1.bf16.msra.mxu0 %v1037
      %1425 = vmatprep.subr.bf16.mxu0 0
      %1426 = vmatpush1.bf16.msra.mxu0 %v1038
      %1427 = vmatprep.mubr.bf16.mxu0 %v504
      %1428 = vmatmul.mubr.bf16.gmra.mrb[0].mxu0 %v503
      %v1429 = vpop.f32.mrb[0].mxu0
      %v1430 = vadd.f32 %v1381, %v1429
      %v1431 = vpop.f32.mrb[0].mxu0
      %v1432 = vpop.f32.mrb[0].mxu0
      %v1433 = vadd.f32 %v1384, %v1432
      %v1434 = vpop.f32.mrb[0].mxu0
      %1435 = vmatprep.mubr.bf16.mxu0 %v517
      %1436 = vmatmul.mubr.bf16.gmra.mrb[0].mxu0 %v516
      %v1437 = vpop.f32.mrb[0].mxu0
      %v1438 = vadd.f32 %v1389, %v1437
      %v1439 = vpop.f32.mrb[0].mxu0
      %v1440 = vpop.f32.mrb[0].mxu0
      %v1441 = vadd.f32 %v1392, %v1440
      %v1442 = vpop.f32.mrb[0].mxu0
      %1443 = vdwg.mxu0
      %1444 = vmatprep.subr.bf16.mxu0 0
      %1445 = vmatpush1.bf16.msra.mxu0 %v1039
      %1446 = vmatprep.subr.bf16.mxu0 0
      %1447 = vmatpush1.bf16.msra.mxu0 %v1040
      %1448 = vmatprep.subr.bf16.mxu0 0
      %1449 = vmatpush1.bf16.msra.mxu0 %v1041
      %1450 = vmatprep.subr.bf16.mxu0 0
      %1451 = vmatpush1.bf16.msra.mxu0 %v1042
      %1452 = vmatprep.subr.bf16.mxu0 0
      %1453 = vmatpush1.bf16.msra.mxu0 0
      %1454 = vmatprep.subr.bf16.mxu0 0
      %1455 = vmatpush1.bf16.msra.mxu0 0
      %1456 = vmatprep.subr.bf16.mxu0 0
      %1457 = vmatpush1.bf16.msra.mxu0 0
      %1458 = vmatprep.subr.bf16.mxu0 0
      %1459 = vmatpush1.bf16.msra.mxu0 0
      %1460 = vmatprep.subr.bf16.mxu0 0
      %1461 = vmatpush1.bf16.msra.mxu0 0
      %1462 = vmatprep.subr.bf16.mxu0 0
      %1463 = vmatpush1.bf16.msra.mxu0 0
      %1464 = vmatprep.subr.bf16.mxu0 0
      %1465 = vmatpush1.bf16.msra.mxu0 0
      %1466 = vmatprep.subr.bf16.mxu0 0
      %1467 = vmatpush1.bf16.msra.mxu0 0
      %1468 = vmatprep.subr.bf16.mxu0 0
      %1469 = vmatpush1.bf16.msra.mxu0 0
      %1470 = vmatprep.subr.bf16.mxu0 0
      %1471 = vmatpush1.bf16.msra.mxu0 0
      %1472 = vmatprep.subr.bf16.mxu0 0
      %1473 = vmatpush1.bf16.msra.mxu0 0
      %1474 = vmatprep.subr.bf16.mxu0 0
      %1475 = vmatpush1.bf16.msra.mxu0 0
      %1476 = vmatprep.mubr.bf16.mxu0 0
      %1477 = vmatmul.mubr.bf16.gmra.mrb[0].mxu0 %v1145
      %v1478 = vpop.f32.mrb[0].mxu0
      %v1479 = vadd.f32 %v1430, %v1478
      %v1480 = vpop.f32.mrb[0].mxu0
      %v1481 = vpop.f32.mrb[0].mxu0
      %v1482 = vadd.f32 %v1433, %v1481
      %v1483 = vpop.f32.mrb[0].mxu0
      %1484 = vmatprep.mubr.bf16.mxu0 0
      %1485 = vmatmul.mubr.bf16.gmra.mrb[0].mxu0 %v1148
      %v1486 = vpop.f32.mrb[0].mxu0
      %v1487 = vadd.f32 %v1438, %v1486
      %v1488 = vpop.f32.mrb[0].mxu0
      %v1489 = vpop.f32.mrb[0].mxu0
      %v1490 = vadd.f32 %v1441, %v1489
      %v1491 = vpop.f32.mrb[0].mxu0
      %1492 = vdwg.mxu0
      %1493 = vst [vmem:[%s175] sm:$0xff] %v1479
      %1494 = vst [vmem:[%s175 + $0x8] sm:$0xff] %v1482
      %1495 = vst [vmem:[%s175 + $0x10] sm:$0xff] %v1487
      %1496 = vst [vmem:[%s175 + $0x18] sm:$0xff] %v1490
      %s1497 = smul.u32 4, %s14
      %p1498 = scmp.lt.s32.totalorder %s1497, 15
      %s1499 = scalar_select %p1498, %s1497, 15
      %s1500 = smul.addr %s1499, 8
      %s1501 = scalar_lea.vmem %s3, %s1500
      // Predicated region
      $region33: #{fast_arcnn_forward.13} parent=31 // pred_check
        %p1502 = pneg %p100
      $region34: #{fast_arcnn_forward.13} parent=31 // pred_check_branch
        %1504 = sbr.rel (%p1502) target = $region36
      $region35: #{fast_arcnn_forward.13} parent=31 // pred_region
        %s1505 = smul.u32 4, %s14
      $region36: #{fast_arcnn_forward.13} parent=31 // pred_fallthru
        _
    $region32: #{fast_arcnn_forward.13} parent=5 // pred_fallthru
      _
    %p1506 = scmp.le.s32.totalorder 2, %s9
    // Predicated region
    $region37: #{fast_arcnn_forward.13} parent=5 // pred_check
      %p1507 = pneg %p1506
    $region38: #{fast_arcnn_forward.13} parent=5 // pred_check_branch
      %1509 = sbr.rel (%p1507) target = $region40
    $region39: #{fast_arcnn_forward.13} parent=5 // pred_region
      %s1510 = ssub.s32 %s9, 2
      // Predicated region
      $region41: #{fast_arcnn_forward.13} parent=39 // pred_check
        %p1511 = pneg %p106
      $region42: #{fast_arcnn_forward.13} parent=39 // pred_check_branch
        %1513 = sbr.rel (%p1511) target = $region44
      $region43: #{fast_arcnn_forward.13} parent=39 // pred_region
        %s1514 = smul.u32 4, %s15
        %p1515 = scmp.lt.s32.totalorder %s1514, 15
        %s1516 = scalar_select %p1515, %s1514, 15
        %s1517 = smul.addr %s1516, 8
        %s1518 = scalar_lea.vmem %s3, %s1517
      $region44: #{fast_arcnn_forward.13} parent=39 // pred_fallthru
        _
    $region40: #{fast_arcnn_forward.13} parent=5 // pred_fallthru
      _
  $region6: #{fast_arcnn_forward.13} parent=0 // loop_footer
    %s13 = sadd.s32 1, %s9
  $region7: #{fast_arcnn_forward.13} parent=0 // loop_footer_branch
    %8 = sbr.rel target = $region3
  $region8: #{fast_arcnn_forward.13} parent=0 // loop_exit
    _

</llo_original>
